<compile_context>
chip_gen: v7x
topology: tpu7x:2x2x1
jax: 0.10.0
libtpu: 0.0.40
codegen_flags: <defaults>
</compile_context>

<pallas_src>
import functools
import math

import jax
import jax.numpy as jnp
from jax.experimental import pallas as pl
from jax.experimental.pallas import tpu as pltpu

# Layer sizes from the PyTorch module.
LAYER_DIMS = [6, 10, 64, 128, 256, 512, 256, 128, 64, 32, 1]
NUM_LAYERS = len(LAYER_DIMS) - 1            # 10
MAX_IN = 256                                # max per-segment contraction (fc6's 512 split in two)
IN0_PAD = 8                                 # input features padded 6 -> 8 (whole-vreg loads)
VMEM_LIMIT_BYTES = 48 * 1024 * 1024


def _round_up(x, m):
    return (x + m - 1) // m * m


# Segment table: real layer i -> list of (slab_row_offset, in_offset, in_size).
# Each segment is an (out_i, in_size<=256) block stacked on the sublane axis (8-aligned offsets).
# fc6 (512 -> 256) becomes two (256, 256) segments whose partial products are summed in-kernel.
_SEGMENTS = []
_row = 0
for _i in range(NUM_LAYERS):
    _k = IN0_PAD if _i == 0 else LAYER_DIMS[_i]
    _o = LAYER_DIMS[_i + 1]
    _segs = []
    for _k0 in range(0, _k, MAX_IN):
        _segs.append((_row, _k0, min(MAX_IN, _k - _k0)))
        _row += _round_up(_o, 8)
    _SEGMENTS.append(_segs)
W_SLAB_ROWS = _round_up(_row, 8)            # 1720


def mlp_kernel(x_ref, w_ref, b_ref, out_ref, *, act_dtype):
    """One batch tile of the full 10-layer MLP.

    x_ref:   (8, TB)               f32      batch on the lane axis, rows 6..7 are zero padding
    w_ref:   (W_SLAB_ROWS, 256)    f32/bf16 packed weight segments (static row offsets)
    b_ref:   (W_SLAB_ROWS, 1)      f32      packed biases at each layer's first segment offset
    out_ref: (1, TB)               f32      lane-dense output row
    """
    h = x_ref[...]                                              # (8, TB) f32, whole-vreg load
    for i in range(NUM_LAYERS):
        o = LAYER_DIMS[i + 1]
        z = None
        for (r0, k0, ks) in _SEGMENTS[i]:
            w = w_ref[r0:r0 + o, 0:ks]                          # (o, ks) static slice -> free view
            part = jnp.dot(w, h[k0:k0 + ks, :].astype(w.dtype),
                           preferred_element_type=jnp.float32)  # f32 accumulation on the MXU
            z = part if z is None else z + part
        r_bias = _SEGMENTS[i][0][0]
        z = z + b_ref[r_bias:r_bias + o, :]                     # (o, 1) broadcast over lanes
        if i < NUM_LAYERS - 1:
            h = jnp.maximum(z, 0.0).astype(act_dtype)           # ReLU, single cast per layer
        else:
            h = jax.nn.sigmoid(z)                               # final sigmoid in f32 (EUP)
    out_ref[...] = h.astype(out_ref.dtype)                      # (1, TB) lane-dense store


def init_params(key):
    """PyTorch-layout params: w_i (out, in), b_i (out,), U[-1/sqrt(in), 1/sqrt(in)]."""
    params = []
    for i in range(NUM_LAYERS):
        fan_in, fan_out = LAYER_DIMS[i], LAYER_DIMS[i + 1]
        key, kw, kb = jax.random.split(key, 3)
        bound = 1.0 / math.sqrt(fan_in)
        w = jax.random.uniform(kw, (fan_out, fan_in), jnp.float32, -bound, bound)
        b = jax.random.uniform(kb, (fan_out,), jnp.float32, -bound, bound)
        params.append((w, b))
    return params


def pack_params(params, weight_dtype=jnp.bfloat16):
    """Pack 10 (w, b) pairs into 2 operands: a (1720, 256) weight slab and a (1720, 1) bias slab."""
    w_slab = jnp.zeros((W_SLAB_ROWS, MAX_IN), jnp.float32)
    b_slab = jnp.zeros((W_SLAB_ROWS, 1), jnp.float32)
    for i, (w, b) in enumerate(params):
        o, k = LAYER_DIMS[i + 1], LAYER_DIMS[i]
        for (r0, k0, ks) in _SEGMENTS[i]:
            ks_real = min(ks, max(k - k0, 0))                   # layer 0: only 6 of 8 cols are real
            if ks_real > 0:
                w_slab = w_slab.at[r0:r0 + o, :ks_real].set(w[:, k0:k0 + ks_real])
        r_bias = _SEGMENTS[i][0][0]
        b_slab = b_slab.at[r_bias:r_bias + o, 0].set(b)
    return w_slab.astype(weight_dtype), b_slab


def _pick_tb(batch):
    """Lane-aligned batch tile: >=2 grid steps when possible (v7x megacore), capped at 2048 lanes
    to amortize per-step overhead without blowing up f32 intermediates."""
    b = _round_up(max(batch, 1), 256)
    if b <= 256:
        return 256
    tb = min(2048, b // 2)
    return max(256, (tb // 256) * 256)


@functools.partial(jax.jit, static_argnames=("tb", "act_dtype"))
def _net_forward_jit(x, w_slab, b_slab, *, tb, act_dtype):
    batch = x.shape[0]
    b_pad = _round_up(max(batch, 1), tb)
    # Batch on the lane axis; pad features to 8 rows and batch to a multiple of the tile.
    xt = jnp.zeros((IN0_PAD, b_pad), jnp.float32).at[:LAYER_DIMS[0], :batch].set(x.T)

    out_row = pl.pallas_call(
        functools.partial(mlp_kernel, act_dtype=act_dtype),
        out_shape=jax.ShapeDtypeStruct((1, b_pad), jnp.float32),
        grid_spec=pltpu.PrefetchScalarGridSpec(
            num_scalar_prefetch=0,
            grid=(b_pad // tb,),
            in_specs=[
                # x: tiled over batch (pipelined HBM<->VMEM per grid step).
                pl.BlockSpec((IN0_PAD, tb), lambda i: (0, i)),
                # packed weights / biases: constant block index -> fetched once, VMEM-resident.
                pl.BlockSpec((W_SLAB_ROWS, MAX_IN), lambda i: (0, 0)),
                pl.BlockSpec((W_SLAB_ROWS, 1), lambda i: (0, 0)),
            ],
            out_specs=pl.BlockSpec((1, tb), lambda i: (0, i)),
        ),
        compiler_params=pltpu.CompilerParams(
            dimension_semantics=("parallel",),          # shard batch tiles across TCs on v7x
            vmem_limit_bytes=VMEM_LIMIT_BYTES,
        ),
    )(xt, w_slab, b_slab)

    return out_row[0, :batch][:, None]


def net_forward(x, packed, *, tb=None, act_dtype=None):
    """x: (B, 6) f32 -> (B, 1) f32, matching Net.forward semantics."""
    w_slab, b_slab = packed
    if tb is None:
        tb = _pick_tb(x.shape[0])
    assert tb % 128 == 0, "batch tile must be lane-aligned"
    if act_dtype is None:
        # bf16 activations when weights are bf16 (v6e/v7x fast path); f32 otherwise.
        wd = jnp.dtype(w_slab.dtype)
        act_dtype = wd if (jnp.issubdtype(wd, jnp.floating) and wd.itemsize < 4) else jnp.dtype(jnp.float32)
    return _net_forward_jit(x, w_slab, b_slab, tb=tb, act_dtype=jnp.dtype(act_dtype))


def net_forward_ref(x, params, weight_dtype=jnp.float32, act_dtype=jnp.float32):
    """Pure-JAX reference mirroring the kernel's dtype policy."""
    h = x
    for i, (w, b) in enumerate(params):
        z = jnp.dot(h.astype(weight_dtype), w.astype(weight_dtype).T,
                    preferred_element_type=jnp.float32) + b
        if i < NUM_LAYERS - 1:
            h = jnp.maximum(z, 0.0).astype(act_dtype)
        else:
            h = jax.nn.sigmoid(z)
    return h


if __name__ == "__main__":
    key = jax.random.PRNGKey(0)
    key, kx = jax.random.split(key)
    params = init_params(key)

    # --- small-shape check (batch=8), f32 weights + f32 activations, tight tolerance ---
    x_small = jax.random.normal(kx, (8, 6), jnp.float32)
    packed_f32 = pack_params(params, jnp.float32)
    out = jax.block_until_ready(net_forward(x_small, packed_f32, act_dtype=jnp.float32))
    ref = net_forward_ref(x_small, params, jnp.float32, jnp.float32)
    assert out.shape == (8, 1), out.shape
    assert jnp.allclose(out, ref, atol=1e-4, rtol=1e-4), (out, ref)

    # --- multi-tile batch grid check (batch not a multiple of the tile), f32 path ---
    key, kx2 = jax.random.split(key)
    x_big = jax.random.normal(kx2, (1000, 6), jnp.float32)
    out_big = jax.block_until_ready(net_forward(x_big, packed_f32, act_dtype=jnp.float32))
    ref_big = net_forward_ref(x_big, params, jnp.float32, jnp.float32)
    assert out_big.shape == (1000, 1), out_big.shape
    assert jnp.allclose(out_big, ref_big, atol=1e-4, rtol=1e-4)

    # --- default fast path: bf16 weights + bf16 activations, f32 accumulation/sigmoid ---
    packed_bf16 = pack_params(params)  # bf16 by default
    out_bf16 = jax.block_until_ready(net_forward(x_big, packed_bf16))
    ref_bf16 = net_forward_ref(x_big, params, jnp.bfloat16, jnp.bfloat16)
    assert out_bf16.shape == (1000, 1)
    assert jnp.allclose(out_bf16, ref_bf16, atol=2e-2, rtol=2e-2)

    print("KERNEL_OK")
</pallas_src>

<mosaic_0001>
module attributes {stable_mosaic.version = 11 : i64} {
  func.func @mlp_kernel(%arg0: i32, %arg1: memref<8x256xf32, #tpu.memory_space<vmem>>, %arg2: memref<1720x256xf32, #tpu.memory_space<vmem>>, %arg3: memref<1720x1xf32, #tpu.memory_space<vmem>>, %arg4: memref<1x256xf32, #tpu.memory_space<vmem>>) attributes {dimension_semantics = [#tpu.dimension_semantics<parallel>], iteration_bounds = array<i64: 1>, scalar_prefetch = 0 : i64, scratch_operands = 0 : i64, tpu.core_type = #tpu.core_type<tc>, window_params = [{transform_indices = @transform_0, window_bounds = array<i64: 8, 256>}, {pipeline_mode = #tpu.pipeline_mode<synchronous>, transform_indices = @transform_1, window_bounds = array<i64: 1720, 256>}, {pipeline_mode = #tpu.pipeline_mode<synchronous>, transform_indices = @transform_2, window_bounds = array<i64: 1720, 1>}, {transform_indices = @transform_3, window_bounds = array<i64: 1, 256>}]} {
    %c0 = arith.constant 0 : index
    %c0_0 = arith.constant 0 : index
    %0 = vector.load %arg1[%c0, %c0_0] : memref<8x256xf32, #tpu.memory_space<vmem>>, vector<8x256xf32>
    %c0_1 = arith.constant 0 : index
    %c0_2 = arith.constant 0 : index
    %1 = vector.load %arg2[%c0_1, %c0_2] : memref<1720x256xf32, #tpu.memory_space<vmem>>, vector<10x8xf32>
    %cst = arith.constant dense<0.000000e+00> : vector<10x256xf32>
    %2 = tpu.matmul %1, %0, %cst {dimension_numbers = #tpu.dot_dimension_numbers<[1], [0], [0], [1], [0, 0, 1, 1], [], []>} : vector<10x8xf32>, vector<8x256xf32>, vector<10x256xf32> -> vector<10x256xf32>
    %c0_3 = arith.constant 0 : index
    %c0_4 = arith.constant 0 : index
    %3 = vector.load %arg3[%c0_3, %c0_4] : memref<1720x1xf32, #tpu.memory_space<vmem>>, vector<10x1xf32>
    %4 = vector.broadcast %3 : vector<10x1xf32> to vector<10x256xf32>
    %5 = arith.addf %2, %4 : vector<10x256xf32>
    %cst_5 = arith.constant 0.000000e+00 : f32
    %6 = vector.broadcast %cst_5 : f32 to vector<10x256xf32>
    %7 = arith.maximumf %5, %6 : vector<10x256xf32>
    %c16 = arith.constant 16 : index
    %c0_6 = arith.constant 0 : index
    %8 = vector.load %arg2[%c16, %c0_6] : memref<1720x256xf32, #tpu.memory_space<vmem>>, vector<64x10xf32>
    %cst_7 = arith.constant dense<0.000000e+00> : vector<64x256xf32>
    %9 = tpu.matmul %8, %7, %cst_7 {dimension_numbers = #tpu.dot_dimension_numbers<[1], [0], [0], [1], [0, 0, 1, 1], [], []>} : vector<64x10xf32>, vector<10x256xf32>, vector<64x256xf32> -> vector<64x256xf32>
    %c16_8 = arith.constant 16 : index
    %c0_9 = arith.constant 0 : index
    %10 = vector.load %arg3[%c16_8, %c0_9] : memref<1720x1xf32, #tpu.memory_space<vmem>>, vector<64x1xf32>
    %11 = vector.broadcast %10 : vector<64x1xf32> to vector<64x256xf32>
    %12 = arith.addf %9, %11 : vector<64x256xf32>
    %cst_10 = arith.constant 0.000000e+00 : f32
    %13 = vector.broadcast %cst_10 : f32 to vector<64x256xf32>
    %14 = arith.maximumf %12, %13 : vector<64x256xf32>
    %c80 = arith.constant 80 : index
    %c0_11 = arith.constant 0 : index
    %15 = vector.load %arg2[%c80, %c0_11] : memref<1720x256xf32, #tpu.memory_space<vmem>>, vector<128x64xf32>
    %cst_12 = arith.constant dense<0.000000e+00> : vector<128x256xf32>
    %16 = tpu.matmul %15, %14, %cst_12 {dimension_numbers = #tpu.dot_dimension_numbers<[1], [0], [0], [1], [0, 0, 1, 1], [], []>} : vector<128x64xf32>, vector<64x256xf32>, vector<128x256xf32> -> vector<128x256xf32>
    %c80_13 = arith.constant 80 : index
    %c0_14 = arith.constant 0 : index
    %17 = vector.load %arg3[%c80_13, %c0_14] : memref<1720x1xf32, #tpu.memory_space<vmem>>, vector<128x1xf32>
    %18 = vector.broadcast %17 : vector<128x1xf32> to vector<128x256xf32>
    %19 = arith.addf %16, %18 : vector<128x256xf32>
    %cst_15 = arith.constant 0.000000e+00 : f32
    %20 = vector.broadcast %cst_15 : f32 to vector<128x256xf32>
    %21 = arith.maximumf %19, %20 : vector<128x256xf32>
    %c208 = arith.constant 208 : index
    %c0_16 = arith.constant 0 : index
    %22 = vector.load %arg2[%c208, %c0_16] : memref<1720x256xf32, #tpu.memory_space<vmem>>, vector<256x128xf32>
    %cst_17 = arith.constant dense<0.000000e+00> : vector<256x256xf32>
    %23 = tpu.matmul %22, %21, %cst_17 {dimension_numbers = #tpu.dot_dimension_numbers<[1], [0], [0], [1], [0, 0, 1, 1], [], []>} : vector<256x128xf32>, vector<128x256xf32>, vector<256x256xf32> -> vector<256x256xf32>
    %c208_18 = arith.constant 208 : index
    %c0_19 = arith.constant 0 : index
    %24 = vector.load %arg3[%c208_18, %c0_19] : memref<1720x1xf32, #tpu.memory_space<vmem>>, vector<256x1xf32>
    %25 = vector.broadcast %24 : vector<256x1xf32> to vector<256x256xf32>
    %26 = arith.addf %23, %25 : vector<256x256xf32>
    %cst_20 = arith.constant 0.000000e+00 : f32
    %27 = vector.broadcast %cst_20 : f32 to vector<256x256xf32>
    %28 = arith.maximumf %26, %27 : vector<256x256xf32>
    %c464 = arith.constant 464 : index
    %c0_21 = arith.constant 0 : index
    %29 = vector.load %arg2[%c464, %c0_21] : memref<1720x256xf32, #tpu.memory_space<vmem>>, vector<512x256xf32>
    %cst_22 = arith.constant dense<0.000000e+00> : vector<512x256xf32>
    %30 = tpu.matmul %29, %28, %cst_22 {dimension_numbers = #tpu.dot_dimension_numbers<[1], [0], [0], [1], [0, 0, 1, 1], [], []>} : vector<512x256xf32>, vector<256x256xf32>, vector<512x256xf32> -> vector<512x256xf32>
    %c464_23 = arith.constant 464 : index
    %c0_24 = arith.constant 0 : index
    %31 = vector.load %arg3[%c464_23, %c0_24] : memref<1720x1xf32, #tpu.memory_space<vmem>>, vector<512x1xf32>
    %32 = vector.broadcast %31 : vector<512x1xf32> to vector<512x256xf32>
    %33 = arith.addf %30, %32 : vector<512x256xf32>
    %cst_25 = arith.constant 0.000000e+00 : f32
    %34 = vector.broadcast %cst_25 : f32 to vector<512x256xf32>
    %35 = arith.maximumf %33, %34 : vector<512x256xf32>
    %c976 = arith.constant 976 : index
    %c0_26 = arith.constant 0 : index
    %36 = vector.load %arg2[%c976, %c0_26] : memref<1720x256xf32, #tpu.memory_space<vmem>>, vector<256x256xf32>
    %37 = vector.extract_strided_slice %35 {offsets = [0, 0], sizes = [256, 256], strides = [1, 1]} : vector<512x256xf32> to vector<256x256xf32>
    %cst_27 = arith.constant dense<0.000000e+00> : vector<256x256xf32>
    %38 = tpu.matmul %36, %37, %cst_27 {dimension_numbers = #tpu.dot_dimension_numbers<[1], [0], [0], [1], [0, 0, 1, 1], [], []>} : vector<256x256xf32>, vector<256x256xf32>, vector<256x256xf32> -> vector<256x256xf32>
    %c1232 = arith.constant 1232 : index
    %c0_28 = arith.constant 0 : index
    %39 = vector.load %arg2[%c1232, %c0_28] : memref<1720x256xf32, #tpu.memory_space<vmem>>, vector<256x256xf32>
    %40 = vector.extract_strided_slice %35 {offsets = [256, 0], sizes = [256, 256], strides = [1, 1]} : vector<512x256xf32> to vector<256x256xf32>
    %cst_29 = arith.constant dense<0.000000e+00> : vector<256x256xf32>
    %41 = tpu.matmul %39, %40, %cst_29 {dimension_numbers = #tpu.dot_dimension_numbers<[1], [0], [0], [1], [0, 0, 1, 1], [], []>} : vector<256x256xf32>, vector<256x256xf32>, vector<256x256xf32> -> vector<256x256xf32>
    %42 = arith.addf %38, %41 : vector<256x256xf32>
    %c976_30 = arith.constant 976 : index
    %c0_31 = arith.constant 0 : index
    %43 = vector.load %arg3[%c976_30, %c0_31] : memref<1720x1xf32, #tpu.memory_space<vmem>>, vector<256x1xf32>
    %44 = vector.broadcast %43 : vector<256x1xf32> to vector<256x256xf32>
    %45 = arith.addf %42, %44 : vector<256x256xf32>
    %cst_32 = arith.constant 0.000000e+00 : f32
    %46 = vector.broadcast %cst_32 : f32 to vector<256x256xf32>
    %47 = arith.maximumf %45, %46 : vector<256x256xf32>
    %c1488 = arith.constant 1488 : index
    %c0_33 = arith.constant 0 : index
    %48 = vector.load %arg2[%c1488, %c0_33] : memref<1720x256xf32, #tpu.memory_space<vmem>>, vector<128x256xf32>
    %cst_34 = arith.constant dense<0.000000e+00> : vector<128x256xf32>
    %49 = tpu.matmul %48, %47, %cst_34 {dimension_numbers = #tpu.dot_dimension_numbers<[1], [0], [0], [1], [0, 0, 1, 1], [], []>} : vector<128x256xf32>, vector<256x256xf32>, vector<128x256xf32> -> vector<128x256xf32>
    %c1488_35 = arith.constant 1488 : index
    %c0_36 = arith.constant 0 : index
    %50 = vector.load %arg3[%c1488_35, %c0_36] : memref<1720x1xf32, #tpu.memory_space<vmem>>, vector<128x1xf32>
    %51 = vector.broadcast %50 : vector<128x1xf32> to vector<128x256xf32>
    %52 = arith.addf %49, %51 : vector<128x256xf32>
    %cst_37 = arith.constant 0.000000e+00 : f32
    %53 = vector.broadcast %cst_37 : f32 to vector<128x256xf32>
    %54 = arith.maximumf %52, %53 : vector<128x256xf32>
    %c1616 = arith.constant 1616 : index
    %c0_38 = arith.constant 0 : index
    %55 = vector.load %arg2[%c1616, %c0_38] : memref<1720x256xf32, #tpu.memory_space<vmem>>, vector<64x128xf32>
    %cst_39 = arith.constant dense<0.000000e+00> : vector<64x256xf32>
    %56 = tpu.matmul %55, %54, %cst_39 {dimension_numbers = #tpu.dot_dimension_numbers<[1], [0], [0], [1], [0, 0, 1, 1], [], []>} : vector<64x128xf32>, vector<128x256xf32>, vector<64x256xf32> -> vector<64x256xf32>
    %c1616_40 = arith.constant 1616 : index
    %c0_41 = arith.constant 0 : index
    %57 = vector.load %arg3[%c1616_40, %c0_41] : memref<1720x1xf32, #tpu.memory_space<vmem>>, vector<64x1xf32>
    %58 = vector.broadcast %57 : vector<64x1xf32> to vector<64x256xf32>
    %59 = arith.addf %56, %58 : vector<64x256xf32>
    %cst_42 = arith.constant 0.000000e+00 : f32
    %60 = vector.broadcast %cst_42 : f32 to vector<64x256xf32>
    %61 = arith.maximumf %59, %60 : vector<64x256xf32>
    %c1680 = arith.constant 1680 : index
    %c0_43 = arith.constant 0 : index
    %62 = vector.load %arg2[%c1680, %c0_43] : memref<1720x256xf32, #tpu.memory_space<vmem>>, vector<32x64xf32>
    %cst_44 = arith.constant dense<0.000000e+00> : vector<32x256xf32>
    %63 = tpu.matmul %62, %61, %cst_44 {dimension_numbers = #tpu.dot_dimension_numbers<[1], [0], [0], [1], [0, 0, 1, 1], [], []>} : vector<32x64xf32>, vector<64x256xf32>, vector<32x256xf32> -> vector<32x256xf32>
    %c1680_45 = arith.constant 1680 : index
    %c0_46 = arith.constant 0 : index
    %64 = vector.load %arg3[%c1680_45, %c0_46] : memref<1720x1xf32, #tpu.memory_space<vmem>>, vector<32x1xf32>
    %65 = vector.broadcast %64 : vector<32x1xf32> to vector<32x256xf32>
    %66 = arith.addf %63, %65 : vector<32x256xf32>
    %cst_47 = arith.constant 0.000000e+00 : f32
    %67 = vector.broadcast %cst_47 : f32 to vector<32x256xf32>
    %68 = arith.maximumf %66, %67 : vector<32x256xf32>
    %c1712 = arith.constant 1712 : index
    %c0_48 = arith.constant 0 : index
    %69 = vector.load %arg2[%c1712, %c0_48] : memref<1720x256xf32, #tpu.memory_space<vmem>>, vector<1x32xf32>
    %cst_49 = arith.constant dense<0.000000e+00> : vector<1x256xf32>
    %70 = tpu.matmul %69, %68, %cst_49 {dimension_numbers = #tpu.dot_dimension_numbers<[1], [0], [0], [1], [0, 0, 1, 1], [], []>} : vector<1x32xf32>, vector<32x256xf32>, vector<1x256xf32> -> vector<1x256xf32>
    %c1712_50 = arith.constant 1712 : index
    %c0_51 = arith.constant 0 : index
    %71 = vector.load %arg3[%c1712_50, %c0_51] : memref<1720x1xf32, #tpu.memory_space<vmem>>, vector<1x1xf32>
    %72 = vector.broadcast %71 : vector<1x1xf32> to vector<1x256xf32>
    %73 = arith.addf %70, %72 : vector<1x256xf32>
    %74 = arith.negf %73 : vector<1x256xf32>
    %75 = math.exp %74 : vector<1x256xf32>
    %cst_52 = arith.constant 1.000000e+00 : f32
    %76 = vector.broadcast %cst_52 : f32 to vector<1x256xf32>
    %77 = arith.addf %76, %75 : vector<1x256xf32>
    %78 = arith.divf %76, %77 : vector<1x256xf32>
    %c0_53 = arith.constant 0 : index
    %c0_54 = arith.constant 0 : index
    %79 = vector.load %arg4[%c0_53, %c0_54] : memref<1x256xf32, #tpu.memory_space<vmem>>, vector<1x256xf32>
    tpu.vector_store %arg4[%c0_53, %c0_54], %78 {strides = array<i32>} : memref<1x256xf32, #tpu.memory_space<vmem>>, vector<1x256xf32>,
    return
  }
  func.func @transform_0(%arg0: i32) -> (i32, i32) {
    %c0_i32 = arith.constant 0 : i32
    %c0_i32_0 = arith.constant 0 : i32
    return %c0_i32, %arg0 : i32, i32
  }
  func.func @transform_1(%arg0: i32) -> (i32, i32) {
    %c0_i32 = arith.constant 0 : i32
    %c0_i32_0 = arith.constant 0 : i32
    %c0_i32_1 = arith.constant 0 : i32
    return %c0_i32, %c0_i32_0 : i32, i32
  }
  func.func @transform_2(%arg0: i32) -> (i32, i32) {
    %c0_i32 = arith.constant 0 : i32
    %c0_i32_0 = arith.constant 0 : i32
    %c0_i32_1 = arith.constant 0 : i32
    return %c0_i32, %c0_i32_0 : i32, i32
  }
  func.func @transform_3(%arg0: i32) -> (i32, i32) {
    %c0_i32 = arith.constant 0 : i32
    %c0_i32_0 = arith.constant 0 : i32
    return %c0_i32, %arg0 : i32, i32
  }
}

</mosaic_0001>

<llo_original>
// kernel: _net_forward_jit.1
$region0: #{_net_forward_jit.1}
  #allocation0 [shape = 'u32[]', space=smem, size = 0x4, offset = 0x4, fixed_abs, tag = 'smem constant byte address 0x4 - core index']
  #allocation1 [shape = 'u32[144,128]{1,0:T(1,128)}', space=vmem, size = 0x12000, scoped, tag = 'internal scratch']
  %s0 = inlined_call_operand.vmem [shape: f32[8,256], index: 0, kind: input, shape index: {}]
  %s1 = inlined_call_operand.hbm [shape: f32[1720,256], index: 1, kind: input, shape index: {}]
  %s2 = inlined_call_operand.vmem [shape: f32[1720,1], index: 2, kind: input, shape index: {}]
  %s3 = inlined_call_operand.vmem [shape: f32[1,256], index: 3, kind: output, shape index: {}]
  %s4 = sld [smem:[#allocation0]]
  $region26: #{_net_forward_jit.1} parent=0
    _
  %s6 = ssub.s32 1, %s4
  %s7 = scalar_select 0, %s6, %s4
  $region1: #{_net_forward_jit.1} parent=0
    #allocation2 [shape = 'u8[1761280]{0}', space=vmem, size = 0x1ae000, scoped, tag = 'input window, operand 1, single buffered']
    #allocation3 [shape = 's32[1]{0}', space=sflag, size = 0x4, scoped, tag = 'scoped memory for _net_forward_jit.1']
    %8 = vsyncpa [#allocation3], 0
    // Predicated region
    $region2: #{_net_forward_jit.1} parent=1 // pred_check
      _
    $region3: #{_net_forward_jit.1} parent=1 // pred_check_branch
      %10 = sbr.rel (0) target = $region5
    $region4: #{_net_forward_jit.1} parent=1 // pred_region
      _
    $region5: #{_net_forward_jit.1} parent=1 // pred_fallthru
      _
    // Predicated region
    $region6: #{_net_forward_jit.1} parent=1 // pred_check
      _
    $region7: #{_net_forward_jit.1} parent=1 // pred_check_branch
      %12 = sbr.rel (0) target = $region9
    $region8: #{_net_forward_jit.1} parent=1 // pred_region
      %s14 = ssub.s32 55040, 55040
      %15 = vsyncadd [#allocation3], %s14
      %s16 = sshll.u32 [#allocation2], 4
      %s17 = int_to_ptr.vmem [resolvable:$true] %s16
      %22 = dma.hbm_to_vmem [thread:$0]  %s1, 55040, %s17, [#allocation3], 256, 256, 16
    $region9: #{_net_forward_jit.1} parent=1 // pred_fallthru
      _
    // Predicated region
    $region10: #{_net_forward_jit.1} parent=1 // pred_check
      _
    $region11: #{_net_forward_jit.1} parent=1 // pred_check_branch
      %24 = sbr.rel (0) target = $region13
    $region12: #{_net_forward_jit.1} parent=1 // pred_region
      _
    $region13: #{_net_forward_jit.1} parent=1 // pred_fallthru
      _
    // Predicated region
    $region14: #{_net_forward_jit.1} parent=1 // pred_check
      _
    $region15: #{_net_forward_jit.1} parent=1 // pred_check_branch
      %26 = sbr.rel (0) target = $region17
    $region16: #{_net_forward_jit.1} parent=1 // pred_region
      %27 = dma.done [#allocation3], 55040
    $region17: #{_net_forward_jit.1} parent=1 // pred_fallthru
      _
    %v28 = vld [vmem:[%s0] sm:$0xff]
    %v29 = vld [vmem:[%s0 + $0x8] sm:$0xff]
    %v30 = vld [vmem:[#allocation2] sm:$0xff]
    %v31 = vld [vmem:[#allocation2 + $0x10] sm:$0x3]
    %v32 = vld [vmem:[%s2] sm:$0xff]
    %v33 = vld [vmem:[%s2 + $0x8] sm:$0x3]
    %35 = vset.pattern.permute.xlu0 0
    %36 = vperm.xlu0 %35, %v32
    %v37 = vpop.permute.xlu0 %36
    %40 = vset.pattern.permute.xlu0 0
    %41 = vperm.xlu0 %40, %v33
    %v42 = vpop.permute.xlu0 %41
    %vm44 = vcmask 64512
    %v46 = vsel %vm44, %v30, 0
    %v49 = vsel %vm44, %v31, 0
    %51 = vmatprep.subr.mxu0 %v29
    %52 = vmatpush1.msra.mxu0 %v28
    %53 = vmatprep.subr.mxu0 0.0
    %54 = vmatpush1.msra.mxu0 0.0
    %55 = vmatprep.subr.mxu0 0.0
    %56 = vmatpush1.msra.mxu0 0.0
    %57 = vmatprep.subr.mxu0 0.0
    %58 = vmatpush1.msra.mxu0 0.0
    %59 = vmatprep.subr.mxu0 0.0
    %60 = vmatpush1.msra.mxu0 0.0
    %61 = vmatprep.subr.mxu0 0.0
    %62 = vmatpush1.msra.mxu0 0.0
    %63 = vmatprep.subr.mxu0 0.0
    %64 = vmatpush1.msra.mxu0 0.0
    %65 = vmatprep.subr.mxu0 0.0
    %66 = vmatpush1.msra.mxu0 0.0
    %67 = vmatprep.subr.mxu0 0.0
    %68 = vmatpush1.msra.mxu0 0.0
    %69 = vmatprep.subr.mxu0 0.0
    %70 = vmatpush1.msra.mxu0 0.0
    %71 = vmatprep.subr.mxu0 0.0
    %72 = vmatpush1.msra.mxu0 0.0
    %73 = vmatprep.subr.mxu0 0.0
    %74 = vmatpush1.msra.mxu0 0.0
    %75 = vmatprep.subr.mxu0 0.0
    %76 = vmatpush1.msra.mxu0 0.0
    %77 = vmatprep.subr.mxu0 0.0
    %78 = vmatpush1.msra.mxu0 0.0
    %79 = vmatprep.subr.mxu0 0.0
    %80 = vmatpush1.msra.mxu0 0.0
    %81 = vmatprep.subr.mxu0 0.0
    %82 = vmatpush1.msra.mxu0 0.0
    %83 = vmatprep.subr.mxu0 0.0
    %84 = vmatpush1.msra.mxu0 0.0
    %85 = vmatprep.subr.mxu0 0.0
    %86 = vmatpush1.msra.mxu0 0.0
    %87 = vmatprep.subr.mxu0 0.0
    %88 = vmatpush1.msra.mxu0 0.0
    %89 = vmatprep.subr.mxu0 0.0
    %90 = vmatpush1.msra.mxu0 0.0
    %91 = vmatprep.subr.mxu0 0.0
    %92 = vmatpush1.msra.mxu0 0.0
    %93 = vmatprep.subr.mxu0 0.0
    %94 = vmatpush1.msra.mxu0 0.0
    %95 = vmatprep.subr.mxu0 0.0
    %96 = vmatpush1.msra.mxu0 0.0
    %97 = vmatprep.subr.mxu0 0.0
    %98 = vmatpush1.msra.mxu0 0.0
    %99 = vmatprep.subr.mxu0 0.0
    %100 = vmatpush1.msra.mxu0 0.0
    %101 = vmatprep.subr.mxu0 0.0
    %102 = vmatpush1.msra.mxu0 0.0
    %103 = vmatprep.subr.mxu0 0.0
    %104 = vmatpush1.msra.mxu0 0.0
    %105 = vmatprep.subr.mxu0 0.0
    %106 = vmatpush1.msra.mxu0 0.0
    %107 = vmatprep.subr.mxu0 0.0
    %108 = vmatpush1.msra.mxu0 0.0
    %109 = vmatprep.subr.mxu0 0.0
    %110 = vmatpush1.msra.mxu0 0.0
    %111 = vmatprep.subr.mxu0 0.0
    %112 = vmatpush1.msra.mxu0 0.0
    %113 = vmatprep.subr.mxu0 0.0
    %114 = vmatpush1.msra.mxu0 0.0
    %115 = vmatprep.mubr.f32.mxu0 0.0
    %116 = vmatmul.mubr.f32.gmra.mrb[0].mxu0 %v46
    %v117 = vpop.f32.mrb[0].mxu0
    %v118 = vadd.f32 %v37, %v117
    %v119 = vpop.f32.mrb[0].mxu0
    %v120 = vadd.f32 %v37, %v119
    %121 = vmatprep.mubr.f32.mxu0 0.0
    %122 = vmatmul.mubr.f32.gmra.mrb[0].mxu0 %v49
    %v123 = vpop.f32.mrb[0].mxu0
    %v124 = vadd.f32 %v42, %v123
    %v125 = vpop.f32.mrb[0].mxu0
    %v126 = vadd.f32 %v42, %v125
    %127 = vdwg.mxu0
    %v128 = vmax.f32 %v118, 0.0
    %v129 = vmax.f32 %v120, 0.0
    %v130 = vmax.f32 %v124, 0.0
    %v131 = vmax.f32 %v126, 0.0
    %v132 = vld [vmem:[#allocation2 + $0x20] sm:$0xff]
    %v133 = vld [vmem:[#allocation2 + $0x30] sm:$0xff]
    %v134 = vld [vmem:[#allocation2 + $0x40] sm:$0xff]
    %v135 = vld [vmem:[#allocation2 + $0x50] sm:$0xff]
    %v136 = vld [vmem:[#allocation2 + $0x60] sm:$0xff]
    %v137 = vld [vmem:[#allocation2 + $0x70] sm:$0xff]
    %v138 = vld [vmem:[#allocation2 + $0x80] sm:$0xff]
    %v139 = vld [vmem:[#allocation2 + $0x90] sm:$0xff]
    %v140 = vld [vmem:[%s2 + $0x10] sm:$0xff]
    %v141 = vld [vmem:[%s2 + $0x18] sm:$0xff]
    %v142 = vld [vmem:[%s2 + $0x20] sm:$0xff]
    %v143 = vld [vmem:[%s2 + $0x28] sm:$0xff]
    %v144 = vld [vmem:[%s2 + $0x30] sm:$0xff]
    %v145 = vld [vmem:[%s2 + $0x38] sm:$0xff]
    %v146 = vld [vmem:[%s2 + $0x40] sm:$0xff]
    %v147 = vld [vmem:[%s2 + $0x48] sm:$0xff]
    %149 = vset.pattern.permute.xlu0 0
    %150 = vperm.xlu0 %149, %v140
    %v151 = vpop.permute.xlu0 %150
    %154 = vset.pattern.permute.xlu0 0
    %155 = vperm.xlu0 %154, %v141
    %v156 = vpop.permute.xlu0 %155
    %159 = vset.pattern.permute.xlu0 0
    %160 = vperm.xlu0 %159, %v142
    %v161 = vpop.permute.xlu0 %160
    %164 = vset.pattern.permute.xlu0 0
    %165 = vperm.xlu0 %164, %v143
    %v166 = vpop.permute.xlu0 %165
    %169 = vset.pattern.permute.xlu0 0
    %170 = vperm.xlu0 %169, %v144
    %v171 = vpop.permute.xlu0 %170
    %174 = vset.pattern.permute.xlu0 0
    %175 = vperm.xlu0 %174, %v145
    %v176 = vpop.permute.xlu0 %175
    %179 = vset.pattern.permute.xlu0 0
    %180 = vperm.xlu0 %179, %v146
    %v181 = vpop.permute.xlu0 %180
    %184 = vset.pattern.permute.xlu0 0
    %185 = vperm.xlu0 %184, %v147
    %v186 = vpop.permute.xlu0 %185
    %vm188 = vcmask 80896
    %v190 = vsel %vm188, %v132, 0
    %v193 = vsel %vm188, %v133, 0
    %v196 = vsel %vm188, %v134, 0
    %v199 = vsel %vm188, %v135, 0
    %v202 = vsel %vm188, %v136, 0
    %v205 = vsel %vm188, %v137, 0
    %v208 = vsel %vm188, %v138, 0
    %v211 = vsel %vm188, %v139, 0
    %vm213 = vcmask 1041408
    %v215 = vsel %vm213, %v130, 0
    %v218 = vsel %vm213, %v131, 0
    %220 = vmatprep.subr.mxu0 %v129
    %221 = vmatpush1.msra.mxu0 %v128
    %222 = vmatprep.subr.mxu0 %v218
    %223 = vmatpush1.msra.mxu0 %v215
    %224 = vmatprep.subr.mxu0 0.0
    %225 = vmatpush1.msra.mxu0 0.0
    %226 = vmatprep.subr.mxu0 0.0
    %227 = vmatpush1.msra.mxu0 0.0
    %228 = vmatprep.subr.mxu0 0.0
    %229 = vmatpush1.msra.mxu0 0.0
    %230 = vmatprep.subr.mxu0 0.0
    %231 = vmatpush1.msra.mxu0 0.0
    %232 = vmatprep.subr.mxu0 0.0
    %233 = vmatpush1.msra.mxu0 0.0
    %234 = vmatprep.subr.mxu0 0.0
    %235 = vmatpush1.msra.mxu0 0.0
    %236 = vmatprep.subr.mxu0 0.0
    %237 = vmatpush1.msra.mxu0 0.0
    %238 = vmatprep.subr.mxu0 0.0
    %239 = vmatpush1.msra.mxu0 0.0
    %240 = vmatprep.subr.mxu0 0.0
    %241 = vmatpush1.msra.mxu0 0.0
    %242 = vmatprep.subr.mxu0 0.0
    %243 = vmatpush1.msra.mxu0 0.0
    %244 = vmatprep.subr.mxu0 0.0
    %245 = vmatpush1.msra.mxu0 0.0
    %246 = vmatprep.subr.mxu0 0.0
    %247 = vmatpush1.msra.mxu0 0.0
    %248 = vmatprep.subr.mxu0 0.0
    %249 = vmatpush1.msra.mxu0 0.0
    %250 = vmatprep.subr.mxu0 0.0
    %251 = vmatpush1.msra.mxu0 0.0
    %252 = vmatprep.subr.mxu0 0.0
    %253 = vmatpush1.msra.mxu0 0.0
    %254 = vmatprep.subr.mxu0 0.0
    %255 = vmatpush1.msra.mxu0 0.0
    %256 = vmatprep.subr.mxu0 0.0
    %257 = vmatpush1.msra.mxu0 0.0
    %258 = vmatprep.subr.mxu0 0.0
    %259 = vmatpush1.msra.mxu0 0.0
    %260 = vmatprep.subr.mxu0 0.0
    %261 = vmatpush1.msra.mxu0 0.0
    %262 = vmatprep.subr.mxu0 0.0
    %263 = vmatpush1.msra.mxu0 0.0
    %264 = vmatprep.subr.mxu0 0.0
    %265 = vmatpush1.msra.mxu0 0.0
    %266 = vmatprep.subr.mxu0 0.0
    %267 = vmatpush1.msra.mxu0 0.0
    %268 = vmatprep.subr.mxu0 0.0
    %269 = vmatpush1.msra.mxu0 0.0
    %270 = vmatprep.subr.mxu0 0.0
    %271 = vmatpush1.msra.mxu0 0.0
    %272 = vmatprep.subr.mxu0 0.0
    %273 = vmatpush1.msra.mxu0 0.0
    %274 = vmatprep.subr.mxu0 0.0
    %275 = vmatpush1.msra.mxu0 0.0
    %276 = vmatprep.subr.mxu0 0.0
    %277 = vmatpush1.msra.mxu0 0.0
    %278 = vmatprep.subr.mxu0 0.0
    %279 = vmatpush1.msra.mxu0 0.0
    %280 = vmatprep.subr.mxu0 0.0
    %281 = vmatpush1.msra.mxu0 0.0
    %282 = vmatprep.subr.mxu0 0.0
    %283 = vmatpush1.msra.mxu0 0.0
    %284 = vmatprep.mubr.f32.mxu0 0.0
    %285 = vmatmul.mubr.f32.gmra.mrb[0].mxu0 %v190
    %v286 = vpop.f32.mrb[0].mxu0
    %v287 = vadd.f32 %v151, %v286
    %v288 = vpop.f32.mrb[0].mxu0
    %v289 = vadd.f32 %v151, %v288
    %290 = vmatprep.mubr.f32.mxu0 0.0
    %291 = vmatmul.mubr.f32.gmra.mrb[0].mxu0 %v193
    %v292 = vpop.f32.mrb[0].mxu0
    %v293 = vadd.f32 %v156, %v292
    %v294 = vpop.f32.mrb[0].mxu0
    %v295 = vadd.f32 %v156, %v294
    %296 = vmatprep.mubr.f32.mxu0 0.0
    %297 = vmatmul.mubr.f32.gmra.mrb[0].mxu0 %v196
    %v298 = vpop.f32.mrb[0].mxu0
    %v299 = vadd.f32 %v161, %v298
    %v300 = vpop.f32.mrb[0].mxu0
    %v301 = vadd.f32 %v161, %v300
    %302 = vmatprep.mubr.f32.mxu0 0.0
    %303 = vmatmul.mubr.f32.gmra.mrb[0].mxu0 %v199
    %v304 = vpop.f32.mrb[0].mxu0
    %v305 = vadd.f32 %v166, %v304
    %v306 = vpop.f32.mrb[0].mxu0
    %v307 = vadd.f32 %v166, %v306
    %308 = vmatprep.mubr.f32.mxu0 0.0
    %309 = vmatmul.mubr.f32.gmra.mrb[0].mxu0 %v202
    %v310 = vpop.f32.mrb[0].mxu0
    %v311 = vadd.f32 %v171, %v310
    %v312 = vpop.f32.mrb[0].mxu0
    %v313 = vadd.f32 %v171, %v312
    %314 = vmatprep.mubr.f32.mxu0 0.0
    %315 = vmatmul.mubr.f32.gmra.mrb[0].mxu0 %v205
    %v316 = vpop.f32.mrb[0].mxu0
    %v317 = vadd.f32 %v176, %v316
    %v318 = vpop.f32.mrb[0].mxu0
    %v319 = vadd.f32 %v176, %v318
    %320 = vmatprep.mubr.f32.mxu0 0.0
    %321 = vmatmul.mubr.f32.gmra.mrb[0].mxu0 %v208
    %v322 = vpop.f32.mrb[0].mxu0
    %v323 = vadd.f32 %v181, %v322
    %v324 = vpop.f32.mrb[0].mxu0
    %v325 = vadd.f32 %v181, %v324
    %326 = vmatprep.mubr.f32.mxu0 0.0
    %327 = vmatmul.mubr.f32.gmra.mrb[0].mxu0 %v211
    %v328 = vpop.f32.mrb[0].mxu0
    %v329 = vadd.f32 %v186, %v328
    %v330 = vpop.f32.mrb[0].mxu0
    %v331 = vadd.f32 %v186, %v330
    %332 = vdwg.mxu0
    %v333 = vmax.f32 %v287, 0.0
    %v334 = vmax.f32 %v289, 0.0
    %v335 = vmax.f32 %v293, 0.0
    %v336 = vmax.f32 %v295, 0.0
    %v337 = vmax.f32 %v299, 0.0
    %v338 = vmax.f32 %v301, 0.0
    %v339 = vmax.f32 %v305, 0.0
    %v340 = vmax.f32 %v307, 0.0
    %v341 = vmax.f32 %v311, 0.0
    %v342 = vmax.f32 %v313, 0.0
    %v343 = vmax.f32 %v317, 0.0
    %v344 = vmax.f32 %v319, 0.0
    %v345 = vmax.f32 %v323, 0.0
    %v346 = vmax.f32 %v325, 0.0
    %v347 = vmax.f32 %v329, 0.0
    %v348 = vmax.f32 %v331, 0.0
    %v349 = vld [vmem:[#allocation2 + $0xa0] sm:$0xff]
    %v350 = vld [vmem:[#allocation2 + $0xb0] sm:$0xff]
    %v351 = vld [vmem:[#allocation2 + $0xc0] sm:$0xff]
    %v352 = vld [vmem:[#allocation2 + $0xd0] sm:$0xff]
    %v353 = vld [vmem:[#allocation2 + $0xe0] sm:$0xff]
    %v354 = vld [vmem:[#allocation2 + $0xf0] sm:$0xff]
    %v355 = vld [vmem:[#allocation2 + $0x100] sm:$0xff]
    %v356 = vld [vmem:[#allocation2 + $0x110] sm:$0xff]
    %v357 = vld [vmem:[#allocation2 + $0x120] sm:$0xff]
    %v358 = vld [vmem:[#allocation2 + $0x130] sm:$0xff]
    %v359 = vld [vmem:[#allocation2 + $0x140] sm:$0xff]
    %v360 = vld [vmem:[#allocation2 + $0x150] sm:$0xff]
    %v361 = vld [vmem:[#allocation2 + $0x160] sm:$0xff]
    %v362 = vld [vmem:[#allocation2 + $0x170] sm:$0xff]
    %v363 = vld [vmem:[#allocation2 + $0x180] sm:$0xff]
    %v364 = vld [vmem:[#allocation2 + $0x190] sm:$0xff]
    %v365 = vld [vmem:[%s2 + $0x50] sm:$0xff]
    %v366 = vld [vmem:[%s2 + $0x58] sm:$0xff]
    %v367 = vld [vmem:[%s2 + $0x60] sm:$0xff]
    %v368 = vld [vmem:[%s2 + $0x68] sm:$0xff]
    %v369 = vld [vmem:[%s2 + $0x70] sm:$0xff]
    %v370 = vld [vmem:[%s2 + $0x78] sm:$0xff]
    %v371 = vld [vmem:[%s2 + $0x80] sm:$0xff]
    %v372 = vld [vmem:[%s2 + $0x88] sm:$0xff]
    %v373 = vld [vmem:[%s2 + $0x90] sm:$0xff]
    %v374 = vld [vmem:[%s2 + $0x98] sm:$0xff]
    %v375 = vld [vmem:[%s2 + $0xa0] sm:$0xff]
    %v376 = vld [vmem:[%s2 + $0xa8] sm:$0xff]
    %v377 = vld [vmem:[%s2 + $0xb0] sm:$0xff]
    %v378 = vld [vmem:[%s2 + $0xb8] sm:$0xff]
    %v379 = vld [vmem:[%s2 + $0xc0] sm:$0xff]
    %v380 = vld [vmem:[%s2 + $0xc8] sm:$0xff]
    %382 = vset.pattern.permute.xlu0 0
    %383 = vperm.xlu0 %382, %v365
    %v384 = vpop.permute.xlu0 %383
    %387 = vset.pattern.permute.xlu0 0
    %388 = vperm.xlu0 %387, %v366
    %v389 = vpop.permute.xlu0 %388
    %392 = vset.pattern.permute.xlu0 0
    %393 = vperm.xlu0 %392, %v367
    %v394 = vpop.permute.xlu0 %393
    %397 = vset.pattern.permute.xlu0 0
    %398 = vperm.xlu0 %397, %v368
    %v399 = vpop.permute.xlu0 %398
    %402 = vset.pattern.permute.xlu0 0
    %403 = vperm.xlu0 %402, %v369
    %v404 = vpop.permute.xlu0 %403
    %407 = vset.pattern.permute.xlu0 0
    %408 = vperm.xlu0 %407, %v370
    %v409 = vpop.permute.xlu0 %408
    %412 = vset.pattern.permute.xlu0 0
    %413 = vperm.xlu0 %412, %v371
    %v414 = vpop.permute.xlu0 %413
    %417 = vset.pattern.permute.xlu0 0
    %418 = vperm.xlu0 %417, %v372
    %v419 = vpop.permute.xlu0 %418
    %422 = vset.pattern.permute.xlu0 0
    %423 = vperm.xlu0 %422, %v373
    %v424 = vpop.permute.xlu0 %423
    %427 = vset.pattern.permute.xlu0 0
    %428 = vperm.xlu0 %427, %v374
    %v429 = vpop.permute.xlu0 %428
    %432 = vset.pattern.permute.xlu0 0
    %433 = vperm.xlu0 %432, %v375
    %v434 = vpop.permute.xlu0 %433
    %437 = vset.pattern.permute.xlu0 0
    %438 = vperm.xlu0 %437, %v376
    %v439 = vpop.permute.xlu0 %438
    %442 = vset.pattern.permute.xlu0 0
    %443 = vperm.xlu0 %442, %v377
    %v444 = vpop.permute.xlu0 %443
    %447 = vset.pattern.permute.xlu0 0
    %448 = vperm.xlu0 %447, %v378
    %v449 = vpop.permute.xlu0 %448
    %452 = vset.pattern.permute.xlu0 0
    %453 = vperm.xlu0 %452, %v379
    %v454 = vpop.permute.xlu0 %453
    %457 = vset.pattern.permute.xlu0 0
    %458 = vperm.xlu0 %457, %v380
    %v459 = vpop.permute.xlu0 %458
    %vm461 = vcmask 523264
    %v463 = vsel %vm461, %v349, 0
    %v466 = vsel %vm461, %v350, 0
    %v469 = vsel %vm461, %v351, 0
    %v472 = vsel %vm461, %v352, 0
    %v475 = vsel %vm461, %v353, 0
    %v478 = vsel %vm461, %v354, 0
    %v481 = vsel %vm461, %v355, 0
    %v484 = vsel %vm461, %v356, 0
    %v487 = vsel %vm461, %v357, 0
    %v490 = vsel %vm461, %v358, 0
    %v493 = vsel %vm461, %v359, 0
    %v496 = vsel %vm461, %v360, 0
    %v499 = vsel %vm461, %v361, 0
    %v502 = vsel %vm461, %v362, 0
    %v505 = vsel %vm461, %v363, 0
    %v508 = vsel %vm461, %v364, 0
    %510 = vmatprep.subr.mxu0 %v334
    %511 = vmatpush1.msra.mxu0 %v333
    %512 = vmatprep.subr.mxu0 %v336
    %513 = vmatpush1.msra.mxu0 %v335
    %514 = vmatprep.subr.mxu0 %v338
    %515 = vmatpush1.msra.mxu0 %v337
    %516 = vmatprep.subr.mxu0 %v340
    %517 = vmatpush1.msra.mxu0 %v339
    %518 = vmatprep.subr.mxu0 %v342
    %519 = vmatpush1.msra.mxu0 %v341
    %520 = vmatprep.subr.mxu0 %v344
    %521 = vmatpush1.msra.mxu0 %v343
    %522 = vmatprep.subr.mxu0 %v346
    %523 = vmatpush1.msra.mxu0 %v345
    %524 = vmatprep.subr.mxu0 %v348
    %525 = vmatpush1.msra.mxu0 %v347
    %526 = vmatprep.subr.mxu0 0.0
    %527 = vmatpush1.msra.mxu0 0.0
    %528 = vmatprep.subr.mxu0 0.0
    %529 = vmatpush1.msra.mxu0 0.0
    %530 = vmatprep.subr.mxu0 0.0
    %531 = vmatpush1.msra.mxu0 0.0
    %532 = vmatprep.subr.mxu0 0.0
    %533 = vmatpush1.msra.mxu0 0.0
    %534 = vmatprep.subr.mxu0 0.0
    %535 = vmatpush1.msra.mxu0 0.0
    %536 = vmatprep.subr.mxu0 0.0
    %537 = vmatpush1.msra.mxu0 0.0
    %538 = vmatprep.subr.mxu0 0.0
    %539 = vmatpush1.msra.mxu0 0.0
    %540 = vmatprep.subr.mxu0 0.0
    %541 = vmatpush1.msra.mxu0 0.0
    %542 = vmatprep.subr.mxu0 0.0
    %543 = vmatpush1.msra.mxu0 0.0
    %544 = vmatprep.subr.mxu0 0.0
    %545 = vmatpush1.msra.mxu0 0.0
    %546 = vmatprep.subr.mxu0 0.0
    %547 = vmatpush1.msra.mxu0 0.0
    %548 = vmatprep.subr.mxu0 0.0
    %549 = vmatpush1.msra.mxu0 0.0
    %550 = vmatprep.subr.mxu0 0.0
    %551 = vmatpush1.msra.mxu0 0.0
    %552 = vmatprep.subr.mxu0 0.0
    %553 = vmatpush1.msra.mxu0 0.0
    %554 = vmatprep.subr.mxu0 0.0
    %555 = vmatpush1.msra.mxu0 0.0
    %556 = vmatprep.subr.mxu0 0.0
    %557 = vmatpush1.msra.mxu0 0.0
    %558 = vmatprep.subr.mxu0 0.0
    %559 = vmatpush1.msra.mxu0 0.0
    %560 = vmatprep.subr.mxu0 0.0
    %561 = vmatpush1.msra.mxu0 0.0
    %562 = vmatprep.subr.mxu0 0.0
    %563 = vmatpush1.msra.mxu0 0.0
    %564 = vmatprep.subr.mxu0 0.0
    %565 = vmatpush1.msra.mxu0 0.0
    %566 = vmatprep.subr.mxu0 0.0
    %567 = vmatpush1.msra.mxu0 0.0
    %568 = vmatprep.subr.mxu0 0.0
    %569 = vmatpush1.msra.mxu0 0.0
    %570 = vmatprep.subr.mxu0 0.0
    %571 = vmatpush1.msra.mxu0 0.0
    %572 = vmatprep.subr.mxu0 0.0
    %573 = vmatpush1.msra.mxu0 0.0
    %574 = vmatprep.mubr.f32.mxu0 0.0
    %575 = vmatmul.mubr.f32.gmra.mrb[0].mxu0 %v463
    %v576 = vpop.f32.mrb[0].mxu0
    %v577 = vadd.f32 %v384, %v576
    %v578 = vpop.f32.mrb[0].mxu0
    %v579 = vadd.f32 %v384, %v578
    %580 = vmatprep.mubr.f32.mxu0 0.0
    %581 = vmatmul.mubr.f32.gmra.mrb[0].mxu0 %v466
    %v582 = vpop.f32.mrb[0].mxu0
    %v583 = vadd.f32 %v389, %v582
    %v584 = vpop.f32.mrb[0].mxu0
    %v585 = vadd.f32 %v389, %v584
    %586 = vmatprep.mubr.f32.mxu0 0.0
    %587 = vmatmul.mubr.f32.gmra.mrb[0].mxu0 %v469
    %v588 = vpop.f32.mrb[0].mxu0
    %v589 = vadd.f32 %v394, %v588
    %v590 = vpop.f32.mrb[0].mxu0
    %v591 = vadd.f32 %v394, %v590
    %592 = vmatprep.mubr.f32.mxu0 0.0
    %593 = vmatmul.mubr.f32.gmra.mrb[0].mxu0 %v472
    %v594 = vpop.f32.mrb[0].mxu0
    %v595 = vadd.f32 %v399, %v594
    %v596 = vpop.f32.mrb[0].mxu0
    %v597 = vadd.f32 %v399, %v596
    %598 = vmatprep.mubr.f32.mxu0 0.0
    %599 = vmatmul.mubr.f32.gmra.mrb[0].mxu0 %v475
    %v600 = vpop.f32.mrb[0].mxu0
    %v601 = vadd.f32 %v404, %v600
    %v602 = vpop.f32.mrb[0].mxu0
    %v603 = vadd.f32 %v404, %v602
    %604 = vmatprep.mubr.f32.mxu0 0.0
    %605 = vmatmul.mubr.f32.gmra.mrb[0].mxu0 %v478
    %v606 = vpop.f32.mrb[0].mxu0
    %v607 = vadd.f32 %v409, %v606
    %v608 = vpop.f32.mrb[0].mxu0
    %v609 = vadd.f32 %v409, %v608
    %610 = vmatprep.mubr.f32.mxu0 0.0
    %611 = vmatmul.mubr.f32.gmra.mrb[0].mxu0 %v481
    %v612 = vpop.f32.mrb[0].mxu0
    %v613 = vadd.f32 %v414, %v612
    %v614 = vpop.f32.mrb[0].mxu0
    %v615 = vadd.f32 %v414, %v614
    %616 = vmatprep.mubr.f32.mxu0 0.0
    %617 = vmatmul.mubr.f32.gmra.mrb[0].mxu0 %v484
    %v618 = vpop.f32.mrb[0].mxu0
    %v619 = vadd.f32 %v419, %v618
    %v620 = vpop.f32.mrb[0].mxu0
    %v621 = vadd.f32 %v419, %v620
    %622 = vmatprep.mubr.f32.mxu0 0.0
    %623 = vmatmul.mubr.f32.gmra.mrb[0].mxu0 %v487
    %v624 = vpop.f32.mrb[0].mxu0
    %v625 = vadd.f32 %v424, %v624
    %v626 = vpop.f32.mrb[0].mxu0
    %v627 = vadd.f32 %v424, %v626
    %628 = vmatprep.mubr.f32.mxu0 0.0
    %629 = vmatmul.mubr.f32.gmra.mrb[0].mxu0 %v490
    %v630 = vpop.f32.mrb[0].mxu0
    %v631 = vadd.f32 %v429, %v630
    %v632 = vpop.f32.mrb[0].mxu0
    %v633 = vadd.f32 %v429, %v632
    %634 = vmatprep.mubr.f32.mxu0 0.0
    %635 = vmatmul.mubr.f32.gmra.mrb[0].mxu0 %v493
    %v636 = vpop.f32.mrb[0].mxu0
    %v637 = vadd.f32 %v434, %v636
    %v638 = vpop.f32.mrb[0].mxu0
    %v639 = vadd.f32 %v434, %v638
    %640 = vmatprep.mubr.f32.mxu0 0.0
    %641 = vmatmul.mubr.f32.gmra.mrb[0].mxu0 %v496
    %v642 = vpop.f32.mrb[0].mxu0
    %v643 = vadd.f32 %v439, %v642
    %v644 = vpop.f32.mrb[0].mxu0
    %v645 = vadd.f32 %v439, %v644
    %646 = vmatprep.mubr.f32.mxu0 0.0
    %647 = vmatmul.mubr.f32.gmra.mrb[0].mxu0 %v499
    %v648 = vpop.f32.mrb[0].mxu0
    %v649 = vadd.f32 %v444, %v648
    %v650 = vpop.f32.mrb[0].mxu0
    %v651 = vadd.f32 %v444, %v650
    %652 = vmatprep.mubr.f32.mxu0 0.0
    %653 = vmatmul.mubr.f32.gmra.mrb[0].mxu0 %v502
    %v654 = vpop.f32.mrb[0].mxu0
    %v655 = vadd.f32 %v449, %v654
    %v656 = vpop.f32.mrb[0].mxu0
    %v657 = vadd.f32 %v449, %v656
    %658 = vmatprep.mubr.f32.mxu0 0.0
    %659 = vmatmul.mubr.f32.gmra.mrb[0].mxu0 %v505
    %v660 = vpop.f32.mrb[0].mxu0
    %v661 = vadd.f32 %v454, %v660
    %v662 = vpop.f32.mrb[0].mxu0
    %v663 = vadd.f32 %v454, %v662
    %664 = vmatprep.mubr.f32.mxu0 0.0
    %665 = vmatmul.mubr.f32.gmra.mrb[0].mxu0 %v508
    %v666 = vpop.f32.mrb[0].mxu0
    %v667 = vadd.f32 %v459, %v666
    %v668 = vpop.f32.mrb[0].mxu0
    %v669 = vadd.f32 %v459, %v668
    %670 = vdwg.mxu0
    %v671 = vmax.f32 %v577, 0.0
    %v672 = vmax.f32 %v579, 0.0
    %v673 = vmax.f32 %v583, 0.0
    %v674 = vmax.f32 %v585, 0.0
    %v675 = vmax.f32 %v589, 0.0
    %v676 = vmax.f32 %v591, 0.0
    %v677 = vmax.f32 %v595, 0.0
    %v678 = vmax.f32 %v597, 0.0
    %v679 = vmax.f32 %v601, 0.0
    %v680 = vmax.f32 %v603, 0.0
    %v681 = vmax.f32 %v607, 0.0
    %v682 = vmax.f32 %v609, 0.0
    %v683 = vmax.f32 %v613, 0.0
    %v684 = vmax.f32 %v615, 0.0
    %v685 = vmax.f32 %v619, 0.0
    %v686 = vmax.f32 %v621, 0.0
    %v687 = vmax.f32 %v625, 0.0
    %v688 = vmax.f32 %v627, 0.0
    %v689 = vmax.f32 %v631, 0.0
    %v690 = vmax.f32 %v633, 0.0
    %v691 = vmax.f32 %v637, 0.0
    %v692 = vmax.f32 %v639, 0.0
    %v693 = vmax.f32 %v643, 0.0
    %v694 = vmax.f32 %v645, 0.0
    %v695 = vmax.f32 %v649, 0.0
    %v696 = vmax.f32 %v651, 0.0
    %v697 = vmax.f32 %v655, 0.0
    %v698 = vmax.f32 %v657, 0.0
    %v699 = vmax.f32 %v661, 0.0
    %v700 = vmax.f32 %v663, 0.0
    %v701 = vmax.f32 %v667, 0.0
    %v702 = vmax.f32 %v669, 0.0
    %v703 = vld [vmem:[#allocation2 + $0x1a0] sm:$0xff]
    %v704 = vld [vmem:[#allocation2 + $0x1b0] sm:$0xff]
    %v705 = vld [vmem:[#allocation2 + $0x1c0] sm:$0xff]
    %v706 = vld [vmem:[#allocation2 + $0x1d0] sm:$0xff]
    %v707 = vld [vmem:[#allocation2 + $0x1e0] sm:$0xff]
    %v708 = vld [vmem:[#allocation2 + $0x1f0] sm:$0xff]
    %v709 = vld [vmem:[#allocation2 + $0x200] sm:$0xff]
    %v710 = vld [vmem:[#allocation2 + $0x210] sm:$0xff]
    %v711 = vld [vmem:[#allocation2 + $0x220] sm:$0xff]
    %v712 = vld [vmem:[#allocation2 + $0x230] sm:$0xff]
    %v713 = vld [vmem:[#allocation2 + $0x240] sm:$0xff]
    %v714 = vld [vmem:[#allocation2 + $0x250] sm:$0xff]
    %v715 = vld [vmem:[#allocation2 + $0x260] sm:$0xff]
    %v716 = vld [vmem:[#allocation2 + $0x270] sm:$0xff]
    %v717 = vld [vmem:[#allocation2 + $0x280] sm:$0xff]
    %v718 = vld [vmem:[#allocation2 + $0x290] sm:$0xff]
    %v719 = vld [vmem:[#allocation2 + $0x2a0] sm:$0xff]
    %v720 = vld [vmem:[#allocation2 + $0x2b0] sm:$0xff]
    %v721 = vld [vmem:[#allocation2 + $0x2c0] sm:$0xff]
    %v722 = vld [vmem:[#allocation2 + $0x2d0] sm:$0xff]
    %v723 = vld [vmem:[#allocation2 + $0x2e0] sm:$0xff]
    %v724 = vld [vmem:[#allocation2 + $0x2f0] sm:$0xff]
    %v725 = vld [vmem:[#allocation2 + $0x300] sm:$0xff]
    %v726 = vld [vmem:[#allocation2 + $0x310] sm:$0xff]
    %v727 = vld [vmem:[#allocation2 + $0x320] sm:$0xff]
    %v728 = vld [vmem:[#allocation2 + $0x330] sm:$0xff]
    %v729 = vld [vmem:[#allocation2 + $0x340] sm:$0xff]
    %v730 = vld [vmem:[#allocation2 + $0x350] sm:$0xff]
    %v731 = vld [vmem:[#allocation2 + $0x360] sm:$0xff]
    %v732 = vld [vmem:[#allocation2 + $0x370] sm:$0xff]
    %v733 = vld [vmem:[#allocation2 + $0x380] sm:$0xff]
    %v734 = vld [vmem:[#allocation2 + $0x390] sm:$0xff]
    %v735 = vld [vmem:[%s2 + $0xd0] sm:$0xff]
    %v736 = vld [vmem:[%s2 + $0xd8] sm:$0xff]
    %v737 = vld [vmem:[%s2 + $0xe0] sm:$0xff]
    %v738 = vld [vmem:[%s2 + $0xe8] sm:$0xff]
    %v739 = vld [vmem:[%s2 + $0xf0] sm:$0xff]
    %v740 = vld [vmem:[%s2 + $0xf8] sm:$0xff]
    %v741 = vld [vmem:[%s2 + $0x100] sm:$0xff]
    %v742 = vld [vmem:[%s2 + $0x108] sm:$0xff]
    %v743 = vld [vmem:[%s2 + $0x110] sm:$0xff]
    %v744 = vld [vmem:[%s2 + $0x118] sm:$0xff]
    %v745 = vld [vmem:[%s2 + $0x120] sm:$0xff]
    %v746 = vld [vmem:[%s2 + $0x128] sm:$0xff]
    %v747 = vld [vmem:[%s2 + $0x130] sm:$0xff]
    %v748 = vld [vmem:[%s2 + $0x138] sm:$0xff]
    %v749 = vld [vmem:[%s2 + $0x140] sm:$0xff]
    %v750 = vld [vmem:[%s2 + $0x148] sm:$0xff]
    %v751 = vld [vmem:[%s2 + $0x150] sm:$0xff]
    %v752 = vld [vmem:[%s2 + $0x158] sm:$0xff]
    %v753 = vld [vmem:[%s2 + $0x160] sm:$0xff]
    %v754 = vld [vmem:[%s2 + $0x168] sm:$0xff]
    %v755 = vld [vmem:[%s2 + $0x170] sm:$0xff]
    %v756 = vld [vmem:[%s2 + $0x178] sm:$0xff]
    %v757 = vld [vmem:[%s2 + $0x180] sm:$0xff]
    %v758 = vld [vmem:[%s2 + $0x188] sm:$0xff]
    %v759 = vld [vmem:[%s2 + $0x190] sm:$0xff]
    %v760 = vld [vmem:[%s2 + $0x198] sm:$0xff]
    %v761 = vld [vmem:[%s2 + $0x1a0] sm:$0xff]
    %v762 = vld [vmem:[%s2 + $0x1a8] sm:$0xff]
    %v763 = vld [vmem:[%s2 + $0x1b0] sm:$0xff]
    %v764 = vld [vmem:[%s2 + $0x1b8] sm:$0xff]
    %v765 = vld [vmem:[%s2 + $0x1c0] sm:$0xff]
    %v766 = vld [vmem:[%s2 + $0x1c8] sm:$0xff]
    %768 = vset.pattern.permute.xlu0 0
    %769 = vperm.xlu0 %768, %v735
    %v770 = vpop.permute.xlu0 %769
    %773 = vset.pattern.permute.xlu0 0
    %774 = vperm.xlu0 %773, %v736
    %v775 = vpop.permute.xlu0 %774
    %778 = vset.pattern.permute.xlu0 0
    %779 = vperm.xlu0 %778, %v737
    %v780 = vpop.permute.xlu0 %779
    %783 = vset.pattern.permute.xlu0 0
    %784 = vperm.xlu0 %783, %v738
    %v785 = vpop.permute.xlu0 %784
    %788 = vset.pattern.permute.xlu0 0
    %789 = vperm.xlu0 %788, %v739
    %v790 = vpop.permute.xlu0 %789
    %793 = vset.pattern.permute.xlu0 0
    %794 = vperm.xlu0 %793, %v740
    %v795 = vpop.permute.xlu0 %794
    %798 = vset.pattern.permute.xlu0 0
    %799 = vperm.xlu0 %798, %v741
    %v800 = vpop.permute.xlu0 %799
    %803 = vset.pattern.permute.xlu0 0
    %804 = vperm.xlu0 %803, %v742
    %v805 = vpop.permute.xlu0 %804
    %808 = vset.pattern.permute.xlu0 0
    %809 = vperm.xlu0 %808, %v743
    %v810 = vpop.permute.xlu0 %809
    %813 = vset.pattern.permute.xlu0 0
    %814 = vperm.xlu0 %813, %v744
    %v815 = vpop.permute.xlu0 %814
    %818 = vset.pattern.permute.xlu0 0
    %819 = vperm.xlu0 %818, %v745
    %v820 = vpop.permute.xlu0 %819
    %823 = vset.pattern.permute.xlu0 0
    %824 = vperm.xlu0 %823, %v746
    %v825 = vpop.permute.xlu0 %824
    %828 = vset.pattern.permute.xlu0 0
    %829 = vperm.xlu0 %828, %v747
    %v830 = vpop.permute.xlu0 %829
    %833 = vset.pattern.permute.xlu0 0
    %834 = vperm.xlu0 %833, %v748
    %v835 = vpop.permute.xlu0 %834
    %838 = vset.pattern.permute.xlu0 0
    %839 = vperm.xlu0 %838, %v749
    %v840 = vpop.permute.xlu0 %839
    %843 = vset.pattern.permute.xlu0 0
    %844 = vperm.xlu0 %843, %v750
    %v845 = vpop.permute.xlu0 %844
    %848 = vset.pattern.permute.xlu0 0
    %849 = vperm.xlu0 %848, %v751
    %v850 = vpop.permute.xlu0 %849
    %853 = vset.pattern.permute.xlu0 0
    %854 = vperm.xlu0 %853, %v752
    %v855 = vpop.permute.xlu0 %854
    %858 = vset.pattern.permute.xlu0 0
    %859 = vperm.xlu0 %858, %v753
    %v860 = vpop.permute.xlu0 %859
    %863 = vset.pattern.permute.xlu0 0
    %864 = vperm.xlu0 %863, %v754
    %v865 = vpop.permute.xlu0 %864
    %868 = vset.pattern.permute.xlu0 0
    %869 = vperm.xlu0 %868, %v755
    %v870 = vpop.permute.xlu0 %869
    %873 = vset.pattern.permute.xlu0 0
    %874 = vperm.xlu0 %873, %v756
    %v875 = vpop.permute.xlu0 %874
    %878 = vset.pattern.permute.xlu0 0
    %879 = vperm.xlu0 %878, %v757
    %v880 = vpop.permute.xlu0 %879
    %883 = vset.pattern.permute.xlu0 0
    %884 = vperm.xlu0 %883, %v758
    %v885 = vpop.permute.xlu0 %884
    %888 = vset.pattern.permute.xlu0 0
    %889 = vperm.xlu0 %888, %v759
    %v890 = vpop.permute.xlu0 %889
    %893 = vset.pattern.permute.xlu0 0
    %894 = vperm.xlu0 %893, %v760
    %v895 = vpop.permute.xlu0 %894
    %898 = vset.pattern.permute.xlu0 0
    %899 = vperm.xlu0 %898, %v761
    %v900 = vpop.permute.xlu0 %899
    %903 = vset.pattern.permute.xlu0 0
    %904 = vperm.xlu0 %903, %v762
    %v905 = vpop.permute.xlu0 %904
    %908 = vset.pattern.permute.xlu0 0
    %909 = vperm.xlu0 %908, %v763
    %v910 = vpop.permute.xlu0 %909
    %913 = vset.pattern.permute.xlu0 0
    %914 = vperm.xlu0 %913, %v764
    %v915 = vpop.permute.xlu0 %914
    %918 = vset.pattern.permute.xlu0 0
    %919 = vperm.xlu0 %918, %v765
    %v920 = vpop.permute.xlu0 %919
    %923 = vset.pattern.permute.xlu0 0
    %924 = vperm.xlu0 %923, %v766
    %v925 = vpop.permute.xlu0 %924
    %927 = vmatprep.subr.mxu0 %v672
    %928 = vmatpush1.msra.mxu0 %v671
    %929 = vmatprep.subr.mxu0 %v674
    %930 = vmatpush1.msra.mxu0 %v673
    %931 = vmatprep.subr.mxu0 %v676
    %932 = vmatpush1.msra.mxu0 %v675
    %933 = vmatprep.subr.mxu0 %v678
    %934 = vmatpush1.msra.mxu0 %v677
    %935 = vmatprep.subr.mxu0 %v680
    %936 = vmatpush1.msra.mxu0 %v679
    %937 = vmatprep.subr.mxu0 %v682
    %938 = vmatpush1.msra.mxu0 %v681
    %939 = vmatprep.subr.mxu0 %v684
    %940 = vmatpush1.msra.mxu0 %v683
    %941 = vmatprep.subr.mxu0 %v686
    %942 = vmatpush1.msra.mxu0 %v685
    %943 = vmatprep.subr.mxu0 %v688
    %944 = vmatpush1.msra.mxu0 %v687
    %945 = vmatprep.subr.mxu0 %v690
    %946 = vmatpush1.msra.mxu0 %v689
    %947 = vmatprep.subr.mxu0 %v692
    %948 = vmatpush1.msra.mxu0 %v691
    %949 = vmatprep.subr.mxu0 %v694
    %950 = vmatpush1.msra.mxu0 %v693
    %951 = vmatprep.subr.mxu0 %v696
    %952 = vmatpush1.msra.mxu0 %v695
    %953 = vmatprep.subr.mxu0 %v698
    %954 = vmatpush1.msra.mxu0 %v697
    %955 = vmatprep.subr.mxu0 %v700
    %956 = vmatpush1.msra.mxu0 %v699
    %957 = vmatprep.subr.mxu0 %v702
    %958 = vmatpush1.msra.mxu0 %v701
    %959 = vmatprep.subr.mxu0 0.0
    %960 = vmatpush1.msra.mxu0 0.0
    %961 = vmatprep.subr.mxu0 0.0
    %962 = vmatpush1.msra.mxu0 0.0
    %963 = vmatprep.subr.mxu0 0.0
    %964 = vmatpush1.msra.mxu0 0.0
    %965 = vmatprep.subr.mxu0 0.0
    %966 = vmatpush1.msra.mxu0 0.0
    %967 = vmatprep.subr.mxu0 0.0
    %968 = vmatpush1.msra.mxu0 0.0
    %969 = vmatprep.subr.mxu0 0.0
    %970 = vmatpush1.msra.mxu0 0.0
    %971 = vmatprep.subr.mxu0 0.0
    %972 = vmatpush1.msra.mxu0 0.0
    %973 = vmatprep.subr.mxu0 0.0
    %974 = vmatpush1.msra.mxu0 0.0
    %975 = vmatprep.subr.mxu0 0.0
    %976 = vmatpush1.msra.mxu0 0.0
    %977 = vmatprep.subr.mxu0 0.0
    %978 = vmatpush1.msra.mxu0 0.0
    %979 = vmatprep.subr.mxu0 0.0
    %980 = vmatpush1.msra.mxu0 0.0
    %981 = vmatprep.subr.mxu0 0.0
    %982 = vmatpush1.msra.mxu0 0.0
    %983 = vmatprep.subr.mxu0 0.0
    %984 = vmatpush1.msra.mxu0 0.0
    %985 = vmatprep.subr.mxu0 0.0
    %986 = vmatpush1.msra.mxu0 0.0
    %987 = vmatprep.subr.mxu0 0.0
    %988 = vmatpush1.msra.mxu0 0.0
    %989 = vmatprep.subr.mxu0 0.0
    %990 = vmatpush1.msra.mxu0 0.0
    %991 = vmatprep.mubr.f32.mxu0 0.0
    %992 = vmatmul.mubr.f32.gmra.mrb[0].mxu0 %v703
    %v993 = vpop.f32.mrb[0].mxu0
    %v994 = vadd.f32 %v770, %v993
    %v995 = vpop.f32.mrb[0].mxu0
    %v996 = vadd.f32 %v770, %v995
    %997 = vmatprep.mubr.f32.mxu0 0.0
    %998 = vmatmul.mubr.f32.gmra.mrb[0].mxu0 %v704
    %v999 = vpop.f32.mrb[0].mxu0
    %v1000 = vadd.f32 %v775, %v999
    %v1001 = vpop.f32.mrb[0].mxu0
    %v1002 = vadd.f32 %v775, %v1001
    %1003 = vmatprep.mubr.f32.mxu0 0.0
    %1004 = vmatmul.mubr.f32.gmra.mrb[0].mxu0 %v705
    %v1005 = vpop.f32.mrb[0].mxu0
    %v1006 = vadd.f32 %v780, %v1005
    %v1007 = vpop.f32.mrb[0].mxu0
    %v1008 = vadd.f32 %v780, %v1007
    %1009 = vmatprep.mubr.f32.mxu0 0.0
    %1010 = vmatmul.mubr.f32.gmra.mrb[0].mxu0 %v706
    %v1011 = vpop.f32.mrb[0].mxu0
    %v1012 = vadd.f32 %v785, %v1011
    %v1013 = vpop.f32.mrb[0].mxu0
    %v1014 = vadd.f32 %v785, %v1013
    %1015 = vmatprep.mubr.f32.mxu0 0.0
    %1016 = vmatmul.mubr.f32.gmra.mrb[0].mxu0 %v707
    %v1017 = vpop.f32.mrb[0].mxu0
    %v1018 = vadd.f32 %v790, %v1017
    %v1019 = vpop.f32.mrb[0].mxu0
    %v1020 = vadd.f32 %v790, %v1019
    %1021 = vmatprep.mubr.f32.mxu0 0.0
    %1022 = vmatmul.mubr.f32.gmra.mrb[0].mxu0 %v708
    %v1023 = vpop.f32.mrb[0].mxu0
    %v1024 = vadd.f32 %v795, %v1023
    %v1025 = vpop.f32.mrb[0].mxu0
    %v1026 = vadd.f32 %v795, %v1025
    %1027 = vmatprep.mubr.f32.mxu0 0.0
    %1028 = vmatmul.mubr.f32.gmra.mrb[0].mxu0 %v709
    %v1029 = vpop.f32.mrb[0].mxu0
    %v1030 = vadd.f32 %v800, %v1029
    %v1031 = vpop.f32.mrb[0].mxu0
    %v1032 = vadd.f32 %v800, %v1031
    %1033 = vmatprep.mubr.f32.mxu0 0.0
    %1034 = vmatmul.mubr.f32.gmra.mrb[0].mxu0 %v710
    %v1035 = vpop.f32.mrb[0].mxu0
    %v1036 = vadd.f32 %v805, %v1035
    %v1037 = vpop.f32.mrb[0].mxu0
    %v1038 = vadd.f32 %v805, %v1037
    %1039 = vmatprep.mubr.f32.mxu0 0.0
    %1040 = vmatmul.mubr.f32.gmra.mrb[0].mxu0 %v711
    %v1041 = vpop.f32.mrb[0].mxu0
    %v1042 = vadd.f32 %v810, %v1041
    %v1043 = vpop.f32.mrb[0].mxu0
    %v1044 = vadd.f32 %v810, %v1043
    %1045 = vmatprep.mubr.f32.mxu0 0.0
    %1046 = vmatmul.mubr.f32.gmra.mrb[0].mxu0 %v712
    %v1047 = vpop.f32.mrb[0].mxu0
    %v1048 = vadd.f32 %v815, %v1047
    %v1049 = vpop.f32.mrb[0].mxu0
    %v1050 = vadd.f32 %v815, %v1049
    %1051 = vmatprep.mubr.f32.mxu0 0.0
    %1052 = vmatmul.mubr.f32.gmra.mrb[0].mxu0 %v713
    %v1053 = vpop.f32.mrb[0].mxu0
    %v1054 = vadd.f32 %v820, %v1053
    %v1055 = vpop.f32.mrb[0].mxu0
    %v1056 = vadd.f32 %v820, %v1055
    %1057 = vmatprep.mubr.f32.mxu0 0.0
    %1058 = vmatmul.mubr.f32.gmra.mrb[0].mxu0 %v714
    %v1059 = vpop.f32.mrb[0].mxu0
    %v1060 = vadd.f32 %v825, %v1059
    %v1061 = vpop.f32.mrb[0].mxu0
    %v1062 = vadd.f32 %v825, %v1061
    %1063 = vmatprep.mubr.f32.mxu0 0.0
    %1064 = vmatmul.mubr.f32.gmra.mrb[0].mxu0 %v715
    %v1065 = vpop.f32.mrb[0].mxu0
    %v1066 = vadd.f32 %v830, %v1065
    %v1067 = vpop.f32.mrb[0].mxu0
    %v1068 = vadd.f32 %v830, %v1067
    %1069 = vmatprep.mubr.f32.mxu0 0.0
    %1070 = vmatmul.mubr.f32.gmra.mrb[0].mxu0 %v716
    %v1071 = vpop.f32.mrb[0].mxu0
    %v1072 = vadd.f32 %v835, %v1071
    %v1073 = vpop.f32.mrb[0].mxu0
    %v1074 = vadd.f32 %v835, %v1073
    %1075 = vmatprep.mubr.f32.mxu0 0.0
    %1076 = vmatmul.mubr.f32.gmra.mrb[0].mxu0 %v717
    %v1077 = vpop.f32.mrb[0].mxu0
    %v1078 = vadd.f32 %v840, %v1077
    %v1079 = vpop.f32.mrb[0].mxu0
    %v1080 = vadd.f32 %v840, %v1079
    %1081 = vmatprep.mubr.f32.mxu0 0.0
    %1082 = vmatmul.mubr.f32.gmra.mrb[0].mxu0 %v718
    %v1083 = vpop.f32.mrb[0].mxu0
    %v1084 = vadd.f32 %v845, %v1083
    %v1085 = vpop.f32.mrb[0].mxu0
    %v1086 = vadd.f32 %v845, %v1085
    %1087 = vmatprep.mubr.f32.mxu0 0.0
    %1088 = vmatmul.mubr.f32.gmra.mrb[0].mxu0 %v719
    %v1089 = vpop.f32.mrb[0].mxu0
    %v1090 = vadd.f32 %v850, %v1089
    %v1091 = vpop.f32.mrb[0].mxu0
    %v1092 = vadd.f32 %v850, %v1091
    %1093 = vmatprep.mubr.f32.mxu0 0.0
    %1094 = vmatmul.mubr.f32.gmra.mrb[0].mxu0 %v720
    %v1095 = vpop.f32.mrb[0].mxu0
    %v1096 = vadd.f32 %v855, %v1095
    %v1097 = vpop.f32.mrb[0].mxu0
    %v1098 = vadd.f32 %v855, %v1097
    %1099 = vmatprep.mubr.f32.mxu0 0.0
    %1100 = vmatmul.mubr.f32.gmra.mrb[0].mxu0 %v721
    %v1101 = vpop.f32.mrb[0].mxu0
    %v1102 = vadd.f32 %v860, %v1101
    %v1103 = vpop.f32.mrb[0].mxu0
    %v1104 = vadd.f32 %v860, %v1103
    %1105 = vmatprep.mubr.f32.mxu0 0.0
    %1106 = vmatmul.mubr.f32.gmra.mrb[0].mxu0 %v722
    %v1107 = vpop.f32.mrb[0].mxu0
    %v1108 = vadd.f32 %v865, %v1107
    %v1109 = vpop.f32.mrb[0].mxu0
    %v1110 = vadd.f32 %v865, %v1109
    %1111 = vmatprep.mubr.f32.mxu0 0.0
    %1112 = vmatmul.mubr.f32.gmra.mrb[0].mxu0 %v723
    %v1113 = vpop.f32.mrb[0].mxu0
    %v1114 = vadd.f32 %v870, %v1113
    %v1115 = vpop.f32.mrb[0].mxu0
    %v1116 = vadd.f32 %v870, %v1115
    %1117 = vmatprep.mubr.f32.mxu0 0.0
    %1118 = vmatmul.mubr.f32.gmra.mrb[0].mxu0 %v724
    %v1119 = vpop.f32.mrb[0].mxu0
    %v1120 = vadd.f32 %v875, %v1119
    %v1121 = vpop.f32.mrb[0].mxu0
    %v1122 = vadd.f32 %v875, %v1121
    %1123 = vmatprep.mubr.f32.mxu0 0.0
    %1124 = vmatmul.mubr.f32.gmra.mrb[0].mxu0 %v725
    %v1125 = vpop.f32.mrb[0].mxu0
    %v1126 = vadd.f32 %v880, %v1125
    %v1127 = vpop.f32.mrb[0].mxu0
    %v1128 = vadd.f32 %v880, %v1127
    %1129 = vmatprep.mubr.f32.mxu0 0.0
    %1130 = vmatmul.mubr.f32.gmra.mrb[0].mxu0 %v726
    %v1131 = vpop.f32.mrb[0].mxu0
    %v1132 = vadd.f32 %v885, %v1131
    %v1133 = vpop.f32.mrb[0].mxu0
    %v1134 = vadd.f32 %v885, %v1133
    %1135 = vmatprep.mubr.f32.mxu0 0.0
    %1136 = vmatmul.mubr.f32.gmra.mrb[0].mxu0 %v727
    %v1137 = vpop.f32.mrb[0].mxu0
    %v1138 = vadd.f32 %v890, %v1137
    %v1139 = vpop.f32.mrb[0].mxu0
    %v1140 = vadd.f32 %v890, %v1139
    %1141 = vmatprep.mubr.f32.mxu0 0.0
    %1142 = vmatmul.mubr.f32.gmra.mrb[0].mxu0 %v728
    %v1143 = vpop.f32.mrb[0].mxu0
    %v1144 = vadd.f32 %v895, %v1143
    %v1145 = vpop.f32.mrb[0].mxu0
    %v1146 = vadd.f32 %v895, %v1145
    %1147 = vmatprep.mubr.f32.mxu0 0.0
    %1148 = vmatmul.mubr.f32.gmra.mrb[0].mxu0 %v729
    %v1149 = vpop.f32.mrb[0].mxu0
    %v1150 = vadd.f32 %v900, %v1149
    %v1151 = vpop.f32.mrb[0].mxu0
    %v1152 = vadd.f32 %v900, %v1151
    %1153 = vmatprep.mubr.f32.mxu0 0.0
    %1154 = vmatmul.mubr.f32.gmra.mrb[0].mxu0 %v730
    %v1155 = vpop.f32.mrb[0].mxu0
    %v1156 = vadd.f32 %v905, %v1155
    %v1157 = vpop.f32.mrb[0].mxu0
    %v1158 = vadd.f32 %v905, %v1157
    %1159 = vmatprep.mubr.f32.mxu0 0.0
    %1160 = vmatmul.mubr.f32.gmra.mrb[0].mxu0 %v731
    %v1161 = vpop.f32.mrb[0].mxu0
    %v1162 = vadd.f32 %v910, %v1161
    %v1163 = vpop.f32.mrb[0].mxu0
    %v1164 = vadd.f32 %v910, %v1163
    %1165 = vmatprep.mubr.f32.mxu0 0.0
    %1166 = vmatmul.mubr.f32.gmra.mrb[0].mxu0 %v732
    %v1167 = vpop.f32.mrb[0].mxu0
    %v1168 = vadd.f32 %v915, %v1167
    %v1169 = vpop.f32.mrb[0].mxu0
    %v1170 = vadd.f32 %v915, %v1169
    %1171 = vmatprep.mubr.f32.mxu0 0.0
    %1172 = vmatmul.mubr.f32.gmra.mrb[0].mxu0 %v733
    %v1173 = vpop.f32.mrb[0].mxu0
    %v1174 = vadd.f32 %v920, %v1173
    %v1175 = vpop.f32.mrb[0].mxu0
    %v1176 = vadd.f32 %v920, %v1175
    %1177 = vmatprep.mubr.f32.mxu0 0.0
    %1178 = vmatmul.mubr.f32.gmra.mrb[0].mxu0 %v734
    %v1179 = vpop.f32.mrb[0].mxu0
    %v1180 = vadd.f32 %v925, %v1179
    %v1181 = vpop.f32.mrb[0].mxu0
    %v1182 = vadd.f32 %v925, %v1181
    %1183 = vdwg.mxu0
    %v1184 = vmax.f32 %v994, 0.0
    %v1185 = vmax.f32 %v996, 0.0
    %v1186 = vmax.f32 %v1000, 0.0
    %v1187 = vmax.f32 %v1002, 0.0
    %v1188 = vmax.f32 %v1006, 0.0
    %v1189 = vmax.f32 %v1008, 0.0
    %v1190 = vmax.f32 %v1012, 0.0
    %v1191 = vmax.f32 %v1014, 0.0
    %v1192 = vmax.f32 %v1018, 0.0
    %v1193 = vmax.f32 %v1020, 0.0
    %v1194 = vmax.f32 %v1024, 0.0
    %v1195 = vmax.f32 %v1026, 0.0
    %v1196 = vmax.f32 %v1030, 0.0
    %v1197 = vmax.f32 %v1032, 0.0
    %v1198 = vmax.f32 %v1036, 0.0
    %v1199 = vmax.f32 %v1038, 0.0
    %v1200 = vmax.f32 %v1042, 0.0
    %v1201 = vmax.f32 %v1044, 0.0
    %v1202 = vmax.f32 %v1048, 0.0
    %v1203 = vmax.f32 %v1050, 0.0
    %v1204 = vmax.f32 %v1054, 0.0
    %v1205 = vmax.f32 %v1056, 0.0
    %v1206 = vmax.f32 %v1060, 0.0
    %v1207 = vmax.f32 %v1062, 0.0
    %v1208 = vmax.f32 %v1066, 0.0
    %v1209 = vmax.f32 %v1068, 0.0
    %v1210 = vmax.f32 %v1072, 0.0
    %v1211 = vmax.f32 %v1074, 0.0
    %v1212 = vmax.f32 %v1078, 0.0
    %v1213 = vmax.f32 %v1080, 0.0
    %v1214 = vmax.f32 %v1084, 0.0
    %v1215 = vmax.f32 %v1086, 0.0
    %v1216 = vmax.f32 %v1090, 0.0
    %v1217 = vmax.f32 %v1092, 0.0
    %v1218 = vmax.f32 %v1096, 0.0
    %v1219 = vmax.f32 %v1098, 0.0
    %v1220 = vmax.f32 %v1102, 0.0
    %v1221 = vmax.f32 %v1104, 0.0
    %v1222 = vmax.f32 %v1108, 0.0
    %v1223 = vmax.f32 %v1110, 0.0
    %v1224 = vmax.f32 %v1114, 0.0
    %v1225 = vmax.f32 %v1116, 0.0
    %v1226 = vmax.f32 %v1120, 0.0
    %v1227 = vmax.f32 %v1122, 0.0
    %v1228 = vmax.f32 %v1126, 0.0
    %v1229 = vmax.f32 %v1128, 0.0
    %v1230 = vmax.f32 %v1132, 0.0
    %v1231 = vmax.f32 %v1134, 0.0
    %v1232 = vmax.f32 %v1138, 0.0
    %v1233 = vmax.f32 %v1140, 0.0
    %v1234 = vmax.f32 %v1144, 0.0
    %v1235 = vmax.f32 %v1146, 0.0
    %v1236 = vmax.f32 %v1150, 0.0
    %v1237 = vmax.f32 %v1152, 0.0
    %v1238 = vmax.f32 %v1156, 0.0
    %v1239 = vmax.f32 %v1158, 0.0
    %v1240 = vmax.f32 %v1162, 0.0
    %v1241 = vmax.f32 %v1164, 0.0
    %v1242 = vmax.f32 %v1168, 0.0
    %v1243 = vmax.f32 %v1170, 0.0
    %v1244 = vmax.f32 %v1174, 0.0
    %v1245 = vmax.f32 %v1176, 0.0
    %v1246 = vmax.f32 %v1180, 0.0
    %v1247 = vmax.f32 %v1182, 0.0
    %v1248 = vld [vmem:[#allocation2 + $0x3a0] sm:$0xff]
    %v1249 = vld [vmem:[#allocation2 + $0x3a8] sm:$0xff]
    %v1250 = vld [vmem:[#allocation2 + $0x3b0] sm:$0xff]
    %v1251 = vld [vmem:[#allocation2 + $0x3b8] sm:$0xff]
    %v1252 = vld [vmem:[#allocation2 + $0x3c0] sm:$0xff]
    %v1253 = vld [vmem:[#allocation2 + $0x3c8] sm:$0xff]
    %v1254 = vld [vmem:[#allocation2 + $0x3d0] sm:$0xff]
    %v1255 = vld [vmem:[#allocation2 + $0x3d8] sm:$0xff]
    %v1256 = vld [vmem:[#allocation2 + $0x3e0] sm:$0xff]
    %v1257 = vld [vmem:[#allocation2 + $0x3e8] sm:$0xff]
    %v1258 = vld [vmem:[#allocation2 + $0x3f0] sm:$0xff]
    %v1259 = vld [vmem:[#allocation2 + $0x3f8] sm:$0xff]
    %v1260 = vld [vmem:[#allocation2 + $0x400] sm:$0xff]
    %v1261 = vld [vmem:[#allocation2 + $0x408] sm:$0xff]
    %v1262 = vld [vmem:[#allocation2 + $0x410] sm:$0xff]
    %v1263 = vld [vmem:[#allocation2 + $0x418] sm:$0xff]
    %v1264 = vld [vmem:[#allocation2 + $0x420] sm:$0xff]
    %v1265 = vld [vmem:[#allocation2 + $0x428] sm:$0xff]
    %v1266 = vld [vmem:[#allocation2 + $0x430] sm:$0xff]
    %v1267 = vld [vmem:[#allocation2 + $0x438] sm:$0xff]
    %v1268 = vld [vmem:[#allocation2 + $0x440] sm:$0xff]
    %v1269 = vld [vmem:[#allocation2 + $0x448] sm:$0xff]
    %v1270 = vld [vmem:[#allocation2 + $0x450] sm:$0xff]
    %v1271 = vld [vmem:[#allocation2 + $0x458] sm:$0xff]
    %v1272 = vld [vmem:[#allocation2 + $0x460] sm:$0xff]
    %v1273 = vld [vmem:[#allocation2 + $0x468] sm:$0xff]
    %v1274 = vld [vmem:[#allocation2 + $0x470] sm:$0xff]
    %v1275 = vld [vmem:[#allocation2 + $0x478] sm:$0xff]
    %v1276 = vld [vmem:[#allocation2 + $0x480] sm:$0xff]
    %v1277 = vld [vmem:[#allocation2 + $0x488] sm:$0xff]
    %v1278 = vld [vmem:[#allocation2 + $0x490] sm:$0xff]
    %v1279 = vld [vmem:[#allocation2 + $0x498] sm:$0xff]
    %v1280 = vld [vmem:[#allocation2 + $0x4a0] sm:$0xff]
    %v1281 = vld [vmem:[#allocation2 + $0x4a8] sm:$0xff]
    %v1282 = vld [vmem:[#allocation2 + $0x4b0] sm:$0xff]
    %v1283 = vld [vmem:[#allocation2 + $0x4b8] sm:$0xff]
    %v1284 = vld [vmem:[#allocation2 + $0x4c0] sm:$0xff]
    %v1285 = vld [vmem:[#allocation2 + $0x4c8] sm:$0xff]
    %v1286 = vld [vmem:[#allocation2 + $0x4d0] sm:$0xff]
    %v1287 = vld [vmem:[#allocation2 + $0x4d8] sm:$0xff]
    %v1288 = vld [vmem:[#allocation2 + $0x4e0] sm:$0xff]
    %v1289 = vld [vmem:[#allocation2 + $0x4e8] sm:$0xff]
    %v1290 = vld [vmem:[#allocation2 + $0x4f0] sm:$0xff]
    %v1291 = vld [vmem:[#allocation2 + $0x4f8] sm:$0xff]
    %v1292 = vld [vmem:[#allocation2 + $0x500] sm:$0xff]
    %v1293 = vld [vmem:[#allocation2 + $0x508] sm:$0xff]
    %v1294 = vld [vmem:[#allocation2 + $0x510] sm:$0xff]
    %v1295 = vld [vmem:[#allocation2 + $0x518] sm:$0xff]
    %v1296 = vld [vmem:[#allocation2 + $0x520] sm:$0xff]
    %v1297 = vld [vmem:[#allocation2 + $0x528] sm:$0xff]
    %v1298 = vld [vmem:[#allocation2 + $0x530] sm:$0xff]
    %v1299 = vld [vmem:[#allocation2 + $0x538] sm:$0xff]
    %v1300 = vld [vmem:[#allocation2 + $0x540] sm:$0xff]
    %v1301 = vld [vmem:[#allocation2 + $0x548] sm:$0xff]
    %v1302 = vld [vmem:[#allocation2 + $0x550] sm:$0xff]
    %v1303 = vld [vmem:[#allocation2 + $0x558] sm:$0xff]
    %v1304 = vld [vmem:[#allocation2 + $0x560] sm:$0xff]
    %v1305 = vld [vmem:[#allocation2 + $0x568] sm:$0xff]
    %v1306 = vld [vmem:[#allocation2 + $0x570] sm:$0xff]
    %v1307 = vld [vmem:[#allocation2 + $0x578] sm:$0xff]
    %v1308 = vld [vmem:[#allocation2 + $0x580] sm:$0xff]
    %v1309 = vld [vmem:[#allocation2 + $0x588] sm:$0xff]
    %v1310 = vld [vmem:[#allocation2 + $0x590] sm:$0xff]
    %v1311 = vld [vmem:[#allocation2 + $0x598] sm:$0xff]
    %v1312 = vld [vmem:[#allocation2 + $0x5a0] sm:$0xff]
    %v1313 = vld [vmem:[#allocation2 + $0x5a8] sm:$0xff]
    %v1314 = vld [vmem:[#allocation2 + $0x5b0] sm:$0xff]
    %v1315 = vld [vmem:[#allocation2 + $0x5b8] sm:$0xff]
    %v1316 = vld [vmem:[#allocation2 + $0x5c0] sm:$0xff]
    %v1317 = vld [vmem:[#allocation2 + $0x5c8] sm:$0xff]
    %v1318 = vld [vmem:[#allocation2 + $0x5d0] sm:$0xff]
    %v1319 = vld [vmem:[#allocation2 + $0x5d8] sm:$0xff]
    %v1320 = vld [vmem:[#allocation2 + $0x5e0] sm:$0xff]
    %v1321 = vld [vmem:[#allocation2 + $0x5e8] sm:$0xff]
    %v1322 = vld [vmem:[#allocation2 + $0x5f0] sm:$0xff]
    %v1323 = vld [vmem:[#allocation2 + $0x5f8] sm:$0xff]
    %v1324 = vld [vmem:[#allocation2 + $0x600] sm:$0xff]
    %v1325 = vld [vmem:[#allocation2 + $0x608] sm:$0xff]
    %v1326 = vld [vmem:[#allocation2 + $0x610] sm:$0xff]
    %v1327 = vld [vmem:[#allocation2 + $0x618] sm:$0xff]
    %v1328 = vld [vmem:[#allocation2 + $0x620] sm:$0xff]
    %v1329 = vld [vmem:[#allocation2 + $0x628] sm:$0xff]
    %v1330 = vld [vmem:[#allocation2 + $0x630] sm:$0xff]
    %v1331 = vld [vmem:[#allocation2 + $0x638] sm:$0xff]
    %v1332 = vld [vmem:[#allocation2 + $0x640] sm:$0xff]
    %v1333 = vld [vmem:[#allocation2 + $0x648] sm:$0xff]
    %v1334 = vld [vmem:[#allocation2 + $0x650] sm:$0xff]
    %v1335 = vld [vmem:[#allocation2 + $0x658] sm:$0xff]
    %v1336 = vld [vmem:[#allocation2 + $0x660] sm:$0xff]
    %v1337 = vld [vmem:[#allocation2 + $0x668] sm:$0xff]
    %v1338 = vld [vmem:[#allocation2 + $0x670] sm:$0xff]
    %v1339 = vld [vmem:[#allocation2 + $0x678] sm:$0xff]
    %v1340 = vld [vmem:[#allocation2 + $0x680] sm:$0xff]
    %v1341 = vld [vmem:[#allocation2 + $0x688] sm:$0xff]
    %v1342 = vld [vmem:[#allocation2 + $0x690] sm:$0xff]
    %v1343 = vld [vmem:[#allocation2 + $0x698] sm:$0xff]
    %v1344 = vld [vmem:[#allocation2 + $0x6a0] sm:$0xff]
    %v1345 = vld [vmem:[#allocation2 + $0x6a8] sm:$0xff]
    %v1346 = vld [vmem:[#allocation2 + $0x6b0] sm:$0xff]
    %v1347 = vld [vmem:[#allocation2 + $0x6b8] sm:$0xff]
    %v1348 = vld [vmem:[#allocation2 + $0x6c0] sm:$0xff]
    %v1349 = vld [vmem:[#allocation2 + $0x6c8] sm:$0xff]
    %v1350 = vld [vmem:[#allocation2 + $0x6d0] sm:$0xff]
    %v1351 = vld [vmem:[#allocation2 + $0x6d8] sm:$0xff]
    %v1352 = vld [vmem:[#allocation2 + $0x6e0] sm:$0xff]
    %v1353 = vld [vmem:[#allocation2 + $0x6e8] sm:$0xff]
    %v1354 = vld [vmem:[#allocation2 + $0x6f0] sm:$0xff]
    %v1355 = vld [vmem:[#allocation2 + $0x6f8] sm:$0xff]
    %v1356 = vld [vmem:[#allocation2 + $0x700] sm:$0xff]
    %v1357 = vld [vmem:[#allocation2 + $0x708] sm:$0xff]
    %v1358 = vld [vmem:[#allocation2 + $0x710] sm:$0xff]
    %v1359 = vld [vmem:[#allocation2 + $0x718] sm:$0xff]
    %v1360 = vld [vmem:[#allocation2 + $0x720] sm:$0xff]
    %v1361 = vld [vmem:[#allocation2 + $0x728] sm:$0xff]
    %v1362 = vld [vmem:[#allocation2 + $0x730] sm:$0xff]
    %v1363 = vld [vmem:[#allocation2 + $0x738] sm:$0xff]
    %v1364 = vld [vmem:[#allocation2 + $0x740] sm:$0xff]
    %v1365 = vld [vmem:[#allocation2 + $0x748] sm:$0xff]
    %v1366 = vld [vmem:[#allocation2 + $0x750] sm:$0xff]
    %v1367 = vld [vmem:[#allocation2 + $0x758] sm:$0xff]
    %v1368 = vld [vmem:[#allocation2 + $0x760] sm:$0xff]
    %v1369 = vld [vmem:[#allocation2 + $0x768] sm:$0xff]
    %v1370 = vld [vmem:[#allocation2 + $0x770] sm:$0xff]
    %v1371 = vld [vmem:[#allocation2 + $0x778] sm:$0xff]
    %v1372 = vld [vmem:[#allocation2 + $0x780] sm:$0xff]
    %v1373 = vld [vmem:[#allocation2 + $0x788] sm:$0xff]
    %v1374 = vld [vmem:[#allocation2 + $0x790] sm:$0xff]
    %v1375 = vld [vmem:[#allocation2 + $0x798] sm:$0xff]
    %v1376 = vld [vmem:[%s2 + $0x1d0] sm:$0xff]
    %v1377 = vld [vmem:[%s2 + $0x1d8] sm:$0xff]
    %v1378 = vld [vmem:[%s2 + $0x1e0] sm:$0xff]
    %v1379 = vld [vmem:[%s2 + $0x1e8] sm:$0xff]
    %v1380 = vld [vmem:[%s2 + $0x1f0] sm:$0xff]
    %v1381 = vld [vmem:[%s2 + $0x1f8] sm:$0xff]
    %v1382 = vld [vmem:[%s2 + $0x200] sm:$0xff]
    %v1383 = vld [vmem:[%s2 + $0x208] sm:$0xff]
    %v1384 = vld [vmem:[%s2 + $0x210] sm:$0xff]
    %v1385 = vld [vmem:[%s2 + $0x218] sm:$0xff]
    %v1386 = vld [vmem:[%s2 + $0x220] sm:$0xff]
    %v1387 = vld [vmem:[%s2 + $0x228] sm:$0xff]
    %v1388 = vld [vmem:[%s2 + $0x230] sm:$0xff]
    %v1389 = vld [vmem:[%s2 + $0x238] sm:$0xff]
    %v1390 = vld [vmem:[%s2 + $0x240] sm:$0xff]
    %v1391 = vld [vmem:[%s2 + $0x248] sm:$0xff]
    %v1392 = vld [vmem:[%s2 + $0x250] sm:$0xff]
    %v1393 = vld [vmem:[%s2 + $0x258] sm:$0xff]
    %v1394 = vld [vmem:[%s2 + $0x260] sm:$0xff]
    %v1395 = vld [vmem:[%s2 + $0x268] sm:$0xff]
    %v1396 = vld [vmem:[%s2 + $0x270] sm:$0xff]
    %v1397 = vld [vmem:[%s2 + $0x278] sm:$0xff]
    %v1398 = vld [vmem:[%s2 + $0x280] sm:$0xff]
    %v1399 = vld [vmem:[%s2 + $0x288] sm:$0xff]
    %v1400 = vld [vmem:[%s2 + $0x290] sm:$0xff]
    %v1401 = vld [vmem:[%s2 + $0x298] sm:$0xff]
    %v1402 = vld [vmem:[%s2 + $0x2a0] sm:$0xff]
    %v1403 = vld [vmem:[%s2 + $0x2a8] sm:$0xff]
    %v1404 = vld [vmem:[%s2 + $0x2b0] sm:$0xff]
    %v1405 = vld [vmem:[%s2 + $0x2b8] sm:$0xff]
    %v1406 = vld [vmem:[%s2 + $0x2c0] sm:$0xff]
    %v1407 = vld [vmem:[%s2 + $0x2c8] sm:$0xff]
    %v1408 = vld [vmem:[%s2 + $0x2d0] sm:$0xff]
    %v1409 = vld [vmem:[%s2 + $0x2d8] sm:$0xff]
    %v1410 = vld [vmem:[%s2 + $0x2e0] sm:$0xff]
    %v1411 = vld [vmem:[%s2 + $0x2e8] sm:$0xff]
    %v1412 = vld [vmem:[%s2 + $0x2f0] sm:$0xff]
    %v1413 = vld [vmem:[%s2 + $0x2f8] sm:$0xff]
    %v1414 = vld [vmem:[%s2 + $0x300] sm:$0xff]
    %v1415 = vld [vmem:[%s2 + $0x308] sm:$0xff]
    %v1416 = vld [vmem:[%s2 + $0x310] sm:$0xff]
    %v1417 = vld [vmem:[%s2 + $0x318] sm:$0xff]
    %v1418 = vld [vmem:[%s2 + $0x320] sm:$0xff]
    %v1419 = vld [vmem:[%s2 + $0x328] sm:$0xff]
    %v1420 = vld [vmem:[%s2 + $0x330] sm:$0xff]
    %v1421 = vld [vmem:[%s2 + $0x338] sm:$0xff]
    %v1422 = vld [vmem:[%s2 + $0x340] sm:$0xff]
    %v1423 = vld [vmem:[%s2 + $0x348] sm:$0xff]
    %v1424 = vld [vmem:[%s2 + $0x350] sm:$0xff]
    %v1425 = vld [vmem:[%s2 + $0x358] sm:$0xff]
    %v1426 = vld [vmem:[%s2 + $0x360] sm:$0xff]
    %v1427 = vld [vmem:[%s2 + $0x368] sm:$0xff]
    %v1428 = vld [vmem:[%s2 + $0x370] sm:$0xff]
    %v1429 = vld [vmem:[%s2 + $0x378] sm:$0xff]
    %v1430 = vld [vmem:[%s2 + $0x380] sm:$0xff]
    %v1431 = vld [vmem:[%s2 + $0x388] sm:$0xff]
    %v1432 = vld [vmem:[%s2 + $0x390] sm:$0xff]
    %v1433 = vld [vmem:[%s2 + $0x398] sm:$0xff]
    %v1434 = vld [vmem:[%s2 + $0x3a0] sm:$0xff]
    %v1435 = vld [vmem:[%s2 + $0x3a8] sm:$0xff]
    %v1436 = vld [vmem:[%s2 + $0x3b0] sm:$0xff]
    %v1437 = vld [vmem:[%s2 + $0x3b8] sm:$0xff]
    %v1438 = vld [vmem:[%s2 + $0x3c0] sm:$0xff]
    %v1439 = vld [vmem:[%s2 + $0x3c8] sm:$0xff]
    %1441 = vset.pattern.permute.xlu0 0
    %1442 = vperm.xlu0 %1441, %v1376
    %v1443 = vpop.permute.xlu0 %1442
    %1446 = vset.pattern.permute.xlu0 0
    %1447 = vperm.xlu0 %1446, %v1377
    %v1448 = vpop.permute.xlu0 %1447
    %1451 = vset.pattern.permute.xlu0 0
    %1452 = vperm.xlu0 %1451, %v1378
    %v1453 = vpop.permute.xlu0 %1452
    %1456 = vset.pattern.permute.xlu0 0
    %1457 = vperm.xlu0 %1456, %v1379
    %v1458 = vpop.permute.xlu0 %1457
    %1461 = vset.pattern.permute.xlu0 0
    %1462 = vperm.xlu0 %1461, %v1380
    %v1463 = vpop.permute.xlu0 %1462
    %1466 = vset.pattern.permute.xlu0 0
    %1467 = vperm.xlu0 %1466, %v1381
    %v1468 = vpop.permute.xlu0 %1467
    %1471 = vset.pattern.permute.xlu0 0
    %1472 = vperm.xlu0 %1471, %v1382
    %v1473 = vpop.permute.xlu0 %1472
    %1476 = vset.pattern.permute.xlu0 0
    %1477 = vperm.xlu0 %1476, %v1383
    %v1478 = vpop.permute.xlu0 %1477
    %1481 = vset.pattern.permute.xlu0 0
    %1482 = vperm.xlu0 %1481, %v1384
    %v1483 = vpop.permute.xlu0 %1482
    %1486 = vset.pattern.permute.xlu0 0
    %1487 = vperm.xlu0 %1486, %v1385
    %v1488 = vpop.permute.xlu0 %1487
    %1491 = vset.pattern.permute.xlu0 0
    %1492 = vperm.xlu0 %1491, %v1386
    %v1493 = vpop.permute.xlu0 %1492
    %1496 = vset.pattern.permute.xlu0 0
    %1497 = vperm.xlu0 %1496, %v1387
    %v1498 = vpop.permute.xlu0 %1497
    %1501 = vset.pattern.permute.xlu0 0
    %1502 = vperm.xlu0 %1501, %v1388
    %v1503 = vpop.permute.xlu0 %1502
    %1506 = vset.pattern.permute.xlu0 0
    %1507 = vperm.xlu0 %1506, %v1389
    %v1508 = vpop.permute.xlu0 %1507
    %1511 = vset.pattern.permute.xlu0 0
    %1512 = vperm.xlu0 %1511, %v1390
    %v1513 = vpop.permute.xlu0 %1512
    %1516 = vset.pattern.permute.xlu0 0
    %1517 = vperm.xlu0 %1516, %v1391
    %v1518 = vpop.permute.xlu0 %1517
    %1521 = vset.pattern.permute.xlu0 0
    %1522 = vperm.xlu0 %1521, %v1392
    %v1523 = vpop.permute.xlu0 %1522
    %1526 = vset.pattern.permute.xlu0 0
    %1527 = vperm.xlu0 %1526, %v1393
    %v1528 = vpop.permute.xlu0 %1527
    %1531 = vset.pattern.permute.xlu0 0
    %1532 = vperm.xlu0 %1531, %v1394
    %v1533 = vpop.permute.xlu0 %1532
    %1536 = vset.pattern.permute.xlu0 0
    %1537 = vperm.xlu0 %1536, %v1395
    %v1538 = vpop.permute.xlu0 %1537
    %1541 = vset.pattern.permute.xlu0 0
    %1542 = vperm.xlu0 %1541, %v1396
    %v1543 = vpop.permute.xlu0 %1542
    %1546 = vset.pattern.permute.xlu0 0
    %1547 = vperm.xlu0 %1546, %v1397
    %v1548 = vpop.permute.xlu0 %1547
    %1551 = vset.pattern.permute.xlu0 0
    %1552 = vperm.xlu0 %1551, %v1398
    %v1553 = vpop.permute.xlu0 %1552
    %1556 = vset.pattern.permute.xlu0 0
    %1557 = vperm.xlu0 %1556, %v1399
    %v1558 = vpop.permute.xlu0 %1557
    %1561 = vset.pattern.permute.xlu0 0
    %1562 = vperm.xlu0 %1561, %v1400
    %v1563 = vpop.permute.xlu0 %1562
    %1566 = vset.pattern.permute.xlu0 0
    %1567 = vperm.xlu0 %1566, %v1401
    %v1568 = vpop.permute.xlu0 %1567
    %1571 = vset.pattern.permute.xlu0 0
    %1572 = vperm.xlu0 %1571, %v1402
    %v1573 = vpop.permute.xlu0 %1572
    %1576 = vset.pattern.permute.xlu0 0
    %1577 = vperm.xlu0 %1576, %v1403
    %v1578 = vpop.permute.xlu0 %1577
    %1581 = vset.pattern.permute.xlu0 0
    %1582 = vperm.xlu0 %1581, %v1404
    %v1583 = vpop.permute.xlu0 %1582
    %1586 = vset.pattern.permute.xlu0 0
    %1587 = vperm.xlu0 %1586, %v1405
    %v1588 = vpop.permute.xlu0 %1587
    %1591 = vset.pattern.permute.xlu0 0
    %1592 = vperm.xlu0 %1591, %v1406
    %v1593 = vpop.permute.xlu0 %1592
    %1596 = vset.pattern.permute.xlu0 0
    %1597 = vperm.xlu0 %1596, %v1407
    %v1598 = vpop.permute.xlu0 %1597
    %1601 = vset.pattern.permute.xlu0 0
    %1602 = vperm.xlu0 %1601, %v1408
    %v1603 = vpop.permute.xlu0 %1602
    %1606 = vset.pattern.permute.xlu0 0
    %1607 = vperm.xlu0 %1606, %v1409
    %v1608 = vpop.permute.xlu0 %1607
    %1611 = vset.pattern.permute.xlu0 0
    %1612 = vperm.xlu0 %1611, %v1410
    %v1613 = vpop.permute.xlu0 %1612
    %1616 = vset.pattern.permute.xlu0 0
    %1617 = vperm.xlu0 %1616, %v1411
    %v1618 = vpop.permute.xlu0 %1617
    %1621 = vset.pattern.permute.xlu0 0
    %1622 = vperm.xlu0 %1621, %v1412
    %v1623 = vpop.permute.xlu0 %1622
    %1626 = vset.pattern.permute.xlu0 0
    %1627 = vperm.xlu0 %1626, %v1413
    %v1628 = vpop.permute.xlu0 %1627
    %1631 = vset.pattern.permute.xlu0 0
    %1632 = vperm.xlu0 %1631, %v1414
    %v1633 = vpop.permute.xlu0 %1632
    %1636 = vset.pattern.permute.xlu0 0
    %1637 = vperm.xlu0 %1636, %v1415
    %v1638 = vpop.permute.xlu0 %1637
    %1641 = vset.pattern.permute.xlu0 0
    %1642 = vperm.xlu0 %1641, %v1416
    %v1643 = vpop.permute.xlu0 %1642
    %1646 = vset.pattern.permute.xlu0 0
    %1647 = vperm.xlu0 %1646, %v1417
    %v1648 = vpop.permute.xlu0 %1647
    %1651 = vset.pattern.permute.xlu0 0
    %1652 = vperm.xlu0 %1651, %v1418
    %v1653 = vpop.permute.xlu0 %1652
    %1656 = vset.pattern.permute.xlu0 0
    %1657 = vperm.xlu0 %1656, %v1419
    %v1658 = vpop.permute.xlu0 %1657
    %1661 = vset.pattern.permute.xlu0 0
    %1662 = vperm.xlu0 %1661, %v1420
    %v1663 = vpop.permute.xlu0 %1662
    %1666 = vset.pattern.permute.xlu0 0
    %1667 = vperm.xlu0 %1666, %v1421
    %v1668 = vpop.permute.xlu0 %1667
    %1671 = vset.pattern.permute.xlu0 0
    %1672 = vperm.xlu0 %1671, %v1422
    %v1673 = vpop.permute.xlu0 %1672
    %1676 = vset.pattern.permute.xlu0 0
    %1677 = vperm.xlu0 %1676, %v1423
    %v1678 = vpop.permute.xlu0 %1677
    %1681 = vset.pattern.permute.xlu0 0
    %1682 = vperm.xlu0 %1681, %v1424
    %v1683 = vpop.permute.xlu0 %1682
    %1686 = vset.pattern.permute.xlu0 0
    %1687 = vperm.xlu0 %1686, %v1425
    %v1688 = vpop.permute.xlu0 %1687
    %1691 = vset.pattern.permute.xlu0 0
    %1692 = vperm.xlu0 %1691, %v1426
    %v1693 = vpop.permute.xlu0 %1692
    %1696 = vset.pattern.permute.xlu0 0
    %1697 = vperm.xlu0 %1696, %v1427
    %v1698 = vpop.permute.xlu0 %1697
    %1701 = vset.pattern.permute.xlu0 0
    %1702 = vperm.xlu0 %1701, %v1428
    %v1703 = vpop.permute.xlu0 %1702
    %1706 = vset.pattern.permute.xlu0 0
    %1707 = vperm.xlu0 %1706, %v1429
    %v1708 = vpop.permute.xlu0 %1707
    %1711 = vset.pattern.permute.xlu0 0
    %1712 = vperm.xlu0 %1711, %v1430
    %v1713 = vpop.permute.xlu0 %1712
    %1716 = vset.pattern.permute.xlu0 0
    %1717 = vperm.xlu0 %1716, %v1431
    %v1718 = vpop.permute.xlu0 %1717
    %1721 = vset.pattern.permute.xlu0 0
    %1722 = vperm.xlu0 %1721, %v1432
    %v1723 = vpop.permute.xlu0 %1722
    %1726 = vset.pattern.permute.xlu0 0
    %1727 = vperm.xlu0 %1726, %v1433
    %v1728 = vpop.permute.xlu0 %1727
    %1731 = vset.pattern.permute.xlu0 0
    %1732 = vperm.xlu0 %1731, %v1434
    %v1733 = vpop.permute.xlu0 %1732
    %1736 = vset.pattern.permute.xlu0 0
    %1737 = vperm.xlu0 %1736, %v1435
    %v1738 = vpop.permute.xlu0 %1737
    %1741 = vset.pattern.permute.xlu0 0
    %1742 = vperm.xlu0 %1741, %v1436
    %v1743 = vpop.permute.xlu0 %1742
    %1746 = vset.pattern.permute.xlu0 0
    %1747 = vperm.xlu0 %1746, %v1437
    %v1748 = vpop.permute.xlu0 %1747
    %1751 = vset.pattern.permute.xlu0 0
    %1752 = vperm.xlu0 %1751, %v1438
    %v1753 = vpop.permute.xlu0 %1752
    %1756 = vset.pattern.permute.xlu0 0
    %1757 = vperm.xlu0 %1756, %v1439
    %v1758 = vpop.permute.xlu0 %1757
    %1760 = vmatprep.subr.mxu0 %v1185
    %1761 = vmatpush1.msra.mxu0 %v1184
    %1762 = vmatprep.subr.mxu0 %v1187
    %1763 = vmatpush1.msra.mxu0 %v1186
    %1764 = vmatprep.subr.mxu0 %v1189
    %1765 = vmatpush1.msra.mxu0 %v1188
    %1766 = vmatprep.subr.mxu0 %v1191
    %1767 = vmatpush1.msra.mxu0 %v1190
    %1768 = vmatprep.subr.mxu0 %v1193
    %1769 = vmatpush1.msra.mxu0 %v1192
    %1770 = vmatprep.subr.mxu0 %v1195
    %1771 = vmatpush1.msra.mxu0 %v1194
    %1772 = vmatprep.subr.mxu0 %v1197
    %1773 = vmatpush1.msra.mxu0 %v1196
    %1774 = vmatprep.subr.mxu0 %v1199
    %1775 = vmatpush1.msra.mxu0 %v1198
    %1776 = vmatprep.subr.mxu0 %v1201
    %1777 = vmatpush1.msra.mxu0 %v1200
    %1778 = vmatprep.subr.mxu0 %v1203
    %1779 = vmatpush1.msra.mxu0 %v1202
    %1780 = vmatprep.subr.mxu0 %v1205
    %1781 = vmatpush1.msra.mxu0 %v1204
    %1782 = vmatprep.subr.mxu0 %v1207
    %1783 = vmatpush1.msra.mxu0 %v1206
    %1784 = vmatprep.subr.mxu0 %v1209
    %1785 = vmatpush1.msra.mxu0 %v1208
    %1786 = vmatprep.subr.mxu0 %v1211
    %1787 = vmatpush1.msra.mxu0 %v1210
    %1788 = vmatprep.subr.mxu0 %v1213
    %1789 = vmatpush1.msra.mxu0 %v1212
    %1790 = vmatprep.subr.mxu0 %v1215
    %1791 = vmatpush1.msra.mxu0 %v1214
    %1792 = vmatprep.subr.mxu0 %v1217
    %1793 = vmatpush1.msra.mxu0 %v1216
    %1794 = vmatprep.subr.mxu0 %v1219
    %1795 = vmatpush1.msra.mxu0 %v1218
    %1796 = vmatprep.subr.mxu0 %v1221
    %1797 = vmatpush1.msra.mxu0 %v1220
    %1798 = vmatprep.subr.mxu0 %v1223
    %1799 = vmatpush1.msra.mxu0 %v1222
    %1800 = vmatprep.subr.mxu0 %v1225
    %1801 = vmatpush1.msra.mxu0 %v1224
    %1802 = vmatprep.subr.mxu0 %v1227
    %1803 = vmatpush1.msra.mxu0 %v1226
    %1804 = vmatprep.subr.mxu0 %v1229
    %1805 = vmatpush1.msra.mxu0 %v1228
    %1806 = vmatprep.subr.mxu0 %v1231
    %1807 = vmatpush1.msra.mxu0 %v1230
    %1808 = vmatprep.subr.mxu0 %v1233
    %1809 = vmatpush1.msra.mxu0 %v1232
    %1810 = vmatprep.subr.mxu0 %v1235
    %1811 = vmatpush1.msra.mxu0 %v1234
    %1812 = vmatprep.subr.mxu0 %v1237
    %1813 = vmatpush1.msra.mxu0 %v1236
    %1814 = vmatprep.subr.mxu0 %v1239
    %1815 = vmatpush1.msra.mxu0 %v1238
    %1816 = vmatprep.subr.mxu0 %v1241
    %1817 = vmatpush1.msra.mxu0 %v1240
    %1818 = vmatprep.subr.mxu0 %v1243
    %1819 = vmatpush1.msra.mxu0 %v1242
    %1820 = vmatprep.subr.mxu0 %v1245
    %1821 = vmatpush1.msra.mxu0 %v1244
    %1822 = vmatprep.subr.mxu0 %v1247
    %1823 = vmatpush1.msra.mxu0 %v1246
    %1824 = vmatprep.mubr.f32.mxu0 %v1249
    %1825 = vmatmul.mubr.f32.gmra.mrb[0].mxu0 %v1248
    %v1826 = vpop.f32.mrb[0].mxu0
    %v1827 = vadd.f32 %v1443, %v1826
    %v1828 = vpop.f32.mrb[0].mxu0
    %v1829 = vadd.f32 %v1443, %v1828
    %1830 = vmatprep.mubr.f32.mxu0 %v1251
    %1831 = vmatmul.mubr.f32.gmra.mrb[0].mxu0 %v1250
    %v1832 = vpop.f32.mrb[0].mxu0
    %v1833 = vadd.f32 %v1448, %v1832
    %v1834 = vpop.f32.mrb[0].mxu0
    %v1835 = vadd.f32 %v1448, %v1834
    %1836 = vmatprep.mubr.f32.mxu0 %v1253
    %1837 = vmatmul.mubr.f32.gmra.mrb[0].mxu0 %v1252
    %v1838 = vpop.f32.mrb[0].mxu0
    %v1839 = vadd.f32 %v1453, %v1838
    %v1840 = vpop.f32.mrb[0].mxu0
    %v1841 = vadd.f32 %v1453, %v1840
    %1842 = vmatprep.mubr.f32.mxu0 %v1255
    %1843 = vmatmul.mubr.f32.gmra.mrb[0].mxu0 %v1254
    %v1844 = vpop.f32.mrb[0].mxu0
    %v1845 = vadd.f32 %v1458, %v1844
    %v1846 = vpop.f32.mrb[0].mxu0
    %v1847 = vadd.f32 %v1458, %v1846
    %1848 = vmatprep.mubr.f32.mxu0 %v1257
    %1849 = vmatmul.mubr.f32.gmra.mrb[0].mxu0 %v1256
    %v1850 = vpop.f32.mrb[0].mxu0
    %v1851 = vadd.f32 %v1463, %v1850
    %v1852 = vpop.f32.mrb[0].mxu0
    %v1853 = vadd.f32 %v1463, %v1852
    %1854 = vmatprep.mubr.f32.mxu0 %v1259
    %1855 = vmatmul.mubr.f32.gmra.mrb[0].mxu0 %v1258
    %v1856 = vpop.f32.mrb[0].mxu0
    %v1857 = vadd.f32 %v1468, %v1856
    %v1858 = vpop.f32.mrb[0].mxu0
    %v1859 = vadd.f32 %v1468, %v1858
    %1860 = vmatprep.mubr.f32.mxu0 %v1261
    %1861 = vmatmul.mubr.f32.gmra.mrb[0].mxu0 %v1260
    %v1862 = vpop.f32.mrb[0].mxu0
    %v1863 = vadd.f32 %v1473, %v1862
    %v1864 = vpop.f32.mrb[0].mxu0
    %v1865 = vadd.f32 %v1473, %v1864
    %1866 = vmatprep.mubr.f32.mxu0 %v1263
    %1867 = vmatmul.mubr.f32.gmra.mrb[0].mxu0 %v1262
    %v1868 = vpop.f32.mrb[0].mxu0
    %v1869 = vadd.f32 %v1478, %v1868
    %v1870 = vpop.f32.mrb[0].mxu0
    %v1871 = vadd.f32 %v1478, %v1870
    %1872 = vmatprep.mubr.f32.mxu0 %v1265
    %1873 = vmatmul.mubr.f32.gmra.mrb[0].mxu0 %v1264
    %v1874 = vpop.f32.mrb[0].mxu0
    %v1875 = vadd.f32 %v1483, %v1874
    %v1876 = vpop.f32.mrb[0].mxu0
    %v1877 = vadd.f32 %v1483, %v1876
    %1878 = vmatprep.mubr.f32.mxu0 %v1267
    %1879 = vmatmul.mubr.f32.gmra.mrb[0].mxu0 %v1266
    %v1880 = vpop.f32.mrb[0].mxu0
    %v1881 = vadd.f32 %v1488, %v1880
    %v1882 = vpop.f32.mrb[0].mxu0
    %v1883 = vadd.f32 %v1488, %v1882
    %1884 = vmatprep.mubr.f32.mxu0 %v1269
    %1885 = vmatmul.mubr.f32.gmra.mrb[0].mxu0 %v1268
    %v1886 = vpop.f32.mrb[0].mxu0
    %v1887 = vadd.f32 %v1493, %v1886
    %v1888 = vpop.f32.mrb[0].mxu0
    %v1889 = vadd.f32 %v1493, %v1888
    %1890 = vmatprep.mubr.f32.mxu0 %v1271
    %1891 = vmatmul.mubr.f32.gmra.mrb[0].mxu0 %v1270
    %v1892 = vpop.f32.mrb[0].mxu0
    %v1893 = vadd.f32 %v1498, %v1892
    %v1894 = vpop.f32.mrb[0].mxu0
    %v1895 = vadd.f32 %v1498, %v1894
    %1896 = vmatprep.mubr.f32.mxu0 %v1273
    %1897 = vmatmul.mubr.f32.gmra.mrb[0].mxu0 %v1272
    %v1898 = vpop.f32.mrb[0].mxu0
    %v1899 = vadd.f32 %v1503, %v1898
    %v1900 = vpop.f32.mrb[0].mxu0
    %v1901 = vadd.f32 %v1503, %v1900
    %1902 = vmatprep.mubr.f32.mxu0 %v1275
    %1903 = vmatmul.mubr.f32.gmra.mrb[0].mxu0 %v1274
    %v1904 = vpop.f32.mrb[0].mxu0
    %v1905 = vadd.f32 %v1508, %v1904
    %v1906 = vpop.f32.mrb[0].mxu0
    %v1907 = vadd.f32 %v1508, %v1906
    %1908 = vmatprep.mubr.f32.mxu0 %v1277
    %1909 = vmatmul.mubr.f32.gmra.mrb[0].mxu0 %v1276
    %v1910 = vpop.f32.mrb[0].mxu0
    %v1911 = vadd.f32 %v1513, %v1910
    %v1912 = vpop.f32.mrb[0].mxu0
    %v1913 = vadd.f32 %v1513, %v1912
    %1914 = vmatprep.mubr.f32.mxu0 %v1279
    %1915 = vmatmul.mubr.f32.gmra.mrb[0].mxu0 %v1278
    %v1916 = vpop.f32.mrb[0].mxu0
    %v1917 = vadd.f32 %v1518, %v1916
    %v1918 = vpop.f32.mrb[0].mxu0
    %v1919 = vadd.f32 %v1518, %v1918
    %1920 = vmatprep.mubr.f32.mxu0 %v1281
    %1921 = vmatmul.mubr.f32.gmra.mrb[0].mxu0 %v1280
    %v1922 = vpop.f32.mrb[0].mxu0
    %v1923 = vadd.f32 %v1523, %v1922
    %v1924 = vpop.f32.mrb[0].mxu0
    %v1925 = vadd.f32 %v1523, %v1924
    %1926 = vmatprep.mubr.f32.mxu0 %v1283
    %1927 = vmatmul.mubr.f32.gmra.mrb[0].mxu0 %v1282
    %v1928 = vpop.f32.mrb[0].mxu0
    %v1929 = vadd.f32 %v1528, %v1928
    %v1930 = vpop.f32.mrb[0].mxu0
    %v1931 = vadd.f32 %v1528, %v1930
    %1932 = vmatprep.mubr.f32.mxu0 %v1285
    %1933 = vmatmul.mubr.f32.gmra.mrb[0].mxu0 %v1284
    %v1934 = vpop.f32.mrb[0].mxu0
    %v1935 = vadd.f32 %v1533, %v1934
    %v1936 = vpop.f32.mrb[0].mxu0
    %v1937 = vadd.f32 %v1533, %v1936
    %1938 = vmatprep.mubr.f32.mxu0 %v1287
    %1939 = vmatmul.mubr.f32.gmra.mrb[0].mxu0 %v1286
    %v1940 = vpop.f32.mrb[0].mxu0
    %v1941 = vadd.f32 %v1538, %v1940
    %v1942 = vpop.f32.mrb[0].mxu0
    %v1943 = vadd.f32 %v1538, %v1942
    %1944 = vmatprep.mubr.f32.mxu0 %v1289
    %1945 = vmatmul.mubr.f32.gmra.mrb[0].mxu0 %v1288
    %v1946 = vpop.f32.mrb[0].mxu0
    %v1947 = vadd.f32 %v1543, %v1946
    %v1948 = vpop.f32.mrb[0].mxu0
    %v1949 = vadd.f32 %v1543, %v1948
    %1950 = vmatprep.mubr.f32.mxu0 %v1291
    %1951 = vmatmul.mubr.f32.gmra.mrb[0].mxu0 %v1290
    %v1952 = vpop.f32.mrb[0].mxu0
    %v1953 = vadd.f32 %v1548, %v1952
    %v1954 = vpop.f32.mrb[0].mxu0
    %v1955 = vadd.f32 %v1548, %v1954
    %1956 = vmatprep.mubr.f32.mxu0 %v1293
    %1957 = vmatmul.mubr.f32.gmra.mrb[0].mxu0 %v1292
    %v1958 = vpop.f32.mrb[0].mxu0
    %v1959 = vadd.f32 %v1553, %v1958
    %v1960 = vpop.f32.mrb[0].mxu0
    %v1961 = vadd.f32 %v1553, %v1960
    %1962 = vmatprep.mubr.f32.mxu0 %v1295
    %1963 = vmatmul.mubr.f32.gmra.mrb[0].mxu0 %v1294
    %v1964 = vpop.f32.mrb[0].mxu0
    %v1965 = vadd.f32 %v1558, %v1964
    %v1966 = vpop.f32.mrb[0].mxu0
    %v1967 = vadd.f32 %v1558, %v1966
    %1968 = vmatprep.mubr.f32.mxu0 %v1297
    %1969 = vmatmul.mubr.f32.gmra.mrb[0].mxu0 %v1296
    %v1970 = vpop.f32.mrb[0].mxu0
    %v1971 = vadd.f32 %v1563, %v1970
    %v1972 = vpop.f32.mrb[0].mxu0
    %v1973 = vadd.f32 %v1563, %v1972
    %1974 = vmatprep.mubr.f32.mxu0 %v1299
    %1975 = vmatmul.mubr.f32.gmra.mrb[0].mxu0 %v1298
    %v1976 = vpop.f32.mrb[0].mxu0
    %v1977 = vadd.f32 %v1568, %v1976
    %v1978 = vpop.f32.mrb[0].mxu0
    %v1979 = vadd.f32 %v1568, %v1978
    %1980 = vmatprep.mubr.f32.mxu0 %v1301
    %1981 = vmatmul.mubr.f32.gmra.mrb[0].mxu0 %v1300
    %v1982 = vpop.f32.mrb[0].mxu0
    %v1983 = vadd.f32 %v1573, %v1982
    %v1984 = vpop.f32.mrb[0].mxu0
    %v1985 = vadd.f32 %v1573, %v1984
    %1986 = vmatprep.mubr.f32.mxu0 %v1303
    %1987 = vmatmul.mubr.f32.gmra.mrb[0].mxu0 %v1302
    %v1988 = vpop.f32.mrb[0].mxu0
    %v1989 = vadd.f32 %v1578, %v1988
    %v1990 = vpop.f32.mrb[0].mxu0
    %v1991 = vadd.f32 %v1578, %v1990
    %1992 = vmatprep.mubr.f32.mxu0 %v1305
    %1993 = vmatmul.mubr.f32.gmra.mrb[0].mxu0 %v1304
    %v1994 = vpop.f32.mrb[0].mxu0
    %v1995 = vadd.f32 %v1583, %v1994
    %v1996 = vpop.f32.mrb[0].mxu0
    %v1997 = vadd.f32 %v1583, %v1996
    %1998 = vmatprep.mubr.f32.mxu0 %v1307
    %1999 = vmatmul.mubr.f32.gmra.mrb[0].mxu0 %v1306
    %v2000 = vpop.f32.mrb[0].mxu0
    %v2001 = vadd.f32 %v1588, %v2000
    %v2002 = vpop.f32.mrb[0].mxu0
    %v2003 = vadd.f32 %v1588, %v2002
    %2004 = vmatprep.mubr.f32.mxu0 %v1309
    %2005 = vmatmul.mubr.f32.gmra.mrb[0].mxu0 %v1308
    %v2006 = vpop.f32.mrb[0].mxu0
    %v2007 = vadd.f32 %v1593, %v2006
    %v2008 = vpop.f32.mrb[0].mxu0
    %v2009 = vadd.f32 %v1593, %v2008
    %2010 = vmatprep.mubr.f32.mxu0 %v1311
    %2011 = vmatmul.mubr.f32.gmra.mrb[0].mxu0 %v1310
    %v2012 = vpop.f32.mrb[0].mxu0
    %v2013 = vadd.f32 %v1598, %v2012
    %v2014 = vpop.f32.mrb[0].mxu0
    %v2015 = vadd.f32 %v1598, %v2014
    %2016 = vmatprep.mubr.f32.mxu0 %v1313
    %2017 = vmatmul.mubr.f32.gmra.mrb[0].mxu0 %v1312
    %v2018 = vpop.f32.mrb[0].mxu0
    %v2019 = vadd.f32 %v1603, %v2018
    %v2020 = vpop.f32.mrb[0].mxu0
    %v2021 = vadd.f32 %v1603, %v2020
    %2022 = vmatprep.mubr.f32.mxu0 %v1315
    %2023 = vmatmul.mubr.f32.gmra.mrb[0].mxu0 %v1314
    %v2024 = vpop.f32.mrb[0].mxu0
    %v2025 = vadd.f32 %v1608, %v2024
    %v2026 = vpop.f32.mrb[0].mxu0
    %v2027 = vadd.f32 %v1608, %v2026
    %2028 = vmatprep.mubr.f32.mxu0 %v1317
    %2029 = vmatmul.mubr.f32.gmra.mrb[0].mxu0 %v1316
    %v2030 = vpop.f32.mrb[0].mxu0
    %v2031 = vadd.f32 %v1613, %v2030
    %v2032 = vpop.f32.mrb[0].mxu0
    %v2033 = vadd.f32 %v1613, %v2032
    %2034 = vmatprep.mubr.f32.mxu0 %v1319
    %2035 = vmatmul.mubr.f32.gmra.mrb[0].mxu0 %v1318
    %v2036 = vpop.f32.mrb[0].mxu0
    %v2037 = vadd.f32 %v1618, %v2036
    %v2038 = vpop.f32.mrb[0].mxu0
    %v2039 = vadd.f32 %v1618, %v2038
    %2040 = vmatprep.mubr.f32.mxu0 %v1321
    %2041 = vmatmul.mubr.f32.gmra.mrb[0].mxu0 %v1320
    %v2042 = vpop.f32.mrb[0].mxu0
    %v2043 = vadd.f32 %v1623, %v2042
    %v2044 = vpop.f32.mrb[0].mxu0
    %v2045 = vadd.f32 %v1623, %v2044
    %2046 = vmatprep.mubr.f32.mxu0 %v1323
    %2047 = vmatmul.mubr.f32.gmra.mrb[0].mxu0 %v1322
    %v2048 = vpop.f32.mrb[0].mxu0
    %v2049 = vadd.f32 %v1628, %v2048
    %v2050 = vpop.f32.mrb[0].mxu0
    %v2051 = vadd.f32 %v1628, %v2050
    %2052 = vmatprep.mubr.f32.mxu0 %v1325
    %2053 = vmatmul.mubr.f32.gmra.mrb[0].mxu0 %v1324
    %v2054 = vpop.f32.mrb[0].mxu0
    %v2055 = vadd.f32 %v1633, %v2054
    %v2056 = vpop.f32.mrb[0].mxu0
    %v2057 = vadd.f32 %v1633, %v2056
    %2058 = vmatprep.mubr.f32.mxu0 %v1327
    %2059 = vmatmul.mubr.f32.gmra.mrb[0].mxu0 %v1326
    %v2060 = vpop.f32.mrb[0].mxu0
    %v2061 = vadd.f32 %v1638, %v2060
    %v2062 = vpop.f32.mrb[0].mxu0
    %v2063 = vadd.f32 %v1638, %v2062
    %2064 = vmatprep.mubr.f32.mxu0 %v1329
    %2065 = vmatmul.mubr.f32.gmra.mrb[0].mxu0 %v1328
    %v2066 = vpop.f32.mrb[0].mxu0
    %v2067 = vadd.f32 %v1643, %v2066
    %v2068 = vpop.f32.mrb[0].mxu0
    %v2069 = vadd.f32 %v1643, %v2068
    %2070 = vmatprep.mubr.f32.mxu0 %v1331
    %2071 = vmatmul.mubr.f32.gmra.mrb[0].mxu0 %v1330
    %v2072 = vpop.f32.mrb[0].mxu0
    %v2073 = vadd.f32 %v1648, %v2072
    %v2074 = vpop.f32.mrb[0].mxu0
    %v2075 = vadd.f32 %v1648, %v2074
    %2076 = vmatprep.mubr.f32.mxu0 %v1333
    %2077 = vmatmul.mubr.f32.gmra.mrb[0].mxu0 %v1332
    %v2078 = vpop.f32.mrb[0].mxu0
    %v2079 = vadd.f32 %v1653, %v2078
    %v2080 = vpop.f32.mrb[0].mxu0
    %v2081 = vadd.f32 %v1653, %v2080
    %2082 = vmatprep.mubr.f32.mxu0 %v1335
    %2083 = vmatmul.mubr.f32.gmra.mrb[0].mxu0 %v1334
    %v2084 = vpop.f32.mrb[0].mxu0
    %v2085 = vadd.f32 %v1658, %v2084
    %v2086 = vpop.f32.mrb[0].mxu0
    %v2087 = vadd.f32 %v1658, %v2086
    %2088 = vmatprep.mubr.f32.mxu0 %v1337
    %2089 = vmatmul.mubr.f32.gmra.mrb[0].mxu0 %v1336
    %v2090 = vpop.f32.mrb[0].mxu0
    %v2091 = vadd.f32 %v1663, %v2090
    %v2092 = vpop.f32.mrb[0].mxu0
    %v2093 = vadd.f32 %v1663, %v2092
    %2094 = vmatprep.mubr.f32.mxu0 %v1339
    %2095 = vmatmul.mubr.f32.gmra.mrb[0].mxu0 %v1338
    %v2096 = vpop.f32.mrb[0].mxu0
    %v2097 = vadd.f32 %v1668, %v2096
    %v2098 = vpop.f32.mrb[0].mxu0
    %v2099 = vadd.f32 %v1668, %v2098
    %2100 = vmatprep.mubr.f32.mxu0 %v1341
    %2101 = vmatmul.mubr.f32.gmra.mrb[0].mxu0 %v1340
    %v2102 = vpop.f32.mrb[0].mxu0
    %v2103 = vadd.f32 %v1673, %v2102
    %v2104 = vpop.f32.mrb[0].mxu0
    %v2105 = vadd.f32 %v1673, %v2104
    %2106 = vmatprep.mubr.f32.mxu0 %v1343
    %2107 = vmatmul.mubr.f32.gmra.mrb[0].mxu0 %v1342
    %v2108 = vpop.f32.mrb[0].mxu0
    %v2109 = vadd.f32 %v1678, %v2108
    %v2110 = vpop.f32.mrb[0].mxu0
    %v2111 = vadd.f32 %v1678, %v2110
    %2112 = vmatprep.mubr.f32.mxu0 %v1345
    %2113 = vmatmul.mubr.f32.gmra.mrb[0].mxu0 %v1344
    %v2114 = vpop.f32.mrb[0].mxu0
    %v2115 = vadd.f32 %v1683, %v2114
    %v2116 = vpop.f32.mrb[0].mxu0
    %v2117 = vadd.f32 %v1683, %v2116
    %2118 = vmatprep.mubr.f32.mxu0 %v1347
    %2119 = vmatmul.mubr.f32.gmra.mrb[0].mxu0 %v1346
    %v2120 = vpop.f32.mrb[0].mxu0
    %v2121 = vadd.f32 %v1688, %v2120
    %v2122 = vpop.f32.mrb[0].mxu0
    %v2123 = vadd.f32 %v1688, %v2122
    %2124 = vmatprep.mubr.f32.mxu0 %v1349
    %2125 = vmatmul.mubr.f32.gmra.mrb[0].mxu0 %v1348
    %v2126 = vpop.f32.mrb[0].mxu0
    %v2127 = vadd.f32 %v1693, %v2126
    %v2128 = vpop.f32.mrb[0].mxu0
    %v2129 = vadd.f32 %v1693, %v2128
    %2130 = vmatprep.mubr.f32.mxu0 %v1351
    %2131 = vmatmul.mubr.f32.gmra.mrb[0].mxu0 %v1350
    %v2132 = vpop.f32.mrb[0].mxu0
    %v2133 = vadd.f32 %v1698, %v2132
    %v2134 = vpop.f32.mrb[0].mxu0
    %v2135 = vadd.f32 %v1698, %v2134
    %2136 = vmatprep.mubr.f32.mxu0 %v1353
    %2137 = vmatmul.mubr.f32.gmra.mrb[0].mxu0 %v1352
    %v2138 = vpop.f32.mrb[0].mxu0
    %v2139 = vadd.f32 %v1703, %v2138
    %v2140 = vpop.f32.mrb[0].mxu0
    %v2141 = vadd.f32 %v1703, %v2140
    %2142 = vmatprep.mubr.f32.mxu0 %v1355
    %2143 = vmatmul.mubr.f32.gmra.mrb[0].mxu0 %v1354
    %v2144 = vpop.f32.mrb[0].mxu0
    %v2145 = vadd.f32 %v1708, %v2144
    %v2146 = vpop.f32.mrb[0].mxu0
    %v2147 = vadd.f32 %v1708, %v2146
    %2148 = vmatprep.mubr.f32.mxu0 %v1357
    %2149 = vmatmul.mubr.f32.gmra.mrb[0].mxu0 %v1356
    %v2150 = vpop.f32.mrb[0].mxu0
    %v2151 = vadd.f32 %v1713, %v2150
    %v2152 = vpop.f32.mrb[0].mxu0
    %v2153 = vadd.f32 %v1713, %v2152
    %2154 = vmatprep.mubr.f32.mxu0 %v1359
    %2155 = vmatmul.mubr.f32.gmra.mrb[0].mxu0 %v1358
    %v2156 = vpop.f32.mrb[0].mxu0
    %v2157 = vadd.f32 %v1718, %v2156
    %v2158 = vpop.f32.mrb[0].mxu0
    %v2159 = vadd.f32 %v1718, %v2158
    %2160 = vmatprep.mubr.f32.mxu0 %v1361
    %2161 = vmatmul.mubr.f32.gmra.mrb[0].mxu0 %v1360
    %v2162 = vpop.f32.mrb[0].mxu0
    %v2163 = vadd.f32 %v1723, %v2162
    %v2164 = vpop.f32.mrb[0].mxu0
    %v2165 = vadd.f32 %v1723, %v2164
    %2166 = vmatprep.mubr.f32.mxu0 %v1363
    %2167 = vmatmul.mubr.f32.gmra.mrb[0].mxu0 %v1362
    %v2168 = vpop.f32.mrb[0].mxu0
    %v2169 = vadd.f32 %v1728, %v2168
    %v2170 = vpop.f32.mrb[0].mxu0
    %v2171 = vadd.f32 %v1728, %v2170
    %2172 = vmatprep.mubr.f32.mxu0 %v1365
    %2173 = vmatmul.mubr.f32.gmra.mrb[0].mxu0 %v1364
    %v2174 = vpop.f32.mrb[0].mxu0
    %v2175 = vadd.f32 %v1733, %v2174
    %v2176 = vpop.f32.mrb[0].mxu0
    %v2177 = vadd.f32 %v1733, %v2176
    %2178 = vmatprep.mubr.f32.mxu0 %v1367
    %2179 = vmatmul.mubr.f32.gmra.mrb[0].mxu0 %v1366
    %v2180 = vpop.f32.mrb[0].mxu0
    %v2181 = vadd.f32 %v1738, %v2180
    %v2182 = vpop.f32.mrb[0].mxu0
    %v2183 = vadd.f32 %v1738, %v2182
    %2184 = vmatprep.mubr.f32.mxu0 %v1369
    %2185 = vmatmul.mubr.f32.gmra.mrb[0].mxu0 %v1368
    %v2186 = vpop.f32.mrb[0].mxu0
    %v2187 = vadd.f32 %v1743, %v2186
    %v2188 = vpop.f32.mrb[0].mxu0
    %v2189 = vadd.f32 %v1743, %v2188
    %2190 = vmatprep.mubr.f32.mxu0 %v1371
    %2191 = vmatmul.mubr.f32.gmra.mrb[0].mxu0 %v1370
    %v2192 = vpop.f32.mrb[0].mxu0
    %v2193 = vadd.f32 %v1748, %v2192
    %v2194 = vpop.f32.mrb[0].mxu0
    %v2195 = vadd.f32 %v1748, %v2194
    %2196 = vmatprep.mubr.f32.mxu0 %v1373
    %2197 = vmatmul.mubr.f32.gmra.mrb[0].mxu0 %v1372
    %v2198 = vpop.f32.mrb[0].mxu0
    %v2199 = vadd.f32 %v1753, %v2198
    %v2200 = vpop.f32.mrb[0].mxu0
    %v2201 = vadd.f32 %v1753, %v2200
    %2202 = vmatprep.mubr.f32.mxu0 %v1375
    %2203 = vmatmul.mubr.f32.gmra.mrb[0].mxu0 %v1374
    %v2204 = vpop.f32.mrb[0].mxu0
    %v2205 = vadd.f32 %v1758, %v2204
    %v2206 = vpop.f32.mrb[0].mxu0
    %v2207 = vadd.f32 %v1758, %v2206
    %2208 = vdwg.mxu0
    %v2209 = vmax.f32 %v1827, 0.0
    %v2210 = vmax.f32 %v1829, 0.0
    %v2211 = vmax.f32 %v1833, 0.0
    %v2212 = vmax.f32 %v1835, 0.0
    %v2213 = vmax.f32 %v1839, 0.0
    %v2214 = vmax.f32 %v1841, 0.0
    %v2215 = vmax.f32 %v1845, 0.0
    %v2216 = vmax.f32 %v1847, 0.0
    %v2217 = vmax.f32 %v1851, 0.0
    %v2218 = vmax.f32 %v1853, 0.0
    %v2219 = vmax.f32 %v1857, 0.0
    %v2220 = vmax.f32 %v1859, 0.0
    %v2221 = vmax.f32 %v1863, 0.0
    %v2222 = vmax.f32 %v1865, 0.0
    %v2223 = vmax.f32 %v1869, 0.0
    %v2224 = vmax.f32 %v1871, 0.0
    %v2225 = vmax.f32 %v1875, 0.0
    %v2226 = vmax.f32 %v1877, 0.0
    %v2227 = vmax.f32 %v1881, 0.0
    %v2228 = vmax.f32 %v1883, 0.0
    %v2229 = vmax.f32 %v1887, 0.0
    %v2230 = vmax.f32 %v1889, 0.0
    %v2231 = vmax.f32 %v1893, 0.0
    %v2232 = vmax.f32 %v1895, 0.0
    %v2233 = vmax.f32 %v1899, 0.0
    %v2234 = vmax.f32 %v1901, 0.0
    %v2235 = vmax.f32 %v1905, 0.0
    %v2236 = vmax.f32 %v1907, 0.0
    %v2237 = vmax.f32 %v1911, 0.0
    %v2238 = vmax.f32 %v1913, 0.0
    %v2239 = vmax.f32 %v1917, 0.0
    %v2240 = vmax.f32 %v1919, 0.0
    %v2241 = vmax.f32 %v1923, 0.0
    %v2242 = vmax.f32 %v1925, 0.0
    %v2243 = vmax.f32 %v1929, 0.0
    %v2244 = vmax.f32 %v1931, 0.0
    %v2245 = vmax.f32 %v1935, 0.0
    %v2246 = vmax.f32 %v1937, 0.0
    %v2247 = vmax.f32 %v1941, 0.0
    %v2248 = vmax.f32 %v1943, 0.0
    %v2249 = vmax.f32 %v1947, 0.0
    %v2250 = vmax.f32 %v1949, 0.0
    %v2251 = vmax.f32 %v1953, 0.0
    %v2252 = vmax.f32 %v1955, 0.0
    %v2253 = vmax.f32 %v1959, 0.0
    %v2254 = vmax.f32 %v1961, 0.0
    %v2255 = vmax.f32 %v1965, 0.0
    %v2256 = vmax.f32 %v1967, 0.0
    %v2257 = vmax.f32 %v1971, 0.0
    %v2258 = vmax.f32 %v1973, 0.0
    %v2259 = vmax.f32 %v1977, 0.0
    %v2260 = vmax.f32 %v1979, 0.0
    %v2261 = vmax.f32 %v1983, 0.0
    %v2262 = vmax.f32 %v1985, 0.0
    %v2263 = vmax.f32 %v1989, 0.0
    %v2264 = vmax.f32 %v1991, 0.0
    %v2265 = vmax.f32 %v1995, 0.0
    %v2266 = vmax.f32 %v1997, 0.0
    %v2267 = vmax.f32 %v2001, 0.0
    %v2268 = vmax.f32 %v2003, 0.0
    %v2269 = vmax.f32 %v2007, 0.0
    %v2270 = vmax.f32 %v2009, 0.0
    %v2271 = vmax.f32 %v2013, 0.0
    %v2272 = vmax.f32 %v2015, 0.0
    %v2273 = vmax.f32 %v2019, 0.0
    %v2274 = vmax.f32 %v2021, 0.0
    %v2275 = vmax.f32 %v2025, 0.0
    %v2276 = vmax.f32 %v2027, 0.0
    %v2277 = vmax.f32 %v2031, 0.0
    %v2278 = vmax.f32 %v2033, 0.0
    %v2279 = vmax.f32 %v2037, 0.0
    %v2280 = vmax.f32 %v2039, 0.0
    %v2281 = vmax.f32 %v2043, 0.0
    %v2282 = vmax.f32 %v2045, 0.0
    %v2283 = vmax.f32 %v2049, 0.0
    %v2284 = vmax.f32 %v2051, 0.0
    %v2285 = vmax.f32 %v2055, 0.0
    %v2286 = vmax.f32 %v2057, 0.0
    %v2287 = vmax.f32 %v2061, 0.0
    %v2288 = vmax.f32 %v2063, 0.0
    %v2289 = vmax.f32 %v2067, 0.0
    %v2290 = vmax.f32 %v2069, 0.0
    %v2291 = vmax.f32 %v2073, 0.0
    %v2292 = vmax.f32 %v2075, 0.0
    %v2293 = vmax.f32 %v2079, 0.0
    %v2294 = vmax.f32 %v2081, 0.0
    %v2295 = vmax.f32 %v2085, 0.0
    %v2296 = vmax.f32 %v2087, 0.0
    %v2297 = vmax.f32 %v2091, 0.0
    %v2298 = vmax.f32 %v2093, 0.0
    %v2299 = vmax.f32 %v2097, 0.0
    %v2300 = vmax.f32 %v2099, 0.0
    %v2301 = vmax.f32 %v2103, 0.0
    %v2302 = vmax.f32 %v2105, 0.0
    %v2303 = vmax.f32 %v2109, 0.0
    %v2304 = vmax.f32 %v2111, 0.0
    %v2305 = vmax.f32 %v2115, 0.0
    %v2306 = vmax.f32 %v2117, 0.0
    %v2307 = vmax.f32 %v2121, 0.0
    %v2308 = vmax.f32 %v2123, 0.0
    %v2309 = vmax.f32 %v2127, 0.0
    %v2310 = vmax.f32 %v2129, 0.0
    %v2311 = vmax.f32 %v2133, 0.0
    %v2312 = vmax.f32 %v2135, 0.0
    %v2313 = vmax.f32 %v2139, 0.0
    %v2314 = vmax.f32 %v2141, 0.0
    %v2315 = vmax.f32 %v2145, 0.0
    %v2316 = vmax.f32 %v2147, 0.0
    %v2317 = vmax.f32 %v2151, 0.0
    %v2318 = vmax.f32 %v2153, 0.0
    %v2319 = vmax.f32 %v2157, 0.0
    %v2320 = vmax.f32 %v2159, 0.0
    %v2321 = vmax.f32 %v2163, 0.0
    %v2322 = vmax.f32 %v2165, 0.0
    %v2323 = vmax.f32 %v2169, 0.0
    %v2324 = vmax.f32 %v2171, 0.0
    %v2325 = vmax.f32 %v2175, 0.0
    %v2326 = vmax.f32 %v2177, 0.0
    %v2327 = vmax.f32 %v2181, 0.0
    %v2328 = vmax.f32 %v2183, 0.0
    %v2329 = vmax.f32 %v2187, 0.0
    %v2330 = vmax.f32 %v2189, 0.0
    %v2331 = vmax.f32 %v2193, 0.0
    %v2332 = vmax.f32 %v2195, 0.0
    %v2333 = vmax.f32 %v2199, 0.0
    %v2334 = vmax.f32 %v2201, 0.0
    %v2335 = vmax.f32 %v2205, 0.0
    %v2336 = vmax.f32 %v2207, 0.0
    %v2337 = vld [vmem:[#allocation2 + $0x7a0] sm:$0xff]
    %v2338 = vld [vmem:[#allocation2 + $0x7a8] sm:$0xff]
    %v2339 = vld [vmem:[#allocation2 + $0x7b0] sm:$0xff]
    %v2340 = vld [vmem:[#allocation2 + $0x7b8] sm:$0xff]
    %v2341 = vld [vmem:[#allocation2 + $0x7c0] sm:$0xff]
    %v2342 = vld [vmem:[#allocation2 + $0x7c8] sm:$0xff]
    %v2343 = vld [vmem:[#allocation2 + $0x7d0] sm:$0xff]
    %v2344 = vld [vmem:[#allocation2 + $0x7d8] sm:$0xff]
    %v2345 = vld [vmem:[#allocation2 + $0x7e0] sm:$0xff]
    %v2346 = vld [vmem:[#allocation2 + $0x7e8] sm:$0xff]
    %v2347 = vld [vmem:[#allocation2 + $0x7f0] sm:$0xff]
    %v2348 = vld [vmem:[#allocation2 + $0x7f8] sm:$0xff]
    %v2349 = vld [vmem:[#allocation2 + $0x800] sm:$0xff]
    %v2350 = vld [vmem:[#allocation2 + $0x808] sm:$0xff]
    %v2351 = vld [vmem:[#allocation2 + $0x810] sm:$0xff]
    %v2352 = vld [vmem:[#allocation2 + $0x818] sm:$0xff]
    %v2353 = vld [vmem:[#allocation2 + $0x820] sm:$0xff]
    %v2354 = vld [vmem:[#allocation2 + $0x828] sm:$0xff]
    %v2355 = vld [vmem:[#allocation2 + $0x830] sm:$0xff]
    %v2356 = vld [vmem:[#allocation2 + $0x838] sm:$0xff]
    %v2357 = vld [vmem:[#allocation2 + $0x840] sm:$0xff]
    %v2358 = vld [vmem:[#allocation2 + $0x848] sm:$0xff]
    %v2359 = vld [vmem:[#allocation2 + $0x850] sm:$0xff]
    %v2360 = vld [vmem:[#allocation2 + $0x858] sm:$0xff]
    %v2361 = vld [vmem:[#allocation2 + $0x860] sm:$0xff]
    %v2362 = vld [vmem:[#allocation2 + $0x868] sm:$0xff]
    %v2363 = vld [vmem:[#allocation2 + $0x870] sm:$0xff]
    %v2364 = vld [vmem:[#allocation2 + $0x878] sm:$0xff]
    %v2365 = vld [vmem:[#allocation2 + $0x880] sm:$0xff]
    %v2366 = vld [vmem:[#allocation2 + $0x888] sm:$0xff]
    %v2367 = vld [vmem:[#allocation2 + $0x890] sm:$0xff]
    %v2368 = vld [vmem:[#allocation2 + $0x898] sm:$0xff]
    %v2369 = vld [vmem:[#allocation2 + $0x8a0] sm:$0xff]
    %v2370 = vld [vmem:[#allocation2 + $0x8a8] sm:$0xff]
    %v2371 = vld [vmem:[#allocation2 + $0x8b0] sm:$0xff]
    %v2372 = vld [vmem:[#allocation2 + $0x8b8] sm:$0xff]
    %v2373 = vld [vmem:[#allocation2 + $0x8c0] sm:$0xff]
    %v2374 = vld [vmem:[#allocation2 + $0x8c8] sm:$0xff]
    %v2375 = vld [vmem:[#allocation2 + $0x8d0] sm:$0xff]
    %v2376 = vld [vmem:[#allocation2 + $0x8d8] sm:$0xff]
    %v2377 = vld [vmem:[#allocation2 + $0x8e0] sm:$0xff]
    %v2378 = vld [vmem:[#allocation2 + $0x8e8] sm:$0xff]
    %v2379 = vld [vmem:[#allocation2 + $0x8f0] sm:$0xff]
    %v2380 = vld [vmem:[#allocation2 + $0x8f8] sm:$0xff]
    %v2381 = vld [vmem:[#allocation2 + $0x900] sm:$0xff]
    %v2382 = vld [vmem:[#allocation2 + $0x908] sm:$0xff]
    %v2383 = vld [vmem:[#allocation2 + $0x910] sm:$0xff]
    %v2384 = vld [vmem:[#allocation2 + $0x918] sm:$0xff]
    %v2385 = vld [vmem:[#allocation2 + $0x920] sm:$0xff]
    %v2386 = vld [vmem:[#allocation2 + $0x928] sm:$0xff]
    %v2387 = vld [vmem:[#allocation2 + $0x930] sm:$0xff]
    %v2388 = vld [vmem:[#allocation2 + $0x938] sm:$0xff]
    %v2389 = vld [vmem:[#allocation2 + $0x940] sm:$0xff]
    %v2390 = vld [vmem:[#allocation2 + $0x948] sm:$0xff]
    %v2391 = vld [vmem:[#allocation2 + $0x950] sm:$0xff]
    %v2392 = vld [vmem:[#allocation2 + $0x958] sm:$0xff]
    %v2393 = vld [vmem:[#allocation2 + $0x960] sm:$0xff]
    %v2394 = vld [vmem:[#allocation2 + $0x968] sm:$0xff]
    %v2395 = vld [vmem:[#allocation2 + $0x970] sm:$0xff]
    %v2396 = vld [vmem:[#allocation2 + $0x978] sm:$0xff]
    %v2397 = vld [vmem:[#allocation2 + $0x980] sm:$0xff]
    %v2398 = vld [vmem:[#allocation2 + $0x988] sm:$0xff]
    %v2399 = vld [vmem:[#allocation2 + $0x990] sm:$0xff]
    %v2400 = vld [vmem:[#allocation2 + $0x998] sm:$0xff]
    %v2401 = vld [vmem:[#allocation2 + $0x9a0] sm:$0xff]
    %v2402 = vld [vmem:[#allocation2 + $0x9a8] sm:$0xff]
    %v2403 = vld [vmem:[#allocation2 + $0x9b0] sm:$0xff]
    %v2404 = vld [vmem:[#allocation2 + $0x9b8] sm:$0xff]
    %v2405 = vld [vmem:[#allocation2 + $0x9c0] sm:$0xff]
    %v2406 = vld [vmem:[#allocation2 + $0x9c8] sm:$0xff]
    %v2407 = vld [vmem:[#allocation2 + $0x9d0] sm:$0xff]
    %v2408 = vld [vmem:[#allocation2 + $0x9d8] sm:$0xff]
    %v2409 = vld [vmem:[#allocation2 + $0x9e0] sm:$0xff]
    %v2410 = vld [vmem:[#allocation2 + $0x9e8] sm:$0xff]
    %v2411 = vld [vmem:[#allocation2 + $0x9f0] sm:$0xff]
    %v2412 = vld [vmem:[#allocation2 + $0x9f8] sm:$0xff]
    %v2413 = vld [vmem:[#allocation2 + $0xa00] sm:$0xff]
    %v2414 = vld [vmem:[#allocation2 + $0xa08] sm:$0xff]
    %v2415 = vld [vmem:[#allocation2 + $0xa10] sm:$0xff]
    %v2416 = vld [vmem:[#allocation2 + $0xa18] sm:$0xff]
    %v2417 = vld [vmem:[#allocation2 + $0xa20] sm:$0xff]
    %v2418 = vld [vmem:[#allocation2 + $0xa28] sm:$0xff]
    %v2419 = vld [vmem:[#allocation2 + $0xa30] sm:$0xff]
    %v2420 = vld [vmem:[#allocation2 + $0xa38] sm:$0xff]
    %v2421 = vld [vmem:[#allocation2 + $0xa40] sm:$0xff]
    %v2422 = vld [vmem:[#allocation2 + $0xa48] sm:$0xff]
    %v2423 = vld [vmem:[#allocation2 + $0xa50] sm:$0xff]
    %v2424 = vld [vmem:[#allocation2 + $0xa58] sm:$0xff]
    %v2425 = vld [vmem:[#allocation2 + $0xa60] sm:$0xff]
    %v2426 = vld [vmem:[#allocation2 + $0xa68] sm:$0xff]
    %v2427 = vld [vmem:[#allocation2 + $0xa70] sm:$0xff]
    %v2428 = vld [vmem:[#allocation2 + $0xa78] sm:$0xff]
    %v2429 = vld [vmem:[#allocation2 + $0xa80] sm:$0xff]
    %v2430 = vld [vmem:[#allocation2 + $0xa88] sm:$0xff]
    %v2431 = vld [vmem:[#allocation2 + $0xa90] sm:$0xff]
    %v2432 = vld [vmem:[#allocation2 + $0xa98] sm:$0xff]
    %v2433 = vld [vmem:[#allocation2 + $0xaa0] sm:$0xff]
    %v2434 = vld [vmem:[#allocation2 + $0xaa8] sm:$0xff]
    %v2435 = vld [vmem:[#allocation2 + $0xab0] sm:$0xff]
    %v2436 = vld [vmem:[#allocation2 + $0xab8] sm:$0xff]
    %v2437 = vld [vmem:[#allocation2 + $0xac0] sm:$0xff]
    %v2438 = vld [vmem:[#allocation2 + $0xac8] sm:$0xff]
    %v2439 = vld [vmem:[#allocation2 + $0xad0] sm:$0xff]
    %v2440 = vld [vmem:[#allocation2 + $0xad8] sm:$0xff]
    %v2441 = vld [vmem:[#allocation2 + $0xae0] sm:$0xff]
    %v2442 = vld [vmem:[#allocation2 + $0xae8] sm:$0xff]
    %v2443 = vld [vmem:[#allocation2 + $0xaf0] sm:$0xff]
    %v2444 = vld [vmem:[#allocation2 + $0xaf8] sm:$0xff]
    %v2445 = vld [vmem:[#allocation2 + $0xb00] sm:$0xff]
    %v2446 = vld [vmem:[#allocation2 + $0xb08] sm:$0xff]
    %v2447 = vld [vmem:[#allocation2 + $0xb10] sm:$0xff]
    %v2448 = vld [vmem:[#allocation2 + $0xb18] sm:$0xff]
    %v2449 = vld [vmem:[#allocation2 + $0xb20] sm:$0xff]
    %v2450 = vld [vmem:[#allocation2 + $0xb28] sm:$0xff]
    %v2451 = vld [vmem:[#allocation2 + $0xb30] sm:$0xff]
    %v2452 = vld [vmem:[#allocation2 + $0xb38] sm:$0xff]
    %v2453 = vld [vmem:[#allocation2 + $0xb40] sm:$0xff]
    %v2454 = vld [vmem:[#allocation2 + $0xb48] sm:$0xff]
    %v2455 = vld [vmem:[#allocation2 + $0xb50] sm:$0xff]
    %v2456 = vld [vmem:[#allocation2 + $0xb58] sm:$0xff]
    %v2457 = vld [vmem:[#allocation2 + $0xb60] sm:$0xff]
    %v2458 = vld [vmem:[#allocation2 + $0xb68] sm:$0xff]
    %v2459 = vld [vmem:[#allocation2 + $0xb70] sm:$0xff]
    %v2460 = vld [vmem:[#allocation2 + $0xb78] sm:$0xff]
    %v2461 = vld [vmem:[#allocation2 + $0xb80] sm:$0xff]
    %v2462 = vld [vmem:[#allocation2 + $0xb88] sm:$0xff]
    %v2463 = vld [vmem:[#allocation2 + $0xb90] sm:$0xff]
    %v2464 = vld [vmem:[#allocation2 + $0xb98] sm:$0xff]
    %2465 = vmatprep.subr.mxu0 %v2274
    %2466 = vmatpush1.msra.mxu0 %v2273
    %2467 = vmatprep.subr.mxu0 %v2276
    %2468 = vmatpush1.msra.mxu0 %v2275
    %2469 = vmatprep.subr.mxu0 %v2278
    %2470 = vmatpush1.msra.mxu0 %v2277
    %2471 = vmatprep.subr.mxu0 %v2280
    %2472 = vmatpush1.msra.mxu0 %v2279
    %2473 = vmatprep.subr.mxu0 %v2282
    %2474 = vmatpush1.msra.mxu0 %v2281
    %2475 = vmatprep.subr.mxu0 %v2284
    %2476 = vmatpush1.msra.mxu0 %v2283
    %2477 = vmatprep.subr.mxu0 %v2286
    %2478 = vmatpush1.msra.mxu0 %v2285
    %2479 = vmatprep.subr.mxu0 %v2288
    %2480 = vmatpush1.msra.mxu0 %v2287
    %2481 = vmatprep.subr.mxu0 %v2290
    %2482 = vmatpush1.msra.mxu0 %v2289
    %2483 = vmatprep.subr.mxu0 %v2292
    %2484 = vmatpush1.msra.mxu0 %v2291
    %2485 = vmatprep.subr.mxu0 %v2294
    %2486 = vmatpush1.msra.mxu0 %v2293
    %2487 = vmatprep.subr.mxu0 %v2296
    %2488 = vmatpush1.msra.mxu0 %v2295
    %2489 = vmatprep.subr.mxu0 %v2298
    %2490 = vmatpush1.msra.mxu0 %v2297
    %2491 = vmatprep.subr.mxu0 %v2300
    %2492 = vmatpush1.msra.mxu0 %v2299
    %2493 = vmatprep.subr.mxu0 %v2302
    %2494 = vmatpush1.msra.mxu0 %v2301
    %2495 = vmatprep.subr.mxu0 %v2304
    %2496 = vmatpush1.msra.mxu0 %v2303
    %2497 = vmatprep.subr.mxu0 %v2306
    %2498 = vmatpush1.msra.mxu0 %v2305
    %2499 = vmatprep.subr.mxu0 %v2308
    %2500 = vmatpush1.msra.mxu0 %v2307
    %2501 = vmatprep.subr.mxu0 %v2310
    %2502 = vmatpush1.msra.mxu0 %v2309
    %2503 = vmatprep.subr.mxu0 %v2312
    %2504 = vmatpush1.msra.mxu0 %v2311
    %2505 = vmatprep.subr.mxu0 %v2314
    %2506 = vmatpush1.msra.mxu0 %v2313
    %2507 = vmatprep.subr.mxu0 %v2316
    %2508 = vmatpush1.msra.mxu0 %v2315
    %2509 = vmatprep.subr.mxu0 %v2318
    %2510 = vmatpush1.msra.mxu0 %v2317
    %2511 = vmatprep.subr.mxu0 %v2320
    %2512 = vmatpush1.msra.mxu0 %v2319
    %2513 = vmatprep.subr.mxu0 %v2322
    %2514 = vmatpush1.msra.mxu0 %v2321
    %2515 = vmatprep.subr.mxu0 %v2324
    %2516 = vmatpush1.msra.mxu0 %v2323
    %2517 = vmatprep.subr.mxu0 %v2326
    %2518 = vmatpush1.msra.mxu0 %v2325
    %2519 = vmatprep.subr.mxu0 %v2328
    %2520 = vmatpush1.msra.mxu0 %v2327
    %2521 = vmatprep.subr.mxu0 %v2330
    %2522 = vmatpush1.msra.mxu0 %v2329
    %2523 = vmatprep.subr.mxu0 %v2332
    %2524 = vmatpush1.msra.mxu0 %v2331
    %2525 = vmatprep.subr.mxu0 %v2334
    %2526 = vmatpush1.msra.mxu0 %v2333
    %2527 = vmatprep.subr.mxu0 %v2336
    %2528 = vmatpush1.msra.mxu0 %v2335
    %2529 = vmatprep.mubr.f32.mxu0 %v2402
    %2530 = vmatmul.mubr.f32.gmra.mrb[0].mxu0 %v2401
    %v2531 = vpop.f32.mrb[0].mxu0
    %v2532 = vadd.f32 0.0, %v2531
    %v2533 = vpop.f32.mrb[0].mxu0
    %v2534 = vadd.f32 0.0, %v2533
    %2535 = vmatprep.mubr.f32.mxu0 %v2404
    %2536 = vmatmul.mubr.f32.gmra.mrb[0].mxu0 %v2403
    %v2537 = vpop.f32.mrb[0].mxu0
    %v2538 = vadd.f32 0.0, %v2537
    %v2539 = vpop.f32.mrb[0].mxu0
    %v2540 = vadd.f32 0.0, %v2539
    %2541 = vmatprep.mubr.f32.mxu0 %v2406
    %2542 = vmatmul.mubr.f32.gmra.mrb[0].mxu0 %v2405
    %v2543 = vpop.f32.mrb[0].mxu0
    %v2544 = vadd.f32 0.0, %v2543
    %v2545 = vpop.f32.mrb[0].mxu0
    %v2546 = vadd.f32 0.0, %v2545
    %2547 = vmatprep.mubr.f32.mxu0 %v2408
    %2548 = vmatmul.mubr.f32.gmra.mrb[0].mxu0 %v2407
    %v2549 = vpop.f32.mrb[0].mxu0
    %v2550 = vadd.f32 0.0, %v2549
    %v2551 = vpop.f32.mrb[0].mxu0
    %v2552 = vadd.f32 0.0, %v2551
    %2553 = vmatprep.mubr.f32.mxu0 %v2410
    %2554 = vmatmul.mubr.f32.gmra.mrb[0].mxu0 %v2409
    %v2555 = vpop.f32.mrb[0].mxu0
    %v2556 = vadd.f32 0.0, %v2555
    %v2557 = vpop.f32.mrb[0].mxu0
    %v2558 = vadd.f32 0.0, %v2557
    %2559 = vmatprep.mubr.f32.mxu0 %v2412
    %2560 = vmatmul.mubr.f32.gmra.mrb[0].mxu0 %v2411
    %v2561 = vpop.f32.mrb[0].mxu0
    %v2562 = vadd.f32 0.0, %v2561
    %v2563 = vpop.f32.mrb[0].mxu0
    %v2564 = vadd.f32 0.0, %v2563
    %2565 = vmatprep.mubr.f32.mxu0 %v2414
    %2566 = vmatmul.mubr.f32.gmra.mrb[0].mxu0 %v2413
    %v2567 = vpop.f32.mrb[0].mxu0
    %v2568 = vadd.f32 0.0, %v2567
    %v2569 = vpop.f32.mrb[0].mxu0
    %v2570 = vadd.f32 0.0, %v2569
    %2571 = vmatprep.mubr.f32.mxu0 %v2416
    %2572 = vmatmul.mubr.f32.gmra.mrb[0].mxu0 %v2415
    %v2573 = vpop.f32.mrb[0].mxu0
    %v2574 = vadd.f32 0.0, %v2573
    %v2575 = vpop.f32.mrb[0].mxu0
    %v2576 = vadd.f32 0.0, %v2575
    %2577 = vmatprep.mubr.f32.mxu0 %v2418
    %2578 = vmatmul.mubr.f32.gmra.mrb[0].mxu0 %v2417
    %v2579 = vpop.f32.mrb[0].mxu0
    %v2580 = vadd.f32 0.0, %v2579
    %v2581 = vpop.f32.mrb[0].mxu0
    %v2582 = vadd.f32 0.0, %v2581
    %2583 = vmatprep.mubr.f32.mxu0 %v2420
    %2584 = vmatmul.mubr.f32.gmra.mrb[0].mxu0 %v2419
    %v2585 = vpop.f32.mrb[0].mxu0
    %v2586 = vadd.f32 0.0, %v2585
    %v2587 = vpop.f32.mrb[0].mxu0
    %v2588 = vadd.f32 0.0, %v2587
    %2589 = vmatprep.mubr.f32.mxu0 %v2422
    %2590 = vmatmul.mubr.f32.gmra.mrb[0].mxu0 %v2421
    %v2591 = vpop.f32.mrb[0].mxu0
    %v2592 = vadd.f32 0.0, %v2591
    %v2593 = vpop.f32.mrb[0].mxu0
    %v2594 = vadd.f32 0.0, %v2593
    %2595 = vmatprep.mubr.f32.mxu0 %v2424
    %2596 = vmatmul.mubr.f32.gmra.mrb[0].mxu0 %v2423
    %v2597 = vpop.f32.mrb[0].mxu0
    %v2598 = vadd.f32 0.0, %v2597
    %v2599 = vpop.f32.mrb[0].mxu0
    %v2600 = vadd.f32 0.0, %v2599
    %2601 = vmatprep.mubr.f32.mxu0 %v2426
    %2602 = vmatmul.mubr.f32.gmra.mrb[0].mxu0 %v2425
    %v2603 = vpop.f32.mrb[0].mxu0
    %v2604 = vadd.f32 0.0, %v2603
    %v2605 = vpop.f32.mrb[0].mxu0
    %v2606 = vadd.f32 0.0, %v2605
    %2607 = vmatprep.mubr.f32.mxu0 %v2428
    %2608 = vmatmul.mubr.f32.gmra.mrb[0].mxu0 %v2427
    %v2609 = vpop.f32.mrb[0].mxu0
    %v2610 = vadd.f32 0.0, %v2609
    %v2611 = vpop.f32.mrb[0].mxu0
    %v2612 = vadd.f32 0.0, %v2611
    %2613 = vmatprep.mubr.f32.mxu0 %v2430
    %2614 = vmatmul.mubr.f32.gmra.mrb[0].mxu0 %v2429
    %v2615 = vpop.f32.mrb[0].mxu0
    %v2616 = vadd.f32 0.0, %v2615
    %v2617 = vpop.f32.mrb[0].mxu0
    %v2618 = vadd.f32 0.0, %v2617
    %2619 = vmatprep.mubr.f32.mxu0 %v2432
    %2620 = vmatmul.mubr.f32.gmra.mrb[0].mxu0 %v2431
    %v2621 = vpop.f32.mrb[0].mxu0
    %v2622 = vadd.f32 0.0, %v2621
    %v2623 = vpop.f32.mrb[0].mxu0
    %v2624 = vadd.f32 0.0, %v2623
    %2625 = vmatprep.mubr.f32.mxu0 %v2434
    %2626 = vmatmul.mubr.f32.gmra.mrb[0].mxu0 %v2433
    %v2627 = vpop.f32.mrb[0].mxu0
    %v2628 = vadd.f32 0.0, %v2627
    %v2629 = vpop.f32.mrb[0].mxu0
    %v2630 = vadd.f32 0.0, %v2629
    %2631 = vmatprep.mubr.f32.mxu0 %v2436
    %2632 = vmatmul.mubr.f32.gmra.mrb[0].mxu0 %v2435
    %v2633 = vpop.f32.mrb[0].mxu0
    %v2634 = vadd.f32 0.0, %v2633
    %v2635 = vpop.f32.mrb[0].mxu0
    %v2636 = vadd.f32 0.0, %v2635
    %2637 = vmatprep.mubr.f32.mxu0 %v2438
    %2638 = vmatmul.mubr.f32.gmra.mrb[0].mxu0 %v2437
    %v2639 = vpop.f32.mrb[0].mxu0
    %v2640 = vadd.f32 0.0, %v2639
    %v2641 = vpop.f32.mrb[0].mxu0
    %v2642 = vadd.f32 0.0, %v2641
    %2643 = vmatprep.mubr.f32.mxu0 %v2440
    %2644 = vmatmul.mubr.f32.gmra.mrb[0].mxu0 %v2439
    %v2645 = vpop.f32.mrb[0].mxu0
    %v2646 = vadd.f32 0.0, %v2645
    %v2647 = vpop.f32.mrb[0].mxu0
    %v2648 = vadd.f32 0.0, %v2647
    %2649 = vmatprep.mubr.f32.mxu0 %v2442
    %2650 = vmatmul.mubr.f32.gmra.mrb[0].mxu0 %v2441
    %v2651 = vpop.f32.mrb[0].mxu0
    %v2652 = vadd.f32 0.0, %v2651
    %v2653 = vpop.f32.mrb[0].mxu0
    %v2654 = vadd.f32 0.0, %v2653
    %2655 = vmatprep.mubr.f32.mxu0 %v2444
    %2656 = vmatmul.mubr.f32.gmra.mrb[0].mxu0 %v2443
    %v2657 = vpop.f32.mrb[0].mxu0
    %v2658 = vadd.f32 0.0, %v2657
    %v2659 = vpop.f32.mrb[0].mxu0
    %v2660 = vadd.f32 0.0, %v2659
    %2661 = vmatprep.mubr.f32.mxu0 %v2446
    %2662 = vmatmul.mubr.f32.gmra.mrb[0].mxu0 %v2445
    %v2663 = vpop.f32.mrb[0].mxu0
    %v2664 = vadd.f32 0.0, %v2663
    %v2665 = vpop.f32.mrb[0].mxu0
    %v2666 = vadd.f32 0.0, %v2665
    %2667 = vmatprep.mubr.f32.mxu0 %v2448
    %2668 = vmatmul.mubr.f32.gmra.mrb[0].mxu0 %v2447
    %v2669 = vpop.f32.mrb[0].mxu0
    %v2670 = vadd.f32 0.0, %v2669
    %v2671 = vpop.f32.mrb[0].mxu0
    %v2672 = vadd.f32 0.0, %v2671
    %2673 = vmatprep.mubr.f32.mxu0 %v2450
    %2674 = vmatmul.mubr.f32.gmra.mrb[0].mxu0 %v2449
    %v2675 = vpop.f32.mrb[0].mxu0
    %v2676 = vadd.f32 0.0, %v2675
    %v2677 = vpop.f32.mrb[0].mxu0
    %v2678 = vadd.f32 0.0, %v2677
    %2679 = vmatprep.mubr.f32.mxu0 %v2452
    %2680 = vmatmul.mubr.f32.gmra.mrb[0].mxu0 %v2451
    %v2681 = vpop.f32.mrb[0].mxu0
    %v2682 = vadd.f32 0.0, %v2681
    %v2683 = vpop.f32.mrb[0].mxu0
    %v2684 = vadd.f32 0.0, %v2683
    %2685 = vmatprep.mubr.f32.mxu0 %v2454
    %2686 = vmatmul.mubr.f32.gmra.mrb[0].mxu0 %v2453
    %v2687 = vpop.f32.mrb[0].mxu0
    %v2688 = vadd.f32 0.0, %v2687
    %v2689 = vpop.f32.mrb[0].mxu0
    %v2690 = vadd.f32 0.0, %v2689
    %2691 = vmatprep.mubr.f32.mxu0 %v2456
    %2692 = vmatmul.mubr.f32.gmra.mrb[0].mxu0 %v2455
    %v2693 = vpop.f32.mrb[0].mxu0
    %v2694 = vadd.f32 0.0, %v2693
    %v2695 = vpop.f32.mrb[0].mxu0
    %v2696 = vadd.f32 0.0, %v2695
    %2697 = vmatprep.mubr.f32.mxu0 %v2458
    %2698 = vmatmul.mubr.f32.gmra.mrb[0].mxu0 %v2457
    %v2699 = vpop.f32.mrb[0].mxu0
    %v2700 = vadd.f32 0.0, %v2699
    %v2701 = vpop.f32.mrb[0].mxu0
    %v2702 = vadd.f32 0.0, %v2701
    %2703 = vmatprep.mubr.f32.mxu0 %v2460
    %2704 = vmatmul.mubr.f32.gmra.mrb[0].mxu0 %v2459
    %v2705 = vpop.f32.mrb[0].mxu0
    %v2706 = vadd.f32 0.0, %v2705
    %v2707 = vpop.f32.mrb[0].mxu0
    %v2708 = vadd.f32 0.0, %v2707
    %2709 = vmatprep.mubr.f32.mxu0 %v2462
    %2710 = vmatmul.mubr.f32.gmra.mrb[0].mxu0 %v2461
    %v2711 = vpop.f32.mrb[0].mxu0
    %v2712 = vadd.f32 0.0, %v2711
    %v2713 = vpop.f32.mrb[0].mxu0
    %v2714 = vadd.f32 0.0, %v2713
    %2715 = vmatprep.mubr.f32.mxu0 %v2464
    %2716 = vmatmul.mubr.f32.gmra.mrb[0].mxu0 %v2463
    %v2717 = vpop.f32.mrb[0].mxu0
    %v2718 = vadd.f32 0.0, %v2717
    %v2719 = vpop.f32.mrb[0].mxu0
    %v2720 = vadd.f32 0.0, %v2719
    %2721 = vdwg.mxu0
    %2722 = vmatprep.subr.mxu0 %v2210
    %2723 = vmatpush1.msra.mxu0 %v2209
    %2724 = vmatprep.subr.mxu0 %v2212
    %2725 = vmatpush1.msra.mxu0 %v2211
    %2726 = vmatprep.subr.mxu0 %v2214
    %2727 = vmatpush1.msra.mxu0 %v2213
    %2728 = vmatprep.subr.mxu0 %v2216
    %2729 = vmatpush1.msra.mxu0 %v2215
    %2730 = vmatprep.subr.mxu0 %v2218
    %2731 = vmatpush1.msra.mxu0 %v2217
    %2732 = vmatprep.subr.mxu0 %v2220
    %2733 = vmatpush1.msra.mxu0 %v2219
    %2734 = vmatprep.subr.mxu0 %v2222
    %2735 = vmatpush1.msra.mxu0 %v2221
    %2736 = vmatprep.subr.mxu0 %v2224
    %2737 = vmatpush1.msra.mxu0 %v2223
    %2738 = vmatprep.subr.mxu0 %v2226
    %2739 = vmatpush1.msra.mxu0 %v2225
    %2740 = vmatprep.subr.mxu0 %v2228
    %2741 = vmatpush1.msra.mxu0 %v2227
    %2742 = vmatprep.subr.mxu0 %v2230
    %2743 = vmatpush1.msra.mxu0 %v2229
    %2744 = vmatprep.subr.mxu0 %v2232
    %2745 = vmatpush1.msra.mxu0 %v2231
    %2746 = vmatprep.subr.mxu0 %v2234
    %2747 = vmatpush1.msra.mxu0 %v2233
    %2748 = vmatprep.subr.mxu0 %v2236
    %2749 = vmatpush1.msra.mxu0 %v2235
    %2750 = vmatprep.subr.mxu0 %v2238
    %2751 = vmatpush1.msra.mxu0 %v2237
    %2752 = vmatprep.subr.mxu0 %v2240
    %2753 = vmatpush1.msra.mxu0 %v2239
    %2754 = vmatprep.subr.mxu0 %v2242
    %2755 = vmatpush1.msra.mxu0 %v2241
    %2756 = vmatprep.subr.mxu0 %v2244
    %2757 = vmatpush1.msra.mxu0 %v2243
    %2758 = vmatprep.subr.mxu0 %v2246
    %2759 = vmatpush1.msra.mxu0 %v2245
    %2760 = vmatprep.subr.mxu0 %v2248
    %2761 = vmatpush1.msra.mxu0 %v2247
    %2762 = vmatprep.subr.mxu0 %v2250
    %2763 = vmatpush1.msra.mxu0 %v2249
    %2764 = vmatprep.subr.mxu0 %v2252
    %2765 = vmatpush1.msra.mxu0 %v2251
    %2766 = vmatprep.subr.mxu0 %v2254
    %2767 = vmatpush1.msra.mxu0 %v2253
    %2768 = vmatprep.subr.mxu0 %v2256
    %2769 = vmatpush1.msra.mxu0 %v2255
    %2770 = vmatprep.subr.mxu0 %v2258
    %2771 = vmatpush1.msra.mxu0 %v2257
    %2772 = vmatprep.subr.mxu0 %v2260
    %2773 = vmatpush1.msra.mxu0 %v2259
    %2774 = vmatprep.subr.mxu0 %v2262
    %2775 = vmatpush1.msra.mxu0 %v2261
    %2776 = vmatprep.subr.mxu0 %v2264
    %2777 = vmatpush1.msra.mxu0 %v2263
    %2778 = vmatprep.subr.mxu0 %v2266
    %2779 = vmatpush1.msra.mxu0 %v2265
    %2780 = vmatprep.subr.mxu0 %v2268
    %2781 = vmatpush1.msra.mxu0 %v2267
    %2782 = vmatprep.subr.mxu0 %v2270
    %2783 = vmatpush1.msra.mxu0 %v2269
    %2784 = vmatprep.subr.mxu0 %v2272
    %2785 = vmatpush1.msra.mxu0 %v2271
    %2786 = vmatprep.mubr.f32.mxu0 %v2338
    %2787 = vmatmul.mubr.f32.gmra.mrb[0].mxu0 %v2337
    %v2788 = vpop.f32.mrb[0].mxu0
    %v2789 = vadd.f32 %v2532, %v2788
    %v2790 = vpop.f32.mrb[0].mxu0
    %v2791 = vadd.f32 %v2534, %v2790
    %2792 = vmatprep.mubr.f32.mxu0 %v2340
    %2793 = vmatmul.mubr.f32.gmra.mrb[0].mxu0 %v2339
    %v2794 = vpop.f32.mrb[0].mxu0
    %v2795 = vadd.f32 %v2538, %v2794
    %v2796 = vpop.f32.mrb[0].mxu0
    %v2797 = vadd.f32 %v2540, %v2796
    %2798 = vmatprep.mubr.f32.mxu0 %v2342
    %2799 = vmatmul.mubr.f32.gmra.mrb[0].mxu0 %v2341
    %v2800 = vpop.f32.mrb[0].mxu0
    %v2801 = vadd.f32 %v2544, %v2800
    %v2802 = vpop.f32.mrb[0].mxu0
    %v2803 = vadd.f32 %v2546, %v2802
    %2804 = vmatprep.mubr.f32.mxu0 %v2344
    %2805 = vmatmul.mubr.f32.gmra.mrb[0].mxu0 %v2343
    %v2806 = vpop.f32.mrb[0].mxu0
    %v2807 = vadd.f32 %v2550, %v2806
    %v2808 = vpop.f32.mrb[0].mxu0
    %v2809 = vadd.f32 %v2552, %v2808
    %2810 = vmatprep.mubr.f32.mxu0 %v2346
    %2811 = vmatmul.mubr.f32.gmra.mrb[0].mxu0 %v2345
    %v2812 = vpop.f32.mrb[0].mxu0
    %v2813 = vadd.f32 %v2556, %v2812
    %v2814 = vpop.f32.mrb[0].mxu0
    %v2815 = vadd.f32 %v2558, %v2814
    %2816 = vmatprep.mubr.f32.mxu0 %v2348
    %2817 = vmatmul.mubr.f32.gmra.mrb[0].mxu0 %v2347
    %v2818 = vpop.f32.mrb[0].mxu0
    %v2819 = vadd.f32 %v2562, %v2818
    %v2820 = vpop.f32.mrb[0].mxu0
    %v2821 = vadd.f32 %v2564, %v2820
    %2822 = vmatprep.mubr.f32.mxu0 %v2350
    %2823 = vmatmul.mubr.f32.gmra.mrb[0].mxu0 %v2349
    %v2824 = vpop.f32.mrb[0].mxu0
    %v2825 = vadd.f32 %v2568, %v2824
    %v2826 = vpop.f32.mrb[0].mxu0
    %v2827 = vadd.f32 %v2570, %v2826
    %2828 = vmatprep.mubr.f32.mxu0 %v2352
    %2829 = vmatmul.mubr.f32.gmra.mrb[0].mxu0 %v2351
    %v2830 = vpop.f32.mrb[0].mxu0
    %v2831 = vadd.f32 %v2574, %v2830
    %v2832 = vpop.f32.mrb[0].mxu0
    %v2833 = vadd.f32 %v2576, %v2832
    %2834 = vmatprep.mubr.f32.mxu0 %v2354
    %2835 = vmatmul.mubr.f32.gmra.mrb[0].mxu0 %v2353
    %v2836 = vpop.f32.mrb[0].mxu0
    %v2837 = vadd.f32 %v2580, %v2836
    %v2838 = vpop.f32.mrb[0].mxu0
    %v2839 = vadd.f32 %v2582, %v2838
    %2840 = vmatprep.mubr.f32.mxu0 %v2356
    %2841 = vmatmul.mubr.f32.gmra.mrb[0].mxu0 %v2355
    %v2842 = vpop.f32.mrb[0].mxu0
    %v2843 = vadd.f32 %v2586, %v2842
    %v2844 = vpop.f32.mrb[0].mxu0
    %v2845 = vadd.f32 %v2588, %v2844
    %2846 = vmatprep.mubr.f32.mxu0 %v2358
    %2847 = vmatmul.mubr.f32.gmra.mrb[0].mxu0 %v2357
    %v2848 = vpop.f32.mrb[0].mxu0
    %v2849 = vadd.f32 %v2592, %v2848
    %v2850 = vpop.f32.mrb[0].mxu0
    %v2851 = vadd.f32 %v2594, %v2850
    %2852 = vmatprep.mubr.f32.mxu0 %v2360
    %2853 = vmatmul.mubr.f32.gmra.mrb[0].mxu0 %v2359
    %v2854 = vpop.f32.mrb[0].mxu0
    %v2855 = vadd.f32 %v2598, %v2854
    %v2856 = vpop.f32.mrb[0].mxu0
    %v2857 = vadd.f32 %v2600, %v2856
    %2858 = vmatprep.mubr.f32.mxu0 %v2362
    %2859 = vmatmul.mubr.f32.gmra.mrb[0].mxu0 %v2361
    %v2860 = vpop.f32.mrb[0].mxu0
    %v2861 = vadd.f32 %v2604, %v2860
    %v2862 = vpop.f32.mrb[0].mxu0
    %v2863 = vadd.f32 %v2606, %v2862
    %2864 = vmatprep.mubr.f32.mxu0 %v2364
    %2865 = vmatmul.mubr.f32.gmra.mrb[0].mxu0 %v2363
    %v2866 = vpop.f32.mrb[0].mxu0
    %v2867 = vadd.f32 %v2610, %v2866
    %v2868 = vpop.f32.mrb[0].mxu0
    %v2869 = vadd.f32 %v2612, %v2868
    %2870 = vmatprep.mubr.f32.mxu0 %v2366
    %2871 = vmatmul.mubr.f32.gmra.mrb[0].mxu0 %v2365
    %v2872 = vpop.f32.mrb[0].mxu0
    %v2873 = vadd.f32 %v2616, %v2872
    %v2874 = vpop.f32.mrb[0].mxu0
    %v2875 = vadd.f32 %v2618, %v2874
    %2876 = vmatprep.mubr.f32.mxu0 %v2368
    %2877 = vmatmul.mubr.f32.gmra.mrb[0].mxu0 %v2367
    %v2878 = vpop.f32.mrb[0].mxu0
    %v2879 = vadd.f32 %v2622, %v2878
    %v2880 = vpop.f32.mrb[0].mxu0
    %v2881 = vadd.f32 %v2624, %v2880
    %2882 = vmatprep.mubr.f32.mxu0 %v2370
    %2883 = vmatmul.mubr.f32.gmra.mrb[0].mxu0 %v2369
    %v2884 = vpop.f32.mrb[0].mxu0
    %v2885 = vadd.f32 %v2628, %v2884
    %v2886 = vpop.f32.mrb[0].mxu0
    %v2887 = vadd.f32 %v2630, %v2886
    %2888 = vmatprep.mubr.f32.mxu0 %v2372
    %2889 = vmatmul.mubr.f32.gmra.mrb[0].mxu0 %v2371
    %v2890 = vpop.f32.mrb[0].mxu0
    %v2891 = vadd.f32 %v2634, %v2890
    %v2892 = vpop.f32.mrb[0].mxu0
    %v2893 = vadd.f32 %v2636, %v2892
    %2894 = vmatprep.mubr.f32.mxu0 %v2374
    %2895 = vmatmul.mubr.f32.gmra.mrb[0].mxu0 %v2373
    %v2896 = vpop.f32.mrb[0].mxu0
    %v2897 = vadd.f32 %v2640, %v2896
    %v2898 = vpop.f32.mrb[0].mxu0
    %v2899 = vadd.f32 %v2642, %v2898
    %2900 = vmatprep.mubr.f32.mxu0 %v2376
    %2901 = vmatmul.mubr.f32.gmra.mrb[0].mxu0 %v2375
    %v2902 = vpop.f32.mrb[0].mxu0
    %v2903 = vadd.f32 %v2646, %v2902
    %v2904 = vpop.f32.mrb[0].mxu0
    %v2905 = vadd.f32 %v2648, %v2904
    %2906 = vmatprep.mubr.f32.mxu0 %v2378
    %2907 = vmatmul.mubr.f32.gmra.mrb[0].mxu0 %v2377
    %v2908 = vpop.f32.mrb[0].mxu0
    %v2909 = vadd.f32 %v2652, %v2908
    %v2910 = vpop.f32.mrb[0].mxu0
    %v2911 = vadd.f32 %v2654, %v2910
    %2912 = vmatprep.mubr.f32.mxu0 %v2380
    %2913 = vmatmul.mubr.f32.gmra.mrb[0].mxu0 %v2379
    %v2914 = vpop.f32.mrb[0].mxu0
    %v2915 = vadd.f32 %v2658, %v2914
    %v2916 = vpop.f32.mrb[0].mxu0
    %v2917 = vadd.f32 %v2660, %v2916
    %2918 = vmatprep.mubr.f32.mxu0 %v2382
    %2919 = vmatmul.mubr.f32.gmra.mrb[0].mxu0 %v2381
    %v2920 = vpop.f32.mrb[0].mxu0
    %v2921 = vadd.f32 %v2664, %v2920
    %v2922 = vpop.f32.mrb[0].mxu0
    %v2923 = vadd.f32 %v2666, %v2922
    %2924 = vmatprep.mubr.f32.mxu0 %v2384
    %2925 = vmatmul.mubr.f32.gmra.mrb[0].mxu0 %v2383
    %v2926 = vpop.f32.mrb[0].mxu0
    %v2927 = vadd.f32 %v2670, %v2926
    %v2928 = vpop.f32.mrb[0].mxu0
    %v2929 = vadd.f32 %v2672, %v2928
    %2930 = vmatprep.mubr.f32.mxu0 %v2386
    %2931 = vmatmul.mubr.f32.gmra.mrb[0].mxu0 %v2385
    %v2932 = vpop.f32.mrb[0].mxu0
    %v2933 = vadd.f32 %v2676, %v2932
    %v2934 = vpop.f32.mrb[0].mxu0
    %v2935 = vadd.f32 %v2678, %v2934
    %2936 = vmatprep.mubr.f32.mxu0 %v2388
    %2937 = vmatmul.mubr.f32.gmra.mrb[0].mxu0 %v2387
    %v2938 = vpop.f32.mrb[0].mxu0
    %v2939 = vadd.f32 %v2682, %v2938
    %v2940 = vpop.f32.mrb[0].mxu0
    %v2941 = vadd.f32 %v2684, %v2940
    %2942 = vmatprep.mubr.f32.mxu0 %v2390
    %2943 = vmatmul.mubr.f32.gmra.mrb[0].mxu0 %v2389
    %v2944 = vpop.f32.mrb[0].mxu0
    %v2945 = vadd.f32 %v2688, %v2944
    %v2946 = vpop.f32.mrb[0].mxu0
    %v2947 = vadd.f32 %v2690, %v2946
    %2948 = vmatprep.mubr.f32.mxu0 %v2392
    %2949 = vmatmul.mubr.f32.gmra.mrb[0].mxu0 %v2391
    %v2950 = vpop.f32.mrb[0].mxu0
    %v2951 = vadd.f32 %v2694, %v2950
    %v2952 = vpop.f32.mrb[0].mxu0
    %v2953 = vadd.f32 %v2696, %v2952
    %2954 = vmatprep.mubr.f32.mxu0 %v2394
    %2955 = vmatmul.mubr.f32.gmra.mrb[0].mxu0 %v2393
    %v2956 = vpop.f32.mrb[0].mxu0
    %v2957 = vadd.f32 %v2700, %v2956
    %v2958 = vpop.f32.mrb[0].mxu0
    %v2959 = vadd.f32 %v2702, %v2958
    %2960 = vmatprep.mubr.f32.mxu0 %v2396
    %2961 = vmatmul.mubr.f32.gmra.mrb[0].mxu0 %v2395
    %v2962 = vpop.f32.mrb[0].mxu0
    %v2963 = vadd.f32 %v2706, %v2962
    %v2964 = vpop.f32.mrb[0].mxu0
    %v2965 = vadd.f32 %v2708, %v2964
    %2966 = vmatprep.mubr.f32.mxu0 %v2398
    %2967 = vmatmul.mubr.f32.gmra.mrb[0].mxu0 %v2397
    %v2968 = vpop.f32.mrb[0].mxu0
    %v2969 = vadd.f32 %v2712, %v2968
    %v2970 = vpop.f32.mrb[0].mxu0
    %v2971 = vadd.f32 %v2714, %v2970
    %2972 = vmatprep.mubr.f32.mxu0 %v2400
    %2973 = vmatmul.mubr.f32.gmra.mrb[0].mxu0 %v2399
    %v2974 = vpop.f32.mrb[0].mxu0
    %v2975 = vadd.f32 %v2718, %v2974
    %v2976 = vpop.f32.mrb[0].mxu0
    %v2977 = vadd.f32 %v2720, %v2976
    %2978 = vdwg.mxu0
    %v2979 = vld [vmem:[%s2 + $0x3d0] sm:$0xff]
    %v2980 = vld [vmem:[%s2 + $0x3d8] sm:$0xff]
    %v2981 = vld [vmem:[%s2 + $0x3e0] sm:$0xff]
    %v2982 = vld [vmem:[%s2 + $0x3e8] sm:$0xff]
    %v2983 = vld [vmem:[%s2 + $0x3f0] sm:$0xff]
    %v2984 = vld [vmem:[%s2 + $0x3f8] sm:$0xff]
    %v2985 = vld [vmem:[%s2 + $0x400] sm:$0xff]
    %v2986 = vld [vmem:[%s2 + $0x408] sm:$0xff]
    %v2987 = vld [vmem:[%s2 + $0x410] sm:$0xff]
    %v2988 = vld [vmem:[%s2 + $0x418] sm:$0xff]
    %v2989 = vld [vmem:[%s2 + $0x420] sm:$0xff]
    %v2990 = vld [vmem:[%s2 + $0x428] sm:$0xff]
    %v2991 = vld [vmem:[%s2 + $0x430] sm:$0xff]
    %v2992 = vld [vmem:[%s2 + $0x438] sm:$0xff]
    %v2993 = vld [vmem:[%s2 + $0x440] sm:$0xff]
    %v2994 = vld [vmem:[%s2 + $0x448] sm:$0xff]
    %v2995 = vld [vmem:[%s2 + $0x450] sm:$0xff]
    %v2996 = vld [vmem:[%s2 + $0x458] sm:$0xff]
    %v2997 = vld [vmem:[%s2 + $0x460] sm:$0xff]
    %v2998 = vld [vmem:[%s2 + $0x468] sm:$0xff]
    %v2999 = vld [vmem:[%s2 + $0x470] sm:$0xff]
    %v3000 = vld [vmem:[%s2 + $0x478] sm:$0xff]
    %v3001 = vld [vmem:[%s2 + $0x480] sm:$0xff]
    %v3002 = vld [vmem:[%s2 + $0x488] sm:$0xff]
    %v3003 = vld [vmem:[%s2 + $0x490] sm:$0xff]
    %v3004 = vld [vmem:[%s2 + $0x498] sm:$0xff]
    %v3005 = vld [vmem:[%s2 + $0x4a0] sm:$0xff]
    %v3006 = vld [vmem:[%s2 + $0x4a8] sm:$0xff]
    %v3007 = vld [vmem:[%s2 + $0x4b0] sm:$0xff]
    %v3008 = vld [vmem:[%s2 + $0x4b8] sm:$0xff]
    %v3009 = vld [vmem:[%s2 + $0x4c0] sm:$0xff]
    %v3010 = vld [vmem:[%s2 + $0x4c8] sm:$0xff]
    %3012 = vset.pattern.permute.xlu0 0
    %3013 = vperm.xlu0 %3012, %v2979
    %v3014 = vpop.permute.xlu0 %3013
    %3017 = vset.pattern.permute.xlu0 0
    %3018 = vperm.xlu0 %3017, %v2980
    %v3019 = vpop.permute.xlu0 %3018
    %3022 = vset.pattern.permute.xlu0 0
    %3023 = vperm.xlu0 %3022, %v2981
    %v3024 = vpop.permute.xlu0 %3023
    %3027 = vset.pattern.permute.xlu0 0
    %3028 = vperm.xlu0 %3027, %v2982
    %v3029 = vpop.permute.xlu0 %3028
    %3032 = vset.pattern.permute.xlu0 0
    %3033 = vperm.xlu0 %3032, %v2983
    %v3034 = vpop.permute.xlu0 %3033
    %3037 = vset.pattern.permute.xlu0 0
    %3038 = vperm.xlu0 %3037, %v2984
    %v3039 = vpop.permute.xlu0 %3038
    %3042 = vset.pattern.permute.xlu0 0
    %3043 = vperm.xlu0 %3042, %v2985
    %v3044 = vpop.permute.xlu0 %3043
    %3047 = vset.pattern.permute.xlu0 0
    %3048 = vperm.xlu0 %3047, %v2986
    %v3049 = vpop.permute.xlu0 %3048
    %3052 = vset.pattern.permute.xlu0 0
    %3053 = vperm.xlu0 %3052, %v2987
    %v3054 = vpop.permute.xlu0 %3053
    %3057 = vset.pattern.permute.xlu0 0
    %3058 = vperm.xlu0 %3057, %v2988
    %v3059 = vpop.permute.xlu0 %3058
    %3062 = vset.pattern.permute.xlu0 0
    %3063 = vperm.xlu0 %3062, %v2989
    %v3064 = vpop.permute.xlu0 %3063
    %3067 = vset.pattern.permute.xlu0 0
    %3068 = vperm.xlu0 %3067, %v2990
    %v3069 = vpop.permute.xlu0 %3068
    %3072 = vset.pattern.permute.xlu0 0
    %3073 = vperm.xlu0 %3072, %v2991
    %v3074 = vpop.permute.xlu0 %3073
    %3077 = vset.pattern.permute.xlu0 0
    %3078 = vperm.xlu0 %3077, %v2992
    %v3079 = vpop.permute.xlu0 %3078
    %3082 = vset.pattern.permute.xlu0 0
    %3083 = vperm.xlu0 %3082, %v2993
    %v3084 = vpop.permute.xlu0 %3083
    %3087 = vset.pattern.permute.xlu0 0
    %3088 = vperm.xlu0 %3087, %v2994
    %v3089 = vpop.permute.xlu0 %3088
    %3092 = vset.pattern.permute.xlu0 0
    %3093 = vperm.xlu0 %3092, %v2995
    %v3094 = vpop.permute.xlu0 %3093
    %3097 = vset.pattern.permute.xlu0 0
    %3098 = vperm.xlu0 %3097, %v2996
    %v3099 = vpop.permute.xlu0 %3098
    %3102 = vset.pattern.permute.xlu0 0
    %3103 = vperm.xlu0 %3102, %v2997
    %v3104 = vpop.permute.xlu0 %3103
    %3107 = vset.pattern.permute.xlu0 0
    %3108 = vperm.xlu0 %3107, %v2998
    %v3109 = vpop.permute.xlu0 %3108
    %3112 = vset.pattern.permute.xlu0 0
    %3113 = vperm.xlu0 %3112, %v2999
    %v3114 = vpop.permute.xlu0 %3113
    %3117 = vset.pattern.permute.xlu0 0
    %3118 = vperm.xlu0 %3117, %v3000
    %v3119 = vpop.permute.xlu0 %3118
    %3122 = vset.pattern.permute.xlu0 0
    %3123 = vperm.xlu0 %3122, %v3001
    %v3124 = vpop.permute.xlu0 %3123
    %3127 = vset.pattern.permute.xlu0 0
    %3128 = vperm.xlu0 %3127, %v3002
    %v3129 = vpop.permute.xlu0 %3128
    %3132 = vset.pattern.permute.xlu0 0
    %3133 = vperm.xlu0 %3132, %v3003
    %v3134 = vpop.permute.xlu0 %3133
    %3137 = vset.pattern.permute.xlu0 0
    %3138 = vperm.xlu0 %3137, %v3004
    %v3139 = vpop.permute.xlu0 %3138
    %3142 = vset.pattern.permute.xlu0 0
    %3143 = vperm.xlu0 %3142, %v3005
    %v3144 = vpop.permute.xlu0 %3143
    %3147 = vset.pattern.permute.xlu0 0
    %3148 = vperm.xlu0 %3147, %v3006
    %v3149 = vpop.permute.xlu0 %3148
    %3152 = vset.pattern.permute.xlu0 0
    %3153 = vperm.xlu0 %3152, %v3007
    %v3154 = vpop.permute.xlu0 %3153
    %3157 = vset.pattern.permute.xlu0 0
    %3158 = vperm.xlu0 %3157, %v3008
    %v3159 = vpop.permute.xlu0 %3158
    %3162 = vset.pattern.permute.xlu0 0
    %3163 = vperm.xlu0 %3162, %v3009
    %v3164 = vpop.permute.xlu0 %3163
    %3167 = vset.pattern.permute.xlu0 0
    %3168 = vperm.xlu0 %3167, %v3010
    %v3169 = vpop.permute.xlu0 %3168
    %v3171 = vadd.f32 %v2789, %v3014
    %v3172 = vadd.f32 %v2791, %v3014
    %v3173 = vadd.f32 %v2795, %v3019
    %v3174 = vadd.f32 %v2797, %v3019
    %v3175 = vadd.f32 %v2801, %v3024
    %v3176 = vadd.f32 %v2803, %v3024
    %v3177 = vadd.f32 %v2807, %v3029
    %v3178 = vadd.f32 %v2809, %v3029
    %v3179 = vadd.f32 %v2813, %v3034
    %v3180 = vadd.f32 %v2815, %v3034
    %v3181 = vadd.f32 %v2819, %v3039
    %v3182 = vadd.f32 %v2821, %v3039
    %v3183 = vadd.f32 %v2825, %v3044
    %v3184 = vadd.f32 %v2827, %v3044
    %v3185 = vadd.f32 %v2831, %v3049
    %v3186 = vadd.f32 %v2833, %v3049
    %v3187 = vadd.f32 %v2837, %v3054
    %v3188 = vadd.f32 %v2839, %v3054
    %v3189 = vadd.f32 %v2843, %v3059
    %v3190 = vadd.f32 %v2845, %v3059
    %v3191 = vadd.f32 %v2849, %v3064
    %v3192 = vadd.f32 %v2851, %v3064
    %v3193 = vadd.f32 %v2855, %v3069
    %v3194 = vadd.f32 %v2857, %v3069
    %v3195 = vadd.f32 %v2861, %v3074
    %v3196 = vadd.f32 %v2863, %v3074
    %v3197 = vadd.f32 %v2867, %v3079
    %v3198 = vadd.f32 %v2869, %v3079
    %v3199 = vadd.f32 %v2873, %v3084
    %v3200 = vadd.f32 %v2875, %v3084
    %v3201 = vadd.f32 %v2879, %v3089
    %v3202 = vadd.f32 %v2881, %v3089
    %v3203 = vadd.f32 %v2885, %v3094
    %v3204 = vadd.f32 %v2887, %v3094
    %v3205 = vadd.f32 %v2891, %v3099
    %v3206 = vadd.f32 %v2893, %v3099
    %v3207 = vadd.f32 %v2897, %v3104
    %v3208 = vadd.f32 %v2899, %v3104
    %v3209 = vadd.f32 %v2903, %v3109
    %v3210 = vadd.f32 %v2905, %v3109
    %v3211 = vadd.f32 %v2909, %v3114
    %v3212 = vadd.f32 %v2911, %v3114
    %v3213 = vadd.f32 %v2915, %v3119
    %v3214 = vadd.f32 %v2917, %v3119
    %v3215 = vadd.f32 %v2921, %v3124
    %v3216 = vadd.f32 %v2923, %v3124
    %v3217 = vadd.f32 %v2927, %v3129
    %v3218 = vadd.f32 %v2929, %v3129
    %v3219 = vadd.f32 %v2933, %v3134
    %v3220 = vadd.f32 %v2935, %v3134
    %v3221 = vadd.f32 %v2939, %v3139
    %v3222 = vadd.f32 %v2941, %v3139
    %v3223 = vadd.f32 %v2945, %v3144
    %v3224 = vadd.f32 %v2947, %v3144
    %v3225 = vadd.f32 %v2951, %v3149
    %v3226 = vadd.f32 %v2953, %v3149
    %v3227 = vadd.f32 %v2957, %v3154
    %v3228 = vadd.f32 %v2959, %v3154
    %v3229 = vadd.f32 %v2963, %v3159
    %v3230 = vadd.f32 %v2965, %v3159
    %v3231 = vadd.f32 %v2969, %v3164
    %v3232 = vadd.f32 %v2971, %v3164
    %v3233 = vadd.f32 %v2975, %v3169
    %v3234 = vadd.f32 %v2977, %v3169
    %v3235 = vmax.f32 %v3171, 0.0
    %v3236 = vmax.f32 %v3172, 0.0
    %v3237 = vmax.f32 %v3173, 0.0
    %v3238 = vmax.f32 %v3174, 0.0
    %v3239 = vmax.f32 %v3175, 0.0
    %v3240 = vmax.f32 %v3176, 0.0
    %v3241 = vmax.f32 %v3177, 0.0
    %v3242 = vmax.f32 %v3178, 0.0
    %v3243 = vmax.f32 %v3179, 0.0
    %v3244 = vmax.f32 %v3180, 0.0
    %v3245 = vmax.f32 %v3181, 0.0
    %v3246 = vmax.f32 %v3182, 0.0
    %v3247 = vmax.f32 %v3183, 0.0
    %v3248 = vmax.f32 %v3184, 0.0
    %v3249 = vmax.f32 %v3185, 0.0
    %v3250 = vmax.f32 %v3186, 0.0
    %v3251 = vmax.f32 %v3187, 0.0
    %v3252 = vmax.f32 %v3188, 0.0
    %v3253 = vmax.f32 %v3189, 0.0
    %v3254 = vmax.f32 %v3190, 0.0
    %v3255 = vmax.f32 %v3191, 0.0
    %v3256 = vmax.f32 %v3192, 0.0
    %v3257 = vmax.f32 %v3193, 0.0
    %v3258 = vmax.f32 %v3194, 0.0
    %v3259 = vmax.f32 %v3195, 0.0
    %v3260 = vmax.f32 %v3196, 0.0
    %v3261 = vmax.f32 %v3197, 0.0
    %v3262 = vmax.f32 %v3198, 0.0
    %v3263 = vmax.f32 %v3199, 0.0
    %v3264 = vmax.f32 %v3200, 0.0
    %v3265 = vmax.f32 %v3201, 0.0
    %v3266 = vmax.f32 %v3202, 0.0
    %v3267 = vmax.f32 %v3203, 0.0
    %v3268 = vmax.f32 %v3204, 0.0
    %v3269 = vmax.f32 %v3205, 0.0
    %v3270 = vmax.f32 %v3206, 0.0
    %v3271 = vmax.f32 %v3207, 0.0
    %v3272 = vmax.f32 %v3208, 0.0
    %v3273 = vmax.f32 %v3209, 0.0
    %v3274 = vmax.f32 %v3210, 0.0
    %v3275 = vmax.f32 %v3211, 0.0
    %v3276 = vmax.f32 %v3212, 0.0
    %v3277 = vmax.f32 %v3213, 0.0
    %v3278 = vmax.f32 %v3214, 0.0
    %v3279 = vmax.f32 %v3215, 0.0
    %v3280 = vmax.f32 %v3216, 0.0
    %v3281 = vmax.f32 %v3217, 0.0
    %v3282 = vmax.f32 %v3218, 0.0
    %v3283 = vmax.f32 %v3219, 0.0
    %v3284 = vmax.f32 %v3220, 0.0
    %v3285 = vmax.f32 %v3221, 0.0
    %v3286 = vmax.f32 %v3222, 0.0
    %v3287 = vmax.f32 %v3223, 0.0
    %v3288 = vmax.f32 %v3224, 0.0
    %v3289 = vmax.f32 %v3225, 0.0
    %v3290 = vmax.f32 %v3226, 0.0
    %v3291 = vmax.f32 %v3227, 0.0
    %v3292 = vmax.f32 %v3228, 0.0
    %v3293 = vmax.f32 %v3229, 0.0
    %v3294 = vmax.f32 %v3230, 0.0
    %v3295 = vmax.f32 %v3231, 0.0
    %v3296 = vmax.f32 %v3232, 0.0
    %v3297 = vmax.f32 %v3233, 0.0
    %v3298 = vmax.f32 %v3234, 0.0
    %v3299 = vld [vmem:[#allocation2 + $0xba0] sm:$0xff]
    %v3300 = vld [vmem:[#allocation2 + $0xba8] sm:$0xff]
    %v3301 = vld [vmem:[#allocation2 + $0xbb0] sm:$0xff]
    %v3302 = vld [vmem:[#allocation2 + $0xbb8] sm:$0xff]
    %v3303 = vld [vmem:[#allocation2 + $0xbc0] sm:$0xff]
    %v3304 = vld [vmem:[#allocation2 + $0xbc8] sm:$0xff]
    %v3305 = vld [vmem:[#allocation2 + $0xbd0] sm:$0xff]
    %v3306 = vld [vmem:[#allocation2 + $0xbd8] sm:$0xff]
    %v3307 = vld [vmem:[#allocation2 + $0xbe0] sm:$0xff]
    %v3308 = vld [vmem:[#allocation2 + $0xbe8] sm:$0xff]
    %v3309 = vld [vmem:[#allocation2 + $0xbf0] sm:$0xff]
    %v3310 = vld [vmem:[#allocation2 + $0xbf8] sm:$0xff]
    %v3311 = vld [vmem:[#allocation2 + $0xc00] sm:$0xff]
    %v3312 = vld [vmem:[#allocation2 + $0xc08] sm:$0xff]
    %v3313 = vld [vmem:[#allocation2 + $0xc10] sm:$0xff]
    %v3314 = vld [vmem:[#allocation2 + $0xc18] sm:$0xff]
    %v3315 = vld [vmem:[#allocation2 + $0xc20] sm:$0xff]
    %v3316 = vld [vmem:[#allocation2 + $0xc28] sm:$0xff]
    %v3317 = vld [vmem:[#allocation2 + $0xc30] sm:$0xff]
    %v3318 = vld [vmem:[#allocation2 + $0xc38] sm:$0xff]
    %v3319 = vld [vmem:[#allocation2 + $0xc40] sm:$0xff]
    %v3320 = vld [vmem:[#allocation2 + $0xc48] sm:$0xff]
    %v3321 = vld [vmem:[#allocation2 + $0xc50] sm:$0xff]
    %v3322 = vld [vmem:[#allocation2 + $0xc58] sm:$0xff]
    %v3323 = vld [vmem:[#allocation2 + $0xc60] sm:$0xff]
    %v3324 = vld [vmem:[#allocation2 + $0xc68] sm:$0xff]
    %v3325 = vld [vmem:[#allocation2 + $0xc70] sm:$0xff]
    %v3326 = vld [vmem:[#allocation2 + $0xc78] sm:$0xff]
    %v3327 = vld [vmem:[#allocation2 + $0xc80] sm:$0xff]
    %v3328 = vld [vmem:[#allocation2 + $0xc88] sm:$0xff]
    %v3329 = vld [vmem:[#allocation2 + $0xc90] sm:$0xff]
    %v3330 = vld [vmem:[#allocation2 + $0xc98] sm:$0xff]
    %v3331 = vld [vmem:[%s2 + $0x5d0] sm:$0xff]
    %v3332 = vld [vmem:[%s2 + $0x5d8] sm:$0xff]
    %v3333 = vld [vmem:[%s2 + $0x5e0] sm:$0xff]
    %v3334 = vld [vmem:[%s2 + $0x5e8] sm:$0xff]
    %v3335 = vld [vmem:[%s2 + $0x5f0] sm:$0xff]
    %v3336 = vld [vmem:[%s2 + $0x5f8] sm:$0xff]
    %v3337 = vld [vmem:[%s2 + $0x600] sm:$0xff]
    %v3338 = vld [vmem:[%s2 + $0x608] sm:$0xff]
    %v3339 = vld [vmem:[%s2 + $0x610] sm:$0xff]
    %v3340 = vld [vmem:[%s2 + $0x618] sm:$0xff]
    %v3341 = vld [vmem:[%s2 + $0x620] sm:$0xff]
    %v3342 = vld [vmem:[%s2 + $0x628] sm:$0xff]
    %v3343 = vld [vmem:[%s2 + $0x630] sm:$0xff]
    %v3344 = vld [vmem:[%s2 + $0x638] sm:$0xff]
    %v3345 = vld [vmem:[%s2 + $0x640] sm:$0xff]
    %v3346 = vld [vmem:[%s2 + $0x648] sm:$0xff]
    %3348 = vset.pattern.permute.xlu0 0
    %3349 = vperm.xlu0 %3348, %v3331
    %v3350 = vpop.permute.xlu0 %3349
    %3353 = vset.pattern.permute.xlu0 0
    %3354 = vperm.xlu0 %3353, %v3332
    %v3355 = vpop.permute.xlu0 %3354
    %3358 = vset.pattern.permute.xlu0 0
    %3359 = vperm.xlu0 %3358, %v3333
    %v3360 = vpop.permute.xlu0 %3359
    %3363 = vset.pattern.permute.xlu0 0
    %3364 = vperm.xlu0 %3363, %v3334
    %v3365 = vpop.permute.xlu0 %3364
    %3368 = vset.pattern.permute.xlu0 0
    %3369 = vperm.xlu0 %3368, %v3335
    %v3370 = vpop.permute.xlu0 %3369
    %3373 = vset.pattern.permute.xlu0 0
    %3374 = vperm.xlu0 %3373, %v3336
    %v3375 = vpop.permute.xlu0 %3374
    %3378 = vset.pattern.permute.xlu0 0
    %3379 = vperm.xlu0 %3378, %v3337
    %v3380 = vpop.permute.xlu0 %3379
    %3383 = vset.pattern.permute.xlu0 0
    %3384 = vperm.xlu0 %3383, %v3338
    %v3385 = vpop.permute.xlu0 %3384
    %3388 = vset.pattern.permute.xlu0 0
    %3389 = vperm.xlu0 %3388, %v3339
    %v3390 = vpop.permute.xlu0 %3389
    %3393 = vset.pattern.permute.xlu0 0
    %3394 = vperm.xlu0 %3393, %v3340
    %v3395 = vpop.permute.xlu0 %3394
    %3398 = vset.pattern.permute.xlu0 0
    %3399 = vperm.xlu0 %3398, %v3341
    %v3400 = vpop.permute.xlu0 %3399
    %3403 = vset.pattern.permute.xlu0 0
    %3404 = vperm.xlu0 %3403, %v3342
    %v3405 = vpop.permute.xlu0 %3404
    %3408 = vset.pattern.permute.xlu0 0
    %3409 = vperm.xlu0 %3408, %v3343
    %v3410 = vpop.permute.xlu0 %3409
    %3413 = vset.pattern.permute.xlu0 0
    %3414 = vperm.xlu0 %3413, %v3344
    %v3415 = vpop.permute.xlu0 %3414
    %3418 = vset.pattern.permute.xlu0 0
    %3419 = vperm.xlu0 %3418, %v3345
    %v3420 = vpop.permute.xlu0 %3419
    %3423 = vset.pattern.permute.xlu0 0
    %3424 = vperm.xlu0 %3423, %v3346
    %v3425 = vpop.permute.xlu0 %3424
    %3427 = vmatprep.subr.mxu0 %v3236
    %3428 = vmatpush1.msra.mxu0 %v3235
    %3429 = vmatprep.subr.mxu0 %v3238
    %3430 = vmatpush1.msra.mxu0 %v3237
    %3431 = vmatprep.subr.mxu0 %v3240
    %3432 = vmatpush1.msra.mxu0 %v3239
    %3433 = vmatprep.subr.mxu0 %v3242
    %3434 = vmatpush1.msra.mxu0 %v3241
    %3435 = vmatprep.subr.mxu0 %v3244
    %3436 = vmatpush1.msra.mxu0 %v3243
    %3437 = vmatprep.subr.mxu0 %v3246
    %3438 = vmatpush1.msra.mxu0 %v3245
    %3439 = vmatprep.subr.mxu0 %v3248
    %3440 = vmatpush1.msra.mxu0 %v3247
    %3441 = vmatprep.subr.mxu0 %v3250
    %3442 = vmatpush1.msra.mxu0 %v3249
    %3443 = vmatprep.subr.mxu0 %v3252
    %3444 = vmatpush1.msra.mxu0 %v3251
    %3445 = vmatprep.subr.mxu0 %v3254
    %3446 = vmatpush1.msra.mxu0 %v3253
    %3447 = vmatprep.subr.mxu0 %v3256
    %3448 = vmatpush1.msra.mxu0 %v3255
    %3449 = vmatprep.subr.mxu0 %v3258
    %3450 = vmatpush1.msra.mxu0 %v3257
    %3451 = vmatprep.subr.mxu0 %v3260
    %3452 = vmatpush1.msra.mxu0 %v3259
    %3453 = vmatprep.subr.mxu0 %v3262
    %3454 = vmatpush1.msra.mxu0 %v3261
    %3455 = vmatprep.subr.mxu0 %v3264
    %3456 = vmatpush1.msra.mxu0 %v3263
    %3457 = vmatprep.subr.mxu0 %v3266
    %3458 = vmatpush1.msra.mxu0 %v3265
    %3459 = vmatprep.subr.mxu0 %v3268
    %3460 = vmatpush1.msra.mxu0 %v3267
    %3461 = vmatprep.subr.mxu0 %v3270
    %3462 = vmatpush1.msra.mxu0 %v3269
    %3463 = vmatprep.subr.mxu0 %v3272
    %3464 = vmatpush1.msra.mxu0 %v3271
    %3465 = vmatprep.subr.mxu0 %v3274
    %3466 = vmatpush1.msra.mxu0 %v3273
    %3467 = vmatprep.subr.mxu0 %v3276
    %3468 = vmatpush1.msra.mxu0 %v3275
    %3469 = vmatprep.subr.mxu0 %v3278
    %3470 = vmatpush1.msra.mxu0 %v3277
    %3471 = vmatprep.subr.mxu0 %v3280
    %3472 = vmatpush1.msra.mxu0 %v3279
    %3473 = vmatprep.subr.mxu0 %v3282
    %3474 = vmatpush1.msra.mxu0 %v3281
    %3475 = vmatprep.subr.mxu0 %v3284
    %3476 = vmatpush1.msra.mxu0 %v3283
    %3477 = vmatprep.subr.mxu0 %v3286
    %3478 = vmatpush1.msra.mxu0 %v3285
    %3479 = vmatprep.subr.mxu0 %v3288
    %3480 = vmatpush1.msra.mxu0 %v3287
    %3481 = vmatprep.subr.mxu0 %v3290
    %3482 = vmatpush1.msra.mxu0 %v3289
    %3483 = vmatprep.subr.mxu0 %v3292
    %3484 = vmatpush1.msra.mxu0 %v3291
    %3485 = vmatprep.subr.mxu0 %v3294
    %3486 = vmatpush1.msra.mxu0 %v3293
    %3487 = vmatprep.subr.mxu0 %v3296
    %3488 = vmatpush1.msra.mxu0 %v3295
    %3489 = vmatprep.subr.mxu0 %v3298
    %3490 = vmatpush1.msra.mxu0 %v3297
    %3491 = vmatprep.mubr.f32.mxu0 %v3300
    %3492 = vmatmul.mubr.f32.gmra.mrb[0].mxu0 %v3299
    %v3493 = vpop.f32.mrb[0].mxu0
    %v3494 = vadd.f32 %v3350, %v3493
    %v3495 = vpop.f32.mrb[0].mxu0
    %v3496 = vadd.f32 %v3350, %v3495
    %3497 = vmatprep.mubr.f32.mxu0 %v3302
    %3498 = vmatmul.mubr.f32.gmra.mrb[0].mxu0 %v3301
    %v3499 = vpop.f32.mrb[0].mxu0
    %v3500 = vadd.f32 %v3355, %v3499
    %v3501 = vpop.f32.mrb[0].mxu0
    %v3502 = vadd.f32 %v3355, %v3501
    %3503 = vmatprep.mubr.f32.mxu0 %v3304
    %3504 = vmatmul.mubr.f32.gmra.mrb[0].mxu0 %v3303
    %v3505 = vpop.f32.mrb[0].mxu0
    %v3506 = vadd.f32 %v3360, %v3505
    %v3507 = vpop.f32.mrb[0].mxu0
    %v3508 = vadd.f32 %v3360, %v3507
    %3509 = vmatprep.mubr.f32.mxu0 %v3306
    %3510 = vmatmul.mubr.f32.gmra.mrb[0].mxu0 %v3305
    %v3511 = vpop.f32.mrb[0].mxu0
    %v3512 = vadd.f32 %v3365, %v3511
    %v3513 = vpop.f32.mrb[0].mxu0
    %v3514 = vadd.f32 %v3365, %v3513
    %3515 = vmatprep.mubr.f32.mxu0 %v3308
    %3516 = vmatmul.mubr.f32.gmra.mrb[0].mxu0 %v3307
    %v3517 = vpop.f32.mrb[0].mxu0
    %v3518 = vadd.f32 %v3370, %v3517
    %v3519 = vpop.f32.mrb[0].mxu0
    %v3520 = vadd.f32 %v3370, %v3519
    %3521 = vmatprep.mubr.f32.mxu0 %v3310
    %3522 = vmatmul.mubr.f32.gmra.mrb[0].mxu0 %v3309
    %v3523 = vpop.f32.mrb[0].mxu0
    %v3524 = vadd.f32 %v3375, %v3523
    %v3525 = vpop.f32.mrb[0].mxu0
    %v3526 = vadd.f32 %v3375, %v3525
    %3527 = vmatprep.mubr.f32.mxu0 %v3312
    %3528 = vmatmul.mubr.f32.gmra.mrb[0].mxu0 %v3311
    %v3529 = vpop.f32.mrb[0].mxu0
    %v3530 = vadd.f32 %v3380, %v3529
    %v3531 = vpop.f32.mrb[0].mxu0
    %v3532 = vadd.f32 %v3380, %v3531
    %3533 = vmatprep.mubr.f32.mxu0 %v3314
    %3534 = vmatmul.mubr.f32.gmra.mrb[0].mxu0 %v3313
    %v3535 = vpop.f32.mrb[0].mxu0
    %v3536 = vadd.f32 %v3385, %v3535
    %v3537 = vpop.f32.mrb[0].mxu0
    %v3538 = vadd.f32 %v3385, %v3537
    %3539 = vmatprep.mubr.f32.mxu0 %v3316
    %3540 = vmatmul.mubr.f32.gmra.mrb[0].mxu0 %v3315
    %v3541 = vpop.f32.mrb[0].mxu0
    %v3542 = vadd.f32 %v3390, %v3541
    %v3543 = vpop.f32.mrb[0].mxu0
    %v3544 = vadd.f32 %v3390, %v3543
    %3545 = vmatprep.mubr.f32.mxu0 %v3318
    %3546 = vmatmul.mubr.f32.gmra.mrb[0].mxu0 %v3317
    %v3547 = vpop.f32.mrb[0].mxu0
    %v3548 = vadd.f32 %v3395, %v3547
    %v3549 = vpop.f32.mrb[0].mxu0
    %v3550 = vadd.f32 %v3395, %v3549
    %3551 = vmatprep.mubr.f32.mxu0 %v3320
    %3552 = vmatmul.mubr.f32.gmra.mrb[0].mxu0 %v3319
    %v3553 = vpop.f32.mrb[0].mxu0
    %v3554 = vadd.f32 %v3400, %v3553
    %v3555 = vpop.f32.mrb[0].mxu0
    %v3556 = vadd.f32 %v3400, %v3555
    %3557 = vmatprep.mubr.f32.mxu0 %v3322
    %3558 = vmatmul.mubr.f32.gmra.mrb[0].mxu0 %v3321
    %v3559 = vpop.f32.mrb[0].mxu0
    %v3560 = vadd.f32 %v3405, %v3559
    %v3561 = vpop.f32.mrb[0].mxu0
    %v3562 = vadd.f32 %v3405, %v3561
    %3563 = vmatprep.mubr.f32.mxu0 %v3324
    %3564 = vmatmul.mubr.f32.gmra.mrb[0].mxu0 %v3323
    %v3565 = vpop.f32.mrb[0].mxu0
    %v3566 = vadd.f32 %v3410, %v3565
    %v3567 = vpop.f32.mrb[0].mxu0
    %v3568 = vadd.f32 %v3410, %v3567
    %3569 = vmatprep.mubr.f32.mxu0 %v3326
    %3570 = vmatmul.mubr.f32.gmra.mrb[0].mxu0 %v3325
    %v3571 = vpop.f32.mrb[0].mxu0
    %v3572 = vadd.f32 %v3415, %v3571
    %v3573 = vpop.f32.mrb[0].mxu0
    %v3574 = vadd.f32 %v3415, %v3573
    %3575 = vmatprep.mubr.f32.mxu0 %v3328
    %3576 = vmatmul.mubr.f32.gmra.mrb[0].mxu0 %v3327
    %v3577 = vpop.f32.mrb[0].mxu0
    %v3578 = vadd.f32 %v3420, %v3577
    %v3579 = vpop.f32.mrb[0].mxu0
    %v3580 = vadd.f32 %v3420, %v3579
    %3581 = vmatprep.mubr.f32.mxu0 %v3330
    %3582 = vmatmul.mubr.f32.gmra.mrb[0].mxu0 %v3329
    %v3583 = vpop.f32.mrb[0].mxu0
    %v3584 = vadd.f32 %v3425, %v3583
    %v3585 = vpop.f32.mrb[0].mxu0
    %v3586 = vadd.f32 %v3425, %v3585
    %3587 = vdwg.mxu0
    %v3588 = vmax.f32 %v3494, 0.0
    %v3589 = vmax.f32 %v3496, 0.0
    %v3590 = vmax.f32 %v3500, 0.0
    %v3591 = vmax.f32 %v3502, 0.0
    %v3592 = vmax.f32 %v3506, 0.0
    %v3593 = vmax.f32 %v3508, 0.0
    %v3594 = vmax.f32 %v3512, 0.0
    %v3595 = vmax.f32 %v3514, 0.0
    %v3596 = vmax.f32 %v3518, 0.0
    %v3597 = vmax.f32 %v3520, 0.0
    %v3598 = vmax.f32 %v3524, 0.0
    %v3599 = vmax.f32 %v3526, 0.0
    %v3600 = vmax.f32 %v3530, 0.0
    %v3601 = vmax.f32 %v3532, 0.0
    %v3602 = vmax.f32 %v3536, 0.0
    %v3603 = vmax.f32 %v3538, 0.0
    %v3604 = vmax.f32 %v3542, 0.0
    %v3605 = vmax.f32 %v3544, 0.0
    %v3606 = vmax.f32 %v3548, 0.0
    %v3607 = vmax.f32 %v3550, 0.0
    %v3608 = vmax.f32 %v3554, 0.0
    %v3609 = vmax.f32 %v3556, 0.0
    %v3610 = vmax.f32 %v3560, 0.0
    %v3611 = vmax.f32 %v3562, 0.0
    %v3612 = vmax.f32 %v3566, 0.0
    %v3613 = vmax.f32 %v3568, 0.0
    %v3614 = vmax.f32 %v3572, 0.0
    %v3615 = vmax.f32 %v3574, 0.0
    %v3616 = vmax.f32 %v3578, 0.0
    %v3617 = vmax.f32 %v3580, 0.0
    %v3618 = vmax.f32 %v3584, 0.0
    %v3619 = vmax.f32 %v3586, 0.0
    %v3620 = vld [vmem:[#allocation2 + $0xca0] sm:$0xff]
    %v3621 = vld [vmem:[#allocation2 + $0xcb0] sm:$0xff]
    %v3622 = vld [vmem:[#allocation2 + $0xcc0] sm:$0xff]
    %v3623 = vld [vmem:[#allocation2 + $0xcd0] sm:$0xff]
    %v3624 = vld [vmem:[#allocation2 + $0xce0] sm:$0xff]
    %v3625 = vld [vmem:[#allocation2 + $0xcf0] sm:$0xff]
    %v3626 = vld [vmem:[#allocation2 + $0xd00] sm:$0xff]
    %v3627 = vld [vmem:[#allocation2 + $0xd10] sm:$0xff]
    %v3628 = vld [vmem:[%s2 + $0x650] sm:$0xff]
    %v3629 = vld [vmem:[%s2 + $0x658] sm:$0xff]
    %v3630 = vld [vmem:[%s2 + $0x660] sm:$0xff]
    %v3631 = vld [vmem:[%s2 + $0x668] sm:$0xff]
    %v3632 = vld [vmem:[%s2 + $0x670] sm:$0xff]
    %v3633 = vld [vmem:[%s2 + $0x678] sm:$0xff]
    %v3634 = vld [vmem:[%s2 + $0x680] sm:$0xff]
    %v3635 = vld [vmem:[%s2 + $0x688] sm:$0xff]
    %3637 = vset.pattern.permute.xlu0 0
    %3638 = vperm.xlu0 %3637, %v3628
    %v3639 = vpop.permute.xlu0 %3638
    %3642 = vset.pattern.permute.xlu0 0
    %3643 = vperm.xlu0 %3642, %v3629
    %v3644 = vpop.permute.xlu0 %3643
    %3647 = vset.pattern.permute.xlu0 0
    %3648 = vperm.xlu0 %3647, %v3630
    %v3649 = vpop.permute.xlu0 %3648
    %3652 = vset.pattern.permute.xlu0 0
    %3653 = vperm.xlu0 %3652, %v3631
    %v3654 = vpop.permute.xlu0 %3653
    %3657 = vset.pattern.permute.xlu0 0
    %3658 = vperm.xlu0 %3657, %v3632
    %v3659 = vpop.permute.xlu0 %3658
    %3662 = vset.pattern.permute.xlu0 0
    %3663 = vperm.xlu0 %3662, %v3633
    %v3664 = vpop.permute.xlu0 %3663
    %3667 = vset.pattern.permute.xlu0 0
    %3668 = vperm.xlu0 %3667, %v3634
    %v3669 = vpop.permute.xlu0 %3668
    %3672 = vset.pattern.permute.xlu0 0
    %3673 = vperm.xlu0 %3672, %v3635
    %v3674 = vpop.permute.xlu0 %3673
    %3676 = vmatprep.subr.mxu0 %v3589
    %3677 = vmatpush1.msra.mxu0 %v3588
    %3678 = vmatprep.subr.mxu0 %v3591
    %3679 = vmatpush1.msra.mxu0 %v3590
    %3680 = vmatprep.subr.mxu0 %v3593
    %3681 = vmatpush1.msra.mxu0 %v3592
    %3682 = vmatprep.subr.mxu0 %v3595
    %3683 = vmatpush1.msra.mxu0 %v3594
    %3684 = vmatprep.subr.mxu0 %v3597
    %3685 = vmatpush1.msra.mxu0 %v3596
    %3686 = vmatprep.subr.mxu0 %v3599
    %3687 = vmatpush1.msra.mxu0 %v3598
    %3688 = vmatprep.subr.mxu0 %v3601
    %3689 = vmatpush1.msra.mxu0 %v3600
    %3690 = vmatprep.subr.mxu0 %v3603
    %3691 = vmatpush1.msra.mxu0 %v3602
    %3692 = vmatprep.subr.mxu0 %v3605
    %3693 = vmatpush1.msra.mxu0 %v3604
    %3694 = vmatprep.subr.mxu0 %v3607
    %3695 = vmatpush1.msra.mxu0 %v3606
    %3696 = vmatprep.subr.mxu0 %v3609
    %3697 = vmatpush1.msra.mxu0 %v3608
    %3698 = vmatprep.subr.mxu0 %v3611
    %3699 = vmatpush1.msra.mxu0 %v3610
    %3700 = vmatprep.subr.mxu0 %v3613
    %3701 = vmatpush1.msra.mxu0 %v3612
    %3702 = vmatprep.subr.mxu0 %v3615
    %3703 = vmatpush1.msra.mxu0 %v3614
    %3704 = vmatprep.subr.mxu0 %v3617
    %3705 = vmatpush1.msra.mxu0 %v3616
    %3706 = vmatprep.subr.mxu0 %v3619
    %3707 = vmatpush1.msra.mxu0 %v3618
    %3708 = vmatprep.subr.mxu0 0.0
    %3709 = vmatpush1.msra.mxu0 0.0
    %3710 = vmatprep.subr.mxu0 0.0
    %3711 = vmatpush1.msra.mxu0 0.0
    %3712 = vmatprep.subr.mxu0 0.0
    %3713 = vmatpush1.msra.mxu0 0.0
    %3714 = vmatprep.subr.mxu0 0.0
    %3715 = vmatpush1.msra.mxu0 0.0
    %3716 = vmatprep.subr.mxu0 0.0
    %3717 = vmatpush1.msra.mxu0 0.0
    %3718 = vmatprep.subr.mxu0 0.0
    %3719 = vmatpush1.msra.mxu0 0.0
    %3720 = vmatprep.subr.mxu0 0.0
    %3721 = vmatpush1.msra.mxu0 0.0
    %3722 = vmatprep.subr.mxu0 0.0
    %3723 = vmatpush1.msra.mxu0 0.0
    %3724 = vmatprep.subr.mxu0 0.0
    %3725 = vmatpush1.msra.mxu0 0.0
    %3726 = vmatprep.subr.mxu0 0.0
    %3727 = vmatpush1.msra.mxu0 0.0
    %3728 = vmatprep.subr.mxu0 0.0
    %3729 = vmatpush1.msra.mxu0 0.0
    %3730 = vmatprep.subr.mxu0 0.0
    %3731 = vmatpush1.msra.mxu0 0.0
    %3732 = vmatprep.subr.mxu0 0.0
    %3733 = vmatpush1.msra.mxu0 0.0
    %3734 = vmatprep.subr.mxu0 0.0
    %3735 = vmatpush1.msra.mxu0 0.0
    %3736 = vmatprep.subr.mxu0 0.0
    %3737 = vmatpush1.msra.mxu0 0.0
    %3738 = vmatprep.subr.mxu0 0.0
    %3739 = vmatpush1.msra.mxu0 0.0
    %3740 = vmatprep.mubr.f32.mxu0 0.0
    %3741 = vmatmul.mubr.f32.gmra.mrb[0].mxu0 %v3620
    %v3742 = vpop.f32.mrb[0].mxu0
    %v3743 = vadd.f32 %v3639, %v3742
    %v3744 = vpop.f32.mrb[0].mxu0
    %v3745 = vadd.f32 %v3639, %v3744
    %3746 = vmatprep.mubr.f32.mxu0 0.0
    %3747 = vmatmul.mubr.f32.gmra.mrb[0].mxu0 %v3621
    %v3748 = vpop.f32.mrb[0].mxu0
    %v3749 = vadd.f32 %v3644, %v3748
    %v3750 = vpop.f32.mrb[0].mxu0
    %v3751 = vadd.f32 %v3644, %v3750
    %3752 = vmatprep.mubr.f32.mxu0 0.0
    %3753 = vmatmul.mubr.f32.gmra.mrb[0].mxu0 %v3622
    %v3754 = vpop.f32.mrb[0].mxu0
    %v3755 = vadd.f32 %v3649, %v3754
    %v3756 = vpop.f32.mrb[0].mxu0
    %v3757 = vadd.f32 %v3649, %v3756
    %3758 = vmatprep.mubr.f32.mxu0 0.0
    %3759 = vmatmul.mubr.f32.gmra.mrb[0].mxu0 %v3623
    %v3760 = vpop.f32.mrb[0].mxu0
    %v3761 = vadd.f32 %v3654, %v3760
    %v3762 = vpop.f32.mrb[0].mxu0
    %v3763 = vadd.f32 %v3654, %v3762
    %3764 = vmatprep.mubr.f32.mxu0 0.0
    %3765 = vmatmul.mubr.f32.gmra.mrb[0].mxu0 %v3624
    %v3766 = vpop.f32.mrb[0].mxu0
    %v3767 = vadd.f32 %v3659, %v3766
    %v3768 = vpop.f32.mrb[0].mxu0
    %v3769 = vadd.f32 %v3659, %v3768
    %3770 = vmatprep.mubr.f32.mxu0 0.0
    %3771 = vmatmul.mubr.f32.gmra.mrb[0].mxu0 %v3625
    %v3772 = vpop.f32.mrb[0].mxu0
    %v3773 = vadd.f32 %v3664, %v3772
    %v3774 = vpop.f32.mrb[0].mxu0
    %v3775 = vadd.f32 %v3664, %v3774
    %3776 = vmatprep.mubr.f32.mxu0 0.0
    %3777 = vmatmul.mubr.f32.gmra.mrb[0].mxu0 %v3626
    %v3778 = vpop.f32.mrb[0].mxu0
    %v3779 = vadd.f32 %v3669, %v3778
    %v3780 = vpop.f32.mrb[0].mxu0
    %v3781 = vadd.f32 %v3669, %v3780
    %3782 = vmatprep.mubr.f32.mxu0 0.0
    %3783 = vmatmul.mubr.f32.gmra.mrb[0].mxu0 %v3627
    %v3784 = vpop.f32.mrb[0].mxu0
    %v3785 = vadd.f32 %v3674, %v3784
    %v3786 = vpop.f32.mrb[0].mxu0
    %v3787 = vadd.f32 %v3674, %v3786
    %3788 = vdwg.mxu0
    %v3789 = vmax.f32 %v3743, 0.0
    %v3790 = vmax.f32 %v3745, 0.0
    %v3791 = vmax.f32 %v3749, 0.0
    %v3792 = vmax.f32 %v3751, 0.0
    %v3793 = vmax.f32 %v3755, 0.0
    %v3794 = vmax.f32 %v3757, 0.0
    %v3795 = vmax.f32 %v3761, 0.0
    %v3796 = vmax.f32 %v3763, 0.0
    %v3797 = vmax.f32 %v3767, 0.0
    %v3798 = vmax.f32 %v3769, 0.0
    %v3799 = vmax.f32 %v3773, 0.0
    %v3800 = vmax.f32 %v3775, 0.0
    %v3801 = vmax.f32 %v3779, 0.0
    %v3802 = vmax.f32 %v3781, 0.0
    %v3803 = vmax.f32 %v3785, 0.0
    %v3804 = vmax.f32 %v3787, 0.0
    %v3805 = vld [vmem:[#allocation2 + $0xd20] sm:$0xff]
    %v3806 = vld [vmem:[#allocation2 + $0xd30] sm:$0xff]
    %v3807 = vld [vmem:[#allocation2 + $0xd40] sm:$0xff]
    %v3808 = vld [vmem:[#allocation2 + $0xd50] sm:$0xff]
    %v3809 = vld [vmem:[%s2 + $0x690] sm:$0xff]
    %v3810 = vld [vmem:[%s2 + $0x698] sm:$0xff]
    %v3811 = vld [vmem:[%s2 + $0x6a0] sm:$0xff]
    %v3812 = vld [vmem:[%s2 + $0x6a8] sm:$0xff]
    %3814 = vset.pattern.permute.xlu0 0
    %3815 = vperm.xlu0 %3814, %v3809
    %v3816 = vpop.permute.xlu0 %3815
    %3819 = vset.pattern.permute.xlu0 0
    %3820 = vperm.xlu0 %3819, %v3810
    %v3821 = vpop.permute.xlu0 %3820
    %3824 = vset.pattern.permute.xlu0 0
    %3825 = vperm.xlu0 %3824, %v3811
    %v3826 = vpop.permute.xlu0 %3825
    %3829 = vset.pattern.permute.xlu0 0
    %3830 = vperm.xlu0 %3829, %v3812
    %v3831 = vpop.permute.xlu0 %3830
    %v3834 = vsel %vm461, %v3805, 0
    %v3837 = vsel %vm461, %v3806, 0
    %v3840 = vsel %vm461, %v3807, 0
    %v3843 = vsel %vm461, %v3808, 0
    %3845 = vmatprep.subr.mxu0 %v3790
    %3846 = vmatpush1.msra.mxu0 %v3789
    %3847 = vmatprep.subr.mxu0 %v3792
    %3848 = vmatpush1.msra.mxu0 %v3791
    %3849 = vmatprep.subr.mxu0 %v3794
    %3850 = vmatpush1.msra.mxu0 %v3793
    %3851 = vmatprep.subr.mxu0 %v3796
    %3852 = vmatpush1.msra.mxu0 %v3795
    %3853 = vmatprep.subr.mxu0 %v3798
    %3854 = vmatpush1.msra.mxu0 %v3797
    %3855 = vmatprep.subr.mxu0 %v3800
    %3856 = vmatpush1.msra.mxu0 %v3799
    %3857 = vmatprep.subr.mxu0 %v3802
    %3858 = vmatpush1.msra.mxu0 %v3801
    %3859 = vmatprep.subr.mxu0 %v3804
    %3860 = vmatpush1.msra.mxu0 %v3803
    %3861 = vmatprep.subr.mxu0 0.0
    %3862 = vmatpush1.msra.mxu0 0.0
    %3863 = vmatprep.subr.mxu0 0.0
    %3864 = vmatpush1.msra.mxu0 0.0
    %3865 = vmatprep.subr.mxu0 0.0
    %3866 = vmatpush1.msra.mxu0 0.0
    %3867 = vmatprep.subr.mxu0 0.0
    %3868 = vmatpush1.msra.mxu0 0.0
    %3869 = vmatprep.subr.mxu0 0.0
    %3870 = vmatpush1.msra.mxu0 0.0
    %3871 = vmatprep.subr.mxu0 0.0
    %3872 = vmatpush1.msra.mxu0 0.0
    %3873 = vmatprep.subr.mxu0 0.0
    %3874 = vmatpush1.msra.mxu0 0.0
    %3875 = vmatprep.subr.mxu0 0.0
    %3876 = vmatpush1.msra.mxu0 0.0
    %3877 = vmatprep.subr.mxu0 0.0
    %3878 = vmatpush1.msra.mxu0 0.0
    %3879 = vmatprep.subr.mxu0 0.0
    %3880 = vmatpush1.msra.mxu0 0.0
    %3881 = vmatprep.subr.mxu0 0.0
    %3882 = vmatpush1.msra.mxu0 0.0
    %3883 = vmatprep.subr.mxu0 0.0
    %3884 = vmatpush1.msra.mxu0 0.0
    %3885 = vmatprep.subr.mxu0 0.0
    %3886 = vmatpush1.msra.mxu0 0.0
    %3887 = vmatprep.subr.mxu0 0.0
    %3888 = vmatpush1.msra.mxu0 0.0
    %3889 = vmatprep.subr.mxu0 0.0
    %3890 = vmatpush1.msra.mxu0 0.0
    %3891 = vmatprep.subr.mxu0 0.0
    %3892 = vmatpush1.msra.mxu0 0.0
    %3893 = vmatprep.subr.mxu0 0.0
    %3894 = vmatpush1.msra.mxu0 0.0
    %3895 = vmatprep.subr.mxu0 0.0
    %3896 = vmatpush1.msra.mxu0 0.0
    %3897 = vmatprep.subr.mxu0 0.0
    %3898 = vmatpush1.msra.mxu0 0.0
    %3899 = vmatprep.subr.mxu0 0.0
    %3900 = vmatpush1.msra.mxu0 0.0
    %3901 = vmatprep.subr.mxu0 0.0
    %3902 = vmatpush1.msra.mxu0 0.0
    %3903 = vmatprep.subr.mxu0 0.0
    %3904 = vmatpush1.msra.mxu0 0.0
    %3905 = vmatprep.subr.mxu0 0.0
    %3906 = vmatpush1.msra.mxu0 0.0
    %3907 = vmatprep.subr.mxu0 0.0
    %3908 = vmatpush1.msra.mxu0 0.0
    %3909 = vmatprep.mubr.f32.mxu0 0.0
    %3910 = vmatmul.mubr.f32.gmra.mrb[0].mxu0 %v3834
    %v3911 = vpop.f32.mrb[0].mxu0
    %v3912 = vadd.f32 %v3816, %v3911
    %v3913 = vpop.f32.mrb[0].mxu0
    %v3914 = vadd.f32 %v3816, %v3913
    %3915 = vmatprep.mubr.f32.mxu0 0.0
    %3916 = vmatmul.mubr.f32.gmra.mrb[0].mxu0 %v3837
    %v3917 = vpop.f32.mrb[0].mxu0
    %v3918 = vadd.f32 %v3821, %v3917
    %v3919 = vpop.f32.mrb[0].mxu0
    %v3920 = vadd.f32 %v3821, %v3919
    %3921 = vmatprep.mubr.f32.mxu0 0.0
    %3922 = vmatmul.mubr.f32.gmra.mrb[0].mxu0 %v3840
    %v3923 = vpop.f32.mrb[0].mxu0
    %v3924 = vadd.f32 %v3826, %v3923
    %v3925 = vpop.f32.mrb[0].mxu0
    %v3926 = vadd.f32 %v3826, %v3925
    %3927 = vmatprep.mubr.f32.mxu0 0.0
    %3928 = vmatmul.mubr.f32.gmra.mrb[0].mxu0 %v3843
    %v3929 = vpop.f32.mrb[0].mxu0
    %v3930 = vadd.f32 %v3831, %v3929
    %v3931 = vpop.f32.mrb[0].mxu0
    %v3932 = vadd.f32 %v3831, %v3931
    %3933 = vdwg.mxu0
    %v3934 = vmax.f32 %v3912, 0.0
    %v3935 = vmax.f32 %v3914, 0.0
    %v3936 = vmax.f32 %v3918, 0.0
    %v3937 = vmax.f32 %v3920, 0.0
    %v3938 = vmax.f32 %v3924, 0.0
    %v3939 = vmax.f32 %v3926, 0.0
    %v3940 = vmax.f32 %v3930, 0.0
    %v3941 = vmax.f32 %v3932, 0.0
    %v3942 = vld [vmem:[#allocation2 + $0xd60] ss:$0 sm:$0xff]
    %v3943 = vld [vmem:[%s2 + $0x6b0] sm:$0x1]
    %3945 = vset.pattern.permute.xlu0 0
    %3946 = vperm.xlu0 %3945, %v3943
    %v3947 = vpop.permute.xlu0 %3946
    %vm3949 = vcmask 261120
    %v3951 = vsel %vm3949, %v3942, 0
    %3953 = vmatprep.subr.mxu0 %v3935
    %3954 = vmatpush1.msra.mxu0 %v3934
    %3955 = vmatprep.subr.mxu0 %v3937
    %3956 = vmatpush1.msra.mxu0 %v3936
    %3957 = vmatprep.subr.mxu0 %v3939
    %3958 = vmatpush1.msra.mxu0 %v3938
    %3959 = vmatprep.subr.mxu0 %v3941
    %3960 = vmatpush1.msra.mxu0 %v3940
    %3961 = vmatprep.subr.mxu0 0.0
    %3962 = vmatpush1.msra.mxu0 0.0
    %3963 = vmatprep.subr.mxu0 0.0
    %3964 = vmatpush1.msra.mxu0 0.0
    %3965 = vmatprep.subr.mxu0 0.0
    %3966 = vmatpush1.msra.mxu0 0.0
    %3967 = vmatprep.subr.mxu0 0.0
    %3968 = vmatpush1.msra.mxu0 0.0
    %3969 = vmatprep.subr.mxu0 0.0
    %3970 = vmatpush1.msra.mxu0 0.0
    %3971 = vmatprep.subr.mxu0 0.0
    %3972 = vmatpush1.msra.mxu0 0.0
    %3973 = vmatprep.subr.mxu0 0.0
    %3974 = vmatpush1.msra.mxu0 0.0
    %3975 = vmatprep.subr.mxu0 0.0
    %3976 = vmatpush1.msra.mxu0 0.0
    %3977 = vmatprep.subr.mxu0 0.0
    %3978 = vmatpush1.msra.mxu0 0.0
    %3979 = vmatprep.subr.mxu0 0.0
    %3980 = vmatpush1.msra.mxu0 0.0
    %3981 = vmatprep.subr.mxu0 0.0
    %3982 = vmatpush1.msra.mxu0 0.0
    %3983 = vmatprep.subr.mxu0 0.0
    %3984 = vmatpush1.msra.mxu0 0.0
    %3985 = vmatprep.subr.mxu0 0.0
    %3986 = vmatpush1.msra.mxu0 0.0
    %3987 = vmatprep.subr.mxu0 0.0
    %3988 = vmatpush1.msra.mxu0 0.0
    %3989 = vmatprep.subr.mxu0 0.0
    %3990 = vmatpush1.msra.mxu0 0.0
    %3991 = vmatprep.subr.mxu0 0.0
    %3992 = vmatpush1.msra.mxu0 0.0
    %3993 = vmatprep.subr.mxu0 0.0
    %3994 = vmatpush1.msra.mxu0 0.0
    %3995 = vmatprep.subr.mxu0 0.0
    %3996 = vmatpush1.msra.mxu0 0.0
    %3997 = vmatprep.subr.mxu0 0.0
    %3998 = vmatpush1.msra.mxu0 0.0
    %3999 = vmatprep.subr.mxu0 0.0
    %4000 = vmatpush1.msra.mxu0 0.0
    %4001 = vmatprep.subr.mxu0 0.0
    %4002 = vmatpush1.msra.mxu0 0.0
    %4003 = vmatprep.subr.mxu0 0.0
    %4004 = vmatpush1.msra.mxu0 0.0
    %4005 = vmatprep.subr.mxu0 0.0
    %4006 = vmatpush1.msra.mxu0 0.0
    %4007 = vmatprep.subr.mxu0 0.0
    %4008 = vmatpush1.msra.mxu0 0.0
    %4009 = vmatprep.subr.mxu0 0.0
    %4010 = vmatpush1.msra.mxu0 0.0
    %4011 = vmatprep.subr.mxu0 0.0
    %4012 = vmatpush1.msra.mxu0 0.0
    %4013 = vmatprep.subr.mxu0 0.0
    %4014 = vmatpush1.msra.mxu0 0.0
    %4015 = vmatprep.subr.mxu0 0.0
    %4016 = vmatpush1.msra.mxu0 0.0
    %4017 = vmatprep.mubr.f32.mxu0 0.0
    %4018 = vmatmul.mubr.f32.gmra.mrb[0].mxu0 %v3951
    %v4019 = vpop.f32.mrb[0].mxu0
    %v4020 = vadd.f32 %v3947, %v4019
    %v4021 = vpop.f32.mrb[0].mxu0
    %v4022 = vadd.f32 %v3947, %v4021
    %4023 = vdwg.mxu0
    %v4024 = vxor.u32 %v4020, 2147483648
    %v4025 = vxor.u32 %v4022, 2147483648
    %v4026 = vmul.f32 %v4024, 1.442695
    %v4027 = vpow.pop %v4026
    %v4028 = vmul.f32 %v4025, 1.442695
    %v4029 = vpow.pop %v4028
    %v4030 = vadd.f32 %v4027, 1.0
    %v4031 = vadd.f32 %v4029, 1.0
    %v4032 = vrcp.pop %v4030
    %v4033 = vmul.f32 1.0, %v4032
    %v4034 = vrcp.pop %v4031
    %v4035 = vmul.f32 1.0, %v4034
    %v4038 = vcombine.low %v4033, %v4035
    %v4040 = vunpack.c.l.s4 1966171168
    %v4041 = vunpack.c.0.s8 %v4040
    %v4042 = vlaneseq
    %v4043 = vshrl.u32 %v4042, 7
    %v4044 = vsub.s32 %v4041, %v4043
    %v4045 = vrot.slane %v4038, %v4044
    %v4047 = vunpack.c.l.s4 1966171168
    %v4048 = vunpack.c.0.s8 %v4047
    %v4049 = vlaneseq
    %v4050 = vshrl.u32 %v4049, 7
    %v4051 = vsub.s32 %v4048, %v4050
    %v4052 = vrot.slane %v4045, %v4051
    %v4054 = vlaneseq
    %vm4055 = vcmp.ge.s32.totalorder %v4054, 0
    %vm4056 = vcmp.lt.s32.totalorder %v4054, 256
    %vm4057 = vmand %vm4055, %vm4056
    %4058 = vst.msk [vmem:[%s3] sm:$0x3] %vm4057, %v4052
    // Predicated region
    $region18: #{_net_forward_jit.1} parent=1 // pred_check
      _
    $region19: #{_net_forward_jit.1} parent=1 // pred_check_branch
      %4060 = sbr.rel (0) target = $region21
    $region20: #{_net_forward_jit.1} parent=1 // pred_region
      _
    $region21: #{_net_forward_jit.1} parent=1 // pred_fallthru
      _
    // Predicated region
    $region22: #{_net_forward_jit.1} parent=1 // pred_check
      _
    $region23: #{_net_forward_jit.1} parent=1 // pred_check_branch
      %4062 = sbr.rel (0) target = $region25
    $region24: #{_net_forward_jit.1} parent=1 // pred_region
      _
    $region25: #{_net_forward_jit.1} parent=1 // pred_fallthru
      _
    %4063 = vsyncpa [#allocation3], 1

</llo_original>
